<compile_context>
chip_gen: v5e
topology: v5e:2x2
jax: 0.10.0
libtpu: 0.0.40
codegen_flags: <defaults>
</compile_context>

<pallas_src>
import jax
import jax.numpy as jnp
import numpy as np
from jax.experimental import pallas as pl
from jax.experimental.pallas import tpu as pltpu


# ----------------------------------------------------------------------------
# Pallas kernel
# ----------------------------------------------------------------------------
def make_kernel(T, N, E, H):
    """WordAttention forward kernel for static dims T (time), N (sentence tile),
    E (embedding), H (GRU hidden per direction)."""
    H2, H3, H4, H5, H6 = 2 * H, 3 * H, 4 * H, 5 * H, 6 * H

    def kernel(x_ref, lens_ref,
               wih_ref, bi_ref, whh_ref, bhhn_ref,
               watt_ref, batt_ref, wctx_ref,
               w1_ref, b1_ref, w2_ref, b2_ref,
               out_ref, alpha_ref,
               gif_ref, gib_ref, of_ref, ob_ref, valid_ref):
        # ---- fused fwd+bwd input projection: one (T*N,E)x(E,6H) matmul -------
        x_flat = x_ref[...].reshape(T * N, E)
        gi = jnp.dot(x_flat, wih_ref[...],
                     preferred_element_type=jnp.float32) + bi_ref[...]
        gif_ref[...] = gi[:, :H3].reshape(T, N, H3)          # fwd gate preacts
        gib_ref[...] = gi[:, H3:].reshape(T, N, H3)          # bwd gate preacts

        # ---- validity mask, bulk-computed once (no per-step compare/store) ---
        t_idx = jax.lax.broadcasted_iota(jnp.int32, (T, N, 1), 0)
        valid_ref[...] = (t_idx < lens_ref[...]).astype(jnp.float32)

        whh = whh_ref[...]                                   # (2H, 6H) block-diag
        bhh_n = bhhn_ref[...]                                # (1, 2H) n-gate b_hh
        bhn_f = bhh_n[:, :H]
        bhn_b = bhh_n[:, H:]

        # ---- fused fwd+bwd GRU recurrence; hidden state is loop-carried ------
        def step(i, carry):
            h_f, h_b = carry
            t_f = i
            t_b = T - 1 - i
            gh = jnp.dot(jnp.concatenate([h_f, h_b], axis=1), whh,
                         preferred_element_type=jnp.float32)      # (N, 6H)
            # forward direction at t_f
            gi_f = gif_ref[t_f]                                    # (N, 3H)
            v_f = valid_ref[t_f]                                   # (N, 1)
            r_f = jax.nn.sigmoid(gi_f[:, :H] + gh[:, :H])
            z_f = jax.nn.sigmoid(gi_f[:, H:H2] + gh[:, H:H2])
            n_f = jnp.tanh(gi_f[:, H2:] + r_f * (gh[:, H2:H3] + bhn_f))
            h_f = v_f * ((1.0 - z_f) * n_f + z_f * h_f) + (1.0 - v_f) * h_f
            of_ref[t_f] = h_f * v_f                                # zero padding
            # backward direction at t_b (state frozen over right padding)
            gi_b = gib_ref[t_b]
            v_b = valid_ref[t_b]
            r_b = jax.nn.sigmoid(gi_b[:, :H] + gh[:, H3:H4])
            z_b = jax.nn.sigmoid(gi_b[:, H:H2] + gh[:, H4:H5])
            n_b = jnp.tanh(gi_b[:, H2:] + r_b * (gh[:, H5:H6] + bhn_b))
            h_b = v_b * ((1.0 - z_b) * n_b + z_b * h_b) + (1.0 - v_b) * h_b
            ob_ref[t_b] = h_b * v_b
            return (h_f, h_b)

        h0 = jnp.zeros((N, H), jnp.float32)
        # TODO(synk): bounded unroll (2-4) for production T; full unroll fine at T=8.
        jax.lax.fori_loop(0, T, step, (h0, h0), unroll=True)

        # ---- word attention: single K=2H matmuls on concatenated outputs -----
        rnn = jnp.concatenate([of_ref[...], ob_ref[...]], axis=2)  # (T, N, 2H)
        rnn_flat = rnn.reshape(T * N, H2)
        a = jnp.tanh(jnp.dot(rnn_flat, watt_ref[...],
                             preferred_element_type=jnp.float32)
                     + batt_ref[...])                              # (T*N, A)
        scores = jnp.dot(a, wctx_ref[...],
                         preferred_element_type=jnp.float32).reshape(T, N, 1)

        # ---- masked per-sentence softmax over words ---------------------------
        # TODO(synk): lane-dense (N,T) score/alpha layout at production T.
        m = valid_ref[...]                                         # (T, N, 1)
        smax = jnp.max(jnp.where(m > 0.5, scores, -1e30),
                       axis=0, keepdims=True)                      # (1, N, 1)
        e = jnp.exp(jnp.minimum(scores - smax, 0.0)) * m
        denom = jnp.sum(e, axis=0, keepdims=True)                  # (1, N, 1)
        alphas = e / denom        # exact divide: alphas sum to 1 (lengths >= 1)
        alpha_ref[...] = alphas

        # ---- attention-weighted sentence embedding + classifier head ---------
        sent = jnp.sum(rnn * alphas, axis=0)                       # (N, 2H)
        o1 = jnp.dot(sent, w1_ref[...],
                     preferred_element_type=jnp.float32) + b1_ref[...]
        out_ref[...] = jnp.dot(o1, w2_ref[...],
                               preferred_element_type=jnp.float32) + b2_ref[...]

    return kernel


# ----------------------------------------------------------------------------
# Wrapper (glue: embedding lookup, weight fusion/layout, pallas_call)
# ----------------------------------------------------------------------------
@jax.jit
def word_attention_forward(params, tokens, lengths):
    N, T = tokens.shape
    E = params["emb"].shape[1]
    H = params["w_hh_f"].shape[1]
    A = params["w_att"].shape[0]
    H2, H3, H6 = 2 * H, 3 * H, 6 * H
    f32 = lambda a: a.astype(jnp.float32)

    # Embedding gather directly in (T, N, E) layout (no post-gather transpose).
    x_tne = f32(params["emb"])[tokens.T]                           # (T, N, E)
    lens_n1 = lengths.astype(jnp.int32).reshape(N, 1)              # (N, 1)

    # ---- fused / re-laid-out weights (one-time, outside the kernel) ---------
    w_ih_fb = jnp.concatenate([f32(params["w_ih_f"]).T,
                               f32(params["w_ih_b"]).T], axis=1)   # (E, 6H)
    # Fold the r/z halves of b_hh into the hoisted input-projection bias.
    bi_f = f32(params["b_ih_f"]) + jnp.concatenate(
        [f32(params["b_hh_f"])[:H2], jnp.zeros((H,), jnp.float32)])
    bi_b = f32(params["b_ih_b"]) + jnp.concatenate(
        [f32(params["b_hh_b"])[:H2], jnp.zeros((H,), jnp.float32)])
    bi = jnp.concatenate([bi_f, bi_b]).reshape(1, H6)              # (1, 6H)
    bhh_n = jnp.concatenate([f32(params["b_hh_f"])[H2:],
                             f32(params["b_hh_b"])[H2:]]).reshape(1, H2)
    # Block-diagonal hidden->gates weight: one vmatmul per step for both dirs.
    whh_bd = jnp.zeros((H2, H6), jnp.float32)
    whh_bd = whh_bd.at[:H, :H3].set(f32(params["w_hh_f"]).T)
    whh_bd = whh_bd.at[H:, H3:].set(f32(params["w_hh_b"]).T)
    w_att = f32(params["w_att"]).T                                 # (2H, A)
    b_att = f32(params["b_att"]).reshape(1, A)
    w_ctx = f32(params["w_ctx"]).T                                 # (A, 1)
    w1 = f32(params["w1"]).T                                       # (2H, 64)
    b1 = f32(params["b1"]).reshape(1, -1)
    w2 = f32(params["w2"]).T                                       # (64, 2)
    b2 = f32(params["b2"]).reshape(1, -1)

    args = (x_tne, lens_n1, w_ih_fb, bi, whh_bd, bhh_n,
            w_att, b_att, w_ctx, w1, b1, w2, b2)

    # Grid over the sentence axis; sentences are independent -> "parallel".
    # Prefer >= 2 tiles so v7x's two TensorCores both get work.
    TILE_N = N
    for cand in (128, 64, 32, 16, 8):
        if N % cand == 0 and N // cand >= 2:
            TILE_N = cand
            break
    grid = (N // TILE_N,)

    in_specs = [
        pl.BlockSpec((T, TILE_N, E), lambda n: (0, n, 0)),         # embedded words
        pl.BlockSpec((TILE_N, 1), lambda n: (n, 0)),               # lengths
    ] + [pl.BlockSpec(a.shape, lambda n: (0, 0)) for a in args[2:]]  # weights (2D)

    out_specs = (
        pl.BlockSpec((TILE_N, 2), lambda n: (n, 0)),               # classifier out
        pl.BlockSpec((T, TILE_N, 1), lambda n: (0, n, 0)),         # attention alphas
    )

    scratch_shapes = [
        pltpu.VMEM((T, TILE_N, H3), jnp.float32),  # fwd input-gate preacts
        pltpu.VMEM((T, TILE_N, H3), jnp.float32),  # bwd input-gate preacts
        pltpu.VMEM((T, TILE_N, H), jnp.float32),   # fwd outputs
        pltpu.VMEM((T, TILE_N, H), jnp.float32),   # bwd outputs
        pltpu.VMEM((T, TILE_N, 1), jnp.float32),   # validity mask (bulk-filled)
    ]

    # VMEM budget derived per TPU generation (v7x: 64 MiB, v5e/v6e: 128 MiB).
    itemsize = 4
    nelem = lambda shape: int(np.prod(shape))
    weight_bytes = sum(nelem(a.shape) * itemsize for a in args[2:])
    block_bytes = (nelem((T, TILE_N, E)) + nelem((TILE_N, 1))
                   + nelem((TILE_N, 2)) + nelem((T, TILE_N, 1))) * itemsize
    scratch_bytes = (2 * nelem((T, TILE_N, H3)) + 2 * nelem((T, TILE_N, H))
                     + nelem((T, TILE_N, 1))) * itemsize
    resident = 2 * block_bytes + 2 * weight_bytes + scratch_bytes   # 2x: dbl-buffer
    try:
        vmem_cap = int(pltpu.get_tpu_info().vmem_capacity_bytes)
    except Exception:
        vmem_cap = 64 * 2 ** 20
    vmem_limit = int(min(int(0.75 * vmem_cap), max(16 * 2 ** 20, 2 * resident)))

    kernel = make_kernel(T, TILE_N, E, H)

    out, alphas_tn1 = pl.pallas_call(
        kernel,
        grid=grid,
        out_shape=(
            jax.ShapeDtypeStruct((N, 2), jnp.float32),             # classifier out
            jax.ShapeDtypeStruct((T, N, 1), jnp.float32),          # attention alphas
        ),
        in_specs=in_specs,
        out_specs=out_specs,
        scratch_shapes=scratch_shapes,
        compiler_params=pltpu.CompilerParams(
            dimension_semantics=("parallel",),
            vmem_limit_bytes=vmem_limit,
        ),
    )(*args)

    word_alphas = alphas_tn1[:, :, 0].T                            # (N, T)
    return out, word_alphas


# ----------------------------------------------------------------------------
# Pure-JAX reference (same math, lax.scan based) for a correctness check
# ----------------------------------------------------------------------------
def reference_forward(params, tokens, lengths):
    emb = params["emb"][tokens].astype(jnp.float32)                # (N, T, E)
    N, T, _ = emb.shape
    H = params["w_hh_f"].shape[1]

    def gru_dir(wih, whh, bih, bhh, reverse):
        def step(h, inp):
            x_t, v = inp
            gi = x_t @ wih.T + bih
            gh = h @ whh.T + bhh
            r = jax.nn.sigmoid(gi[:, :H] + gh[:, :H])
            z = jax.nn.sigmoid(gi[:, H:2 * H] + gh[:, H:2 * H])
            n = jnp.tanh(gi[:, 2 * H:] + r * gh[:, 2 * H:])
            h_new = (1.0 - z) * n + z * h
            h = v * h_new + (1.0 - v) * h
            return h, h * v

        valid = (jnp.arange(T)[None, :] < lengths[:, None]).astype(jnp.float32)
        xs = jnp.transpose(emb, (1, 0, 2))
        vs = valid.T[:, :, None]
        if reverse:
            xs, vs = xs[::-1], vs[::-1]
        _, outs = jax.lax.scan(step, jnp.zeros((N, H), jnp.float32), (xs, vs))
        if reverse:
            outs = outs[::-1]
        return jnp.transpose(outs, (1, 0, 2))                      # (N, T, H)

    out_f = gru_dir(params["w_ih_f"], params["w_hh_f"],
                    params["b_ih_f"], params["b_hh_f"], False)
    out_b = gru_dir(params["w_ih_b"], params["w_hh_b"],
                    params["b_ih_b"], params["b_hh_b"], True)
    rnn = jnp.concatenate([out_f, out_b], axis=-1)                 # (N, T, 2H)

    att = jnp.tanh(rnn @ params["w_att"].T + params["b_att"])
    scores = (att @ params["w_ctx"].T)[..., 0]                     # (N, T)
    mask = jnp.arange(T)[None, :] < lengths[:, None]
    gmax = jnp.max(jnp.where(mask, scores, -1e30))
    e = jnp.where(mask, jnp.exp(scores - gmax), 0.0)
    alphas = e / jnp.sum(e, axis=1, keepdims=True)
    sent = jnp.sum(rnn * alphas[..., None], axis=1)                # (N, 2H)
    out = (sent @ params["w1"].T + params["b1"]) @ params["w2"].T + params["b2"]
    return out, alphas


# ----------------------------------------------------------------------------
# Deterministic parameter init + main
# ----------------------------------------------------------------------------
def init_params(key, vocab_size, emb_size, word_rnn_size, word_att_size):
    E, H, A = emb_size, word_rnn_size, word_att_size
    ks = jax.random.split(key, 18)
    nrm = lambda k, shape, s=0.1: (s * jax.random.normal(k, shape)).astype(jnp.float32)
    return {
        "emb":    nrm(ks[0], (vocab_size, E), 0.5),
        "w_ih_f": nrm(ks[1], (3 * H, E)),  "w_hh_f": nrm(ks[2], (3 * H, H)),
        "b_ih_f": nrm(ks[3], (3 * H,)),    "b_hh_f": nrm(ks[4], (3 * H,)),
        "w_ih_b": nrm(ks[5], (3 * H, E)),  "w_hh_b": nrm(ks[6], (3 * H, H)),
        "b_ih_b": nrm(ks[7], (3 * H,)),    "b_hh_b": nrm(ks[8], (3 * H,)),
        "w_att":  nrm(ks[9], (A, 2 * H)),  "b_att":  nrm(ks[10], (A,)),
        "w_ctx":  nrm(ks[11], (1, A)),
        "w1":     nrm(ks[12], (64, 2 * H)), "b1":    nrm(ks[13], (64,)),
        "w2":     nrm(ks[14], (2, 64)),     "b2":    nrm(ks[15], (2,)),
    }


if __name__ == "__main__":
    vocab_size, emb_size, word_rnn_size, word_att_size = 50, 32, 16, 32
    N, T = 16, 8   # sentences, word_pad_len (N=16 -> 2 parallel grid tiles)

    key = jax.random.PRNGKey(0)
    k_par, k_tok = jax.random.split(key)
    params = init_params(k_par, vocab_size, emb_size, word_rnn_size, word_att_size)

    tokens = jax.random.randint(k_tok, (N, T), 0, vocab_size, dtype=jnp.int32)
    lengths = jnp.array([8, 5, 3, 8, 1, 6, 4, 7, 2, 8, 7, 3, 5, 6, 1, 4],
                        dtype=jnp.int32)   # all >= 1, max == T

    out, word_alphas = word_attention_forward(params, tokens, lengths)
    jax.block_until_ready((out, word_alphas))

    ref_out, ref_alphas = reference_forward(params, tokens, lengths)
    np.testing.assert_allclose(np.asarray(out), np.asarray(ref_out),
                               rtol=1e-3, atol=1e-3)
    np.testing.assert_allclose(np.asarray(word_alphas), np.asarray(ref_alphas),
                               rtol=1e-3, atol=1e-3)

    assert out.shape == (N, 2) and word_alphas.shape == (N, T)
    print("KERNEL_OK")
</pallas_src>

<mosaic_0001>
module attributes {stable_mosaic.version = 11 : i64} {
  func.func @kernel(%arg0: i32, %arg1: memref<8x8x32xf32, #tpu.memory_space<vmem>>, %arg2: memref<8x1xi32, #tpu.memory_space<vmem>>, %arg3: memref<32x96xf32, #tpu.memory_space<vmem>>, %arg4: memref<1x96xf32, #tpu.memory_space<vmem>>, %arg5: memref<32x96xf32, #tpu.memory_space<vmem>>, %arg6: memref<1x32xf32, #tpu.memory_space<vmem>>, %arg7: memref<32x32xf32, #tpu.memory_space<vmem>>, %arg8: memref<1x32xf32, #tpu.memory_space<vmem>>, %arg9: memref<32x1xf32, #tpu.memory_space<vmem>>, %arg10: memref<32x64xf32, #tpu.memory_space<vmem>>, %arg11: memref<1x64xf32, #tpu.memory_space<vmem>>, %arg12: memref<64x2xf32, #tpu.memory_space<vmem>>, %arg13: memref<1x2xf32, #tpu.memory_space<vmem>>, %arg14: memref<8x2xf32, #tpu.memory_space<vmem>>, %arg15: memref<8x8x1xf32, #tpu.memory_space<vmem>>, %arg16: memref<8x8x48xf32, #tpu.memory_space<vmem>>, %arg17: memref<8x8x48xf32, #tpu.memory_space<vmem>>, %arg18: memref<8x8x16xf32, #tpu.memory_space<vmem>>, %arg19: memref<8x8x16xf32, #tpu.memory_space<vmem>>, %arg20: memref<8x8x1xf32, #tpu.memory_space<vmem>>) attributes {dimension_semantics = [#tpu.dimension_semantics<parallel>], iteration_bounds = array<i64: 2>, scalar_prefetch = 0 : i64, scratch_operands = 5 : i64, tpu.core_type = #tpu.core_type<tc>, window_params = [{transform_indices = @transform_0, window_bounds = array<i64: 8, 8, 32>}, {transform_indices = @transform_1, window_bounds = array<i64: 8, 1>}, {pipeline_mode = #tpu.pipeline_mode<synchronous>, transform_indices = @transform_2, window_bounds = array<i64: 32, 96>}, {pipeline_mode = #tpu.pipeline_mode<synchronous>, transform_indices = @transform_3, window_bounds = array<i64: 1, 96>}, {pipeline_mode = #tpu.pipeline_mode<synchronous>, transform_indices = @transform_4, window_bounds = array<i64: 32, 96>}, {pipeline_mode = #tpu.pipeline_mode<synchronous>, transform_indices = @transform_5, window_bounds = array<i64: 1, 32>}, {pipeline_mode = #tpu.pipeline_mode<synchronous>, transform_indices = @transform_6, window_bounds = array<i64: 32, 32>}, {pipeline_mode = #tpu.pipeline_mode<synchronous>, transform_indices = @transform_7, window_bounds = array<i64: 1, 32>}, {pipeline_mode = #tpu.pipeline_mode<synchronous>, transform_indices = @transform_8, window_bounds = array<i64: 32, 1>}, {pipeline_mode = #tpu.pipeline_mode<synchronous>, transform_indices = @transform_9, window_bounds = array<i64: 32, 64>}, {pipeline_mode = #tpu.pipeline_mode<synchronous>, transform_indices = @transform_10, window_bounds = array<i64: 1, 64>}, {pipeline_mode = #tpu.pipeline_mode<synchronous>, transform_indices = @transform_11, window_bounds = array<i64: 64, 2>}, {pipeline_mode = #tpu.pipeline_mode<synchronous>, transform_indices = @transform_12, window_bounds = array<i64: 1, 2>}, {transform_indices = @transform_13, window_bounds = array<i64: 8, 2>}, {transform_indices = @transform_14, window_bounds = array<i64: 8, 8, 1>}]} {
    %c0 = arith.constant 0 : index
    %c0_0 = arith.constant 0 : index
    %c0_1 = arith.constant 0 : index
    %0 = vector.load %arg1[%c0, %c0_0, %c0_1] : memref<8x8x32xf32, #tpu.memory_space<vmem>>, vector<8x8x32xf32>
    %1 = vector.shape_cast %0 : vector<8x8x32xf32> to vector<64x32xf32>
    %c0_2 = arith.constant 0 : index
    %c0_3 = arith.constant 0 : index
    %2 = vector.load %arg3[%c0_2, %c0_3] : memref<32x96xf32, #tpu.memory_space<vmem>>, vector<32x96xf32>
    %cst = arith.constant dense<0.000000e+00> : vector<64x96xf32>
    %3 = tpu.matmul %1, %2, %cst {dimension_numbers = #tpu.dot_dimension_numbers<[1], [0], [0], [1], [0, 0, 1, 1], [], []>} : vector<64x32xf32>, vector<32x96xf32>, vector<64x96xf32> -> vector<64x96xf32>
    %c0_4 = arith.constant 0 : index
    %c0_5 = arith.constant 0 : index
    %4 = vector.load %arg4[%c0_4, %c0_5] : memref<1x96xf32, #tpu.memory_space<vmem>>, vector<1x96xf32>
    %5 = vector.broadcast %4 : vector<1x96xf32> to vector<64x96xf32>
    %6 = arith.addf %3, %5 : vector<64x96xf32>
    %7 = vector.extract_strided_slice %6 {offsets = [0, 0], sizes = [64, 48], strides = [1, 1]} : vector<64x96xf32> to vector<64x48xf32>
    %8 = vector.shape_cast %7 : vector<64x48xf32> to vector<8x8x48xf32>
    %c0_6 = arith.constant 0 : index
    %c0_7 = arith.constant 0 : index
    %c0_8 = arith.constant 0 : index
    %9 = vector.load %arg16[%c0_6, %c0_7, %c0_8] : memref<8x8x48xf32, #tpu.memory_space<vmem>>, vector<8x8x48xf32>
    tpu.vector_store %arg16[%c0_6, %c0_7, %c0_8], %8 {strides = array<i32>} : memref<8x8x48xf32, #tpu.memory_space<vmem>>, vector<8x8x48xf32>,
    %10 = vector.extract_strided_slice %6 {offsets = [0, 48], sizes = [64, 48], strides = [1, 1]} : vector<64x96xf32> to vector<64x48xf32>
    %11 = vector.shape_cast %10 : vector<64x48xf32> to vector<8x8x48xf32>
    %c0_9 = arith.constant 0 : index
    %c0_10 = arith.constant 0 : index
    %c0_11 = arith.constant 0 : index
    %12 = vector.load %arg17[%c0_9, %c0_10, %c0_11] : memref<8x8x48xf32, #tpu.memory_space<vmem>>, vector<8x8x48xf32>
    tpu.vector_store %arg17[%c0_9, %c0_10, %c0_11], %11 {strides = array<i32>} : memref<8x8x48xf32, #tpu.memory_space<vmem>>, vector<8x8x48xf32>,
    %13 = tpu.iota {dimensions = array<i32: 0>} : vector<8x8x1xi32>
    %c0_12 = arith.constant 0 : index
    %c0_13 = arith.constant 0 : index
    %14 = vector.load %arg2[%c0_12, %c0_13] : memref<8x1xi32, #tpu.memory_space<vmem>>, vector<8x1xi32>
    %15 = vector.shape_cast %14 : vector<8x1xi32> to vector<1x8x1xi32>
    %16 = vector.broadcast %15 : vector<1x8x1xi32> to vector<8x8x1xi32>
    %17 = arith.cmpi slt, %13, %16 : vector<8x8x1xi32>
    %18 = arith.extui %17 : vector<8x8x1xi1> to vector<8x8x1xi32>
    %19 = arith.sitofp %18 : vector<8x8x1xi32> to vector<8x8x1xf32>
    %c0_14 = arith.constant 0 : index
    %c0_15 = arith.constant 0 : index
    %c0_16 = arith.constant 0 : index
    %20 = vector.load %arg20[%c0_14, %c0_15, %c0_16] : memref<8x8x1xf32, #tpu.memory_space<vmem>>, vector<8x8x1xf32>
    tpu.vector_store %arg20[%c0_14, %c0_15, %c0_16], %19 {strides = array<i32>} : memref<8x8x1xf32, #tpu.memory_space<vmem>>, vector<8x8x1xf32>,
    %c0_17 = arith.constant 0 : index
    %c0_18 = arith.constant 0 : index
    %21 = vector.load %arg5[%c0_17, %c0_18] : memref<32x96xf32, #tpu.memory_space<vmem>>, vector<32x96xf32>
    %c0_19 = arith.constant 0 : index
    %c0_20 = arith.constant 0 : index
    %22 = vector.load %arg6[%c0_19, %c0_20] : memref<1x32xf32, #tpu.memory_space<vmem>>, vector<1x32xf32>
    %23 = vector.extract_strided_slice %22 {offsets = [0, 0], sizes = [1, 16], strides = [1, 1]} : vector<1x32xf32> to vector<1x16xf32>
    %24 = vector.extract_strided_slice %22 {offsets = [0, 16], sizes = [1, 16], strides = [1, 1]} : vector<1x32xf32> to vector<1x16xf32>
    %cst_21 = arith.constant 0.000000e+00 : f32
    %25 = vector.broadcast %cst_21 : f32 to vector<8x16xf32>
    %c0_i32 = arith.constant 0 : i32
    %c7_i32 = arith.constant 7 : i32
    %26 = arith.subi %c7_i32, %c0_i32 : i32
    %27 = tpu.concatenate %25, %25 in 1 : vector<8x16xf32>, vector<8x16xf32> -> vector<8x32xf32>
    %cst_22 = arith.constant dense<0.000000e+00> : vector<8x96xf32>
    %28 = tpu.matmul %27, %21, %cst_22 {dimension_numbers = #tpu.dot_dimension_numbers<[1], [0], [0], [1], [0, 0, 1, 1], [], []>} : vector<8x32xf32>, vector<32x96xf32>, vector<8x96xf32> -> vector<8x96xf32>
    %29 = arith.index_cast %c0_i32 : i32 to index
    %c0_23 = arith.constant 0 : index
    %c0_24 = arith.constant 0 : index
    %30 = vector.load %arg16[%29, %c0_23, %c0_24] : memref<8x8x48xf32, #tpu.memory_space<vmem>>, vector<1x8x48xf32>
    %31 = vector.shape_cast %30 : vector<1x8x48xf32> to vector<8x48xf32>
    %32 = arith.index_cast %c0_i32 : i32 to index
    %c0_25 = arith.constant 0 : index
    %c0_26 = arith.constant 0 : index
    %33 = vector.load %arg20[%32, %c0_25, %c0_26] : memref<8x8x1xf32, #tpu.memory_space<vmem>>, vector<1x8x1xf32>
    %34 = vector.shape_cast %33 : vector<1x8x1xf32> to vector<8x1xf32>
    %35 = vector.extract_strided_slice %31 {offsets = [0, 0], sizes = [8, 16], strides = [1, 1]} : vector<8x48xf32> to vector<8x16xf32>
    %36 = vector.extract_strided_slice %28 {offsets = [0, 0], sizes = [8, 16], strides = [1, 1]} : vector<8x96xf32> to vector<8x16xf32>
    %37 = arith.addf %35, %36 : vector<8x16xf32>
    %38 = arith.negf %37 : vector<8x16xf32>
    %39 = math.exp %38 : vector<8x16xf32>
    %cst_27 = arith.constant 1.000000e+00 : f32
    %40 = vector.broadcast %cst_27 : f32 to vector<8x16xf32>
    %41 = arith.addf %40, %39 : vector<8x16xf32>
    %42 = arith.divf %40, %41 : vector<8x16xf32>
    %43 = vector.extract_strided_slice %31 {offsets = [0, 16], sizes = [8, 16], strides = [1, 1]} : vector<8x48xf32> to vector<8x16xf32>
    %44 = vector.extract_strided_slice %28 {offsets = [0, 16], sizes = [8, 16], strides = [1, 1]} : vector<8x96xf32> to vector<8x16xf32>
    %45 = arith.addf %43, %44 : vector<8x16xf32>
    %46 = arith.negf %45 : vector<8x16xf32>
    %47 = math.exp %46 : vector<8x16xf32>
    %cst_28 = arith.constant 1.000000e+00 : f32
    %48 = vector.broadcast %cst_28 : f32 to vector<8x16xf32>
    %49 = arith.addf %48, %47 : vector<8x16xf32>
    %50 = arith.divf %48, %49 : vector<8x16xf32>
    %51 = vector.extract_strided_slice %31 {offsets = [0, 32], sizes = [8, 16], strides = [1, 1]} : vector<8x48xf32> to vector<8x16xf32>
    %52 = vector.extract_strided_slice %28 {offsets = [0, 32], sizes = [8, 16], strides = [1, 1]} : vector<8x96xf32> to vector<8x16xf32>
    %53 = vector.broadcast %23 : vector<1x16xf32> to vector<8x16xf32>
    %54 = arith.addf %52, %53 : vector<8x16xf32>
    %55 = arith.mulf %42, %54 : vector<8x16xf32>
    %56 = arith.addf %51, %55 : vector<8x16xf32>
    %57 = math.tanh %56 : vector<8x16xf32>
    %cst_29 = arith.constant 1.000000e+00 : f32
    %58 = vector.broadcast %cst_29 : f32 to vector<8x16xf32>
    %59 = arith.subf %58, %50 : vector<8x16xf32>
    %60 = arith.mulf %59, %57 : vector<8x16xf32>
    %61 = arith.mulf %50, %25 : vector<8x16xf32>
    %62 = arith.addf %60, %61 : vector<8x16xf32>
    %63 = vector.broadcast %34 : vector<8x1xf32> to vector<8x16xf32>
    %64 = arith.mulf %63, %62 : vector<8x16xf32>
    %cst_30 = arith.constant 1.000000e+00 : f32
    %65 = vector.broadcast %cst_30 : f32 to vector<8x1xf32>
    %66 = arith.subf %65, %34 : vector<8x1xf32>
    %67 = vector.broadcast %66 : vector<8x1xf32> to vector<8x16xf32>
    %68 = arith.mulf %67, %25 : vector<8x16xf32>
    %69 = arith.addf %64, %68 : vector<8x16xf32>
    %70 = vector.broadcast %34 : vector<8x1xf32> to vector<8x16xf32>
    %71 = arith.mulf %69, %70 : vector<8x16xf32>
    %72 = arith.index_cast %c0_i32 : i32 to index
    %c0_31 = arith.constant 0 : index
    %c0_32 = arith.constant 0 : index
    %73 = vector.load %arg18[%72, %c0_31, %c0_32] : memref<8x8x16xf32, #tpu.memory_space<vmem>>, vector<1x8x16xf32>
    %74 = vector.shape_cast %73 : vector<1x8x16xf32> to vector<8x16xf32>
    %75 = vector.shape_cast %71 : vector<8x16xf32> to vector<1x8x16xf32>
    tpu.vector_store %arg18[%72, %c0_31, %c0_32], %75 {strides = array<i32>} : memref<8x8x16xf32, #tpu.memory_space<vmem>>, vector<1x8x16xf32>,
    %76 = arith.index_cast %26 : i32 to index
    %c0_33 = arith.constant 0 : index
    %c0_34 = arith.constant 0 : index
    %77 = vector.load %arg17[%76, %c0_33, %c0_34] : memref<8x8x48xf32, #tpu.memory_space<vmem>>, vector<1x8x48xf32>
    %78 = vector.shape_cast %77 : vector<1x8x48xf32> to vector<8x48xf32>
    %79 = arith.index_cast %26 : i32 to index
    %c0_35 = arith.constant 0 : index
    %c0_36 = arith.constant 0 : index
    %80 = vector.load %arg20[%79, %c0_35, %c0_36] : memref<8x8x1xf32, #tpu.memory_space<vmem>>, vector<1x8x1xf32>
    %81 = vector.shape_cast %80 : vector<1x8x1xf32> to vector<8x1xf32>
    %82 = vector.extract_strided_slice %78 {offsets = [0, 0], sizes = [8, 16], strides = [1, 1]} : vector<8x48xf32> to vector<8x16xf32>
    %83 = vector.extract_strided_slice %28 {offsets = [0, 48], sizes = [8, 16], strides = [1, 1]} : vector<8x96xf32> to vector<8x16xf32>
    %84 = arith.addf %82, %83 : vector<8x16xf32>
    %85 = arith.negf %84 : vector<8x16xf32>
    %86 = math.exp %85 : vector<8x16xf32>
    %cst_37 = arith.constant 1.000000e+00 : f32
    %87 = vector.broadcast %cst_37 : f32 to vector<8x16xf32>
    %88 = arith.addf %87, %86 : vector<8x16xf32>
    %89 = arith.divf %87, %88 : vector<8x16xf32>
    %90 = vector.extract_strided_slice %78 {offsets = [0, 16], sizes = [8, 16], strides = [1, 1]} : vector<8x48xf32> to vector<8x16xf32>
    %91 = vector.extract_strided_slice %28 {offsets = [0, 64], sizes = [8, 16], strides = [1, 1]} : vector<8x96xf32> to vector<8x16xf32>
    %92 = arith.addf %90, %91 : vector<8x16xf32>
    %93 = arith.negf %92 : vector<8x16xf32>
    %94 = math.exp %93 : vector<8x16xf32>
    %cst_38 = arith.constant 1.000000e+00 : f32
    %95 = vector.broadcast %cst_38 : f32 to vector<8x16xf32>
    %96 = arith.addf %95, %94 : vector<8x16xf32>
    %97 = arith.divf %95, %96 : vector<8x16xf32>
    %98 = vector.extract_strided_slice %78 {offsets = [0, 32], sizes = [8, 16], strides = [1, 1]} : vector<8x48xf32> to vector<8x16xf32>
    %99 = vector.extract_strided_slice %28 {offsets = [0, 80], sizes = [8, 16], strides = [1, 1]} : vector<8x96xf32> to vector<8x16xf32>
    %100 = vector.broadcast %24 : vector<1x16xf32> to vector<8x16xf32>
    %101 = arith.addf %99, %100 : vector<8x16xf32>
    %102 = arith.mulf %89, %101 : vector<8x16xf32>
    %103 = arith.addf %98, %102 : vector<8x16xf32>
    %104 = math.tanh %103 : vector<8x16xf32>
    %cst_39 = arith.constant 1.000000e+00 : f32
    %105 = vector.broadcast %cst_39 : f32 to vector<8x16xf32>
    %106 = arith.subf %105, %97 : vector<8x16xf32>
    %107 = arith.mulf %106, %104 : vector<8x16xf32>
    %108 = arith.mulf %97, %25 : vector<8x16xf32>
    %109 = arith.addf %107, %108 : vector<8x16xf32>
    %110 = vector.broadcast %81 : vector<8x1xf32> to vector<8x16xf32>
    %111 = arith.mulf %110, %109 : vector<8x16xf32>
    %cst_40 = arith.constant 1.000000e+00 : f32
    %112 = vector.broadcast %cst_40 : f32 to vector<8x1xf32>
    %113 = arith.subf %112, %81 : vector<8x1xf32>
    %114 = vector.broadcast %113 : vector<8x1xf32> to vector<8x16xf32>
    %115 = arith.mulf %114, %25 : vector<8x16xf32>
    %116 = arith.addf %111, %115 : vector<8x16xf32>
    %117 = vector.broadcast %81 : vector<8x1xf32> to vector<8x16xf32>
    %118 = arith.mulf %116, %117 : vector<8x16xf32>
    %119 = arith.index_cast %26 : i32 to index
    %c0_41 = arith.constant 0 : index
    %c0_42 = arith.constant 0 : index
    %120 = vector.load %arg19[%119, %c0_41, %c0_42] : memref<8x8x16xf32, #tpu.memory_space<vmem>>, vector<1x8x16xf32>
    %121 = vector.shape_cast %120 : vector<1x8x16xf32> to vector<8x16xf32>
    %122 = vector.shape_cast %118 : vector<8x16xf32> to vector<1x8x16xf32>
    tpu.vector_store %arg19[%119, %c0_41, %c0_42], %122 {strides = array<i32>} : memref<8x8x16xf32, #tpu.memory_space<vmem>>, vector<1x8x16xf32>,
    %c1_i32 = arith.constant 1 : i32
    %c7_i32_43 = arith.constant 7 : i32
    %123 = arith.subi %c7_i32_43, %c1_i32 : i32
    %124 = tpu.concatenate %69, %116 in 1 : vector<8x16xf32>, vector<8x16xf32> -> vector<8x32xf32>
    %cst_44 = arith.constant dense<0.000000e+00> : vector<8x96xf32>
    %125 = tpu.matmul %124, %21, %cst_44 {dimension_numbers = #tpu.dot_dimension_numbers<[1], [0], [0], [1], [0, 0, 1, 1], [], []>} : vector<8x32xf32>, vector<32x96xf32>, vector<8x96xf32> -> vector<8x96xf32>
    %126 = arith.index_cast %c1_i32 : i32 to index
    %c0_45 = arith.constant 0 : index
    %c0_46 = arith.constant 0 : index
    %127 = vector.load %arg16[%126, %c0_45, %c0_46] : memref<8x8x48xf32, #tpu.memory_space<vmem>>, vector<1x8x48xf32>
    %128 = vector.shape_cast %127 : vector<1x8x48xf32> to vector<8x48xf32>
    %129 = arith.index_cast %c1_i32 : i32 to index
    %c0_47 = arith.constant 0 : index
    %c0_48 = arith.constant 0 : index
    %130 = vector.load %arg20[%129, %c0_47, %c0_48] : memref<8x8x1xf32, #tpu.memory_space<vmem>>, vector<1x8x1xf32>
    %131 = vector.shape_cast %130 : vector<1x8x1xf32> to vector<8x1xf32>
    %132 = vector.extract_strided_slice %128 {offsets = [0, 0], sizes = [8, 16], strides = [1, 1]} : vector<8x48xf32> to vector<8x16xf32>
    %133 = vector.extract_strided_slice %125 {offsets = [0, 0], sizes = [8, 16], strides = [1, 1]} : vector<8x96xf32> to vector<8x16xf32>
    %134 = arith.addf %132, %133 : vector<8x16xf32>
    %135 = arith.negf %134 : vector<8x16xf32>
    %136 = math.exp %135 : vector<8x16xf32>
    %cst_49 = arith.constant 1.000000e+00 : f32
    %137 = vector.broadcast %cst_49 : f32 to vector<8x16xf32>
    %138 = arith.addf %137, %136 : vector<8x16xf32>
    %139 = arith.divf %137, %138 : vector<8x16xf32>
    %140 = vector.extract_strided_slice %128 {offsets = [0, 16], sizes = [8, 16], strides = [1, 1]} : vector<8x48xf32> to vector<8x16xf32>
    %141 = vector.extract_strided_slice %125 {offsets = [0, 16], sizes = [8, 16], strides = [1, 1]} : vector<8x96xf32> to vector<8x16xf32>
    %142 = arith.addf %140, %141 : vector<8x16xf32>
    %143 = arith.negf %142 : vector<8x16xf32>
    %144 = math.exp %143 : vector<8x16xf32>
    %cst_50 = arith.constant 1.000000e+00 : f32
    %145 = vector.broadcast %cst_50 : f32 to vector<8x16xf32>
    %146 = arith.addf %145, %144 : vector<8x16xf32>
    %147 = arith.divf %145, %146 : vector<8x16xf32>
    %148 = vector.extract_strided_slice %128 {offsets = [0, 32], sizes = [8, 16], strides = [1, 1]} : vector<8x48xf32> to vector<8x16xf32>
    %149 = vector.extract_strided_slice %125 {offsets = [0, 32], sizes = [8, 16], strides = [1, 1]} : vector<8x96xf32> to vector<8x16xf32>
    %150 = vector.broadcast %23 : vector<1x16xf32> to vector<8x16xf32>
    %151 = arith.addf %149, %150 : vector<8x16xf32>
    %152 = arith.mulf %139, %151 : vector<8x16xf32>
    %153 = arith.addf %148, %152 : vector<8x16xf32>
    %154 = math.tanh %153 : vector<8x16xf32>
    %cst_51 = arith.constant 1.000000e+00 : f32
    %155 = vector.broadcast %cst_51 : f32 to vector<8x16xf32>
    %156 = arith.subf %155, %147 : vector<8x16xf32>
    %157 = arith.mulf %156, %154 : vector<8x16xf32>
    %158 = arith.mulf %147, %69 : vector<8x16xf32>
    %159 = arith.addf %157, %158 : vector<8x16xf32>
    %160 = vector.broadcast %131 : vector<8x1xf32> to vector<8x16xf32>
    %161 = arith.mulf %160, %159 : vector<8x16xf32>
    %cst_52 = arith.constant 1.000000e+00 : f32
    %162 = vector.broadcast %cst_52 : f32 to vector<8x1xf32>
    %163 = arith.subf %162, %131 : vector<8x1xf32>
    %164 = vector.broadcast %163 : vector<8x1xf32> to vector<8x16xf32>
    %165 = arith.mulf %164, %69 : vector<8x16xf32>
    %166 = arith.addf %161, %165 : vector<8x16xf32>
    %167 = vector.broadcast %131 : vector<8x1xf32> to vector<8x16xf32>
    %168 = arith.mulf %166, %167 : vector<8x16xf32>
    %169 = arith.index_cast %c1_i32 : i32 to index
    %c0_53 = arith.constant 0 : index
    %c0_54 = arith.constant 0 : index
    %170 = vector.load %arg18[%169, %c0_53, %c0_54] : memref<8x8x16xf32, #tpu.memory_space<vmem>>, vector<1x8x16xf32>
    %171 = vector.shape_cast %170 : vector<1x8x16xf32> to vector<8x16xf32>
    %172 = vector.shape_cast %168 : vector<8x16xf32> to vector<1x8x16xf32>
    tpu.vector_store %arg18[%169, %c0_53, %c0_54], %172 {strides = array<i32>} : memref<8x8x16xf32, #tpu.memory_space<vmem>>, vector<1x8x16xf32>,
    %173 = arith.index_cast %123 : i32 to index
    %c0_55 = arith.constant 0 : index
    %c0_56 = arith.constant 0 : index
    %174 = vector.load %arg17[%173, %c0_55, %c0_56] : memref<8x8x48xf32, #tpu.memory_space<vmem>>, vector<1x8x48xf32>
    %175 = vector.shape_cast %174 : vector<1x8x48xf32> to vector<8x48xf32>
    %176 = arith.index_cast %123 : i32 to index
    %c0_57 = arith.constant 0 : index
    %c0_58 = arith.constant 0 : index
    %177 = vector.load %arg20[%176, %c0_57, %c0_58] : memref<8x8x1xf32, #tpu.memory_space<vmem>>, vector<1x8x1xf32>
    %178 = vector.shape_cast %177 : vector<1x8x1xf32> to vector<8x1xf32>
    %179 = vector.extract_strided_slice %175 {offsets = [0, 0], sizes = [8, 16], strides = [1, 1]} : vector<8x48xf32> to vector<8x16xf32>
    %180 = vector.extract_strided_slice %125 {offsets = [0, 48], sizes = [8, 16], strides = [1, 1]} : vector<8x96xf32> to vector<8x16xf32>
    %181 = arith.addf %179, %180 : vector<8x16xf32>
    %182 = arith.negf %181 : vector<8x16xf32>
    %183 = math.exp %182 : vector<8x16xf32>
    %cst_59 = arith.constant 1.000000e+00 : f32
    %184 = vector.broadcast %cst_59 : f32 to vector<8x16xf32>
    %185 = arith.addf %184, %183 : vector<8x16xf32>
    %186 = arith.divf %184, %185 : vector<8x16xf32>
    %187 = vector.extract_strided_slice %175 {offsets = [0, 16], sizes = [8, 16], strides = [1, 1]} : vector<8x48xf32> to vector<8x16xf32>
    %188 = vector.extract_strided_slice %125 {offsets = [0, 64], sizes = [8, 16], strides = [1, 1]} : vector<8x96xf32> to vector<8x16xf32>
    %189 = arith.addf %187, %188 : vector<8x16xf32>
    %190 = arith.negf %189 : vector<8x16xf32>
    %191 = math.exp %190 : vector<8x16xf32>
    %cst_60 = arith.constant 1.000000e+00 : f32
    %192 = vector.broadcast %cst_60 : f32 to vector<8x16xf32>
    %193 = arith.addf %192, %191 : vector<8x16xf32>
    %194 = arith.divf %192, %193 : vector<8x16xf32>
    %195 = vector.extract_strided_slice %175 {offsets = [0, 32], sizes = [8, 16], strides = [1, 1]} : vector<8x48xf32> to vector<8x16xf32>
    %196 = vector.extract_strided_slice %125 {offsets = [0, 80], sizes = [8, 16], strides = [1, 1]} : vector<8x96xf32> to vector<8x16xf32>
    %197 = vector.broadcast %24 : vector<1x16xf32> to vector<8x16xf32>
    %198 = arith.addf %196, %197 : vector<8x16xf32>
    %199 = arith.mulf %186, %198 : vector<8x16xf32>
    %200 = arith.addf %195, %199 : vector<8x16xf32>
    %201 = math.tanh %200 : vector<8x16xf32>
    %cst_61 = arith.constant 1.000000e+00 : f32
    %202 = vector.broadcast %cst_61 : f32 to vector<8x16xf32>
    %203 = arith.subf %202, %194 : vector<8x16xf32>
    %204 = arith.mulf %203, %201 : vector<8x16xf32>
    %205 = arith.mulf %194, %116 : vector<8x16xf32>
    %206 = arith.addf %204, %205 : vector<8x16xf32>
    %207 = vector.broadcast %178 : vector<8x1xf32> to vector<8x16xf32>
    %208 = arith.mulf %207, %206 : vector<8x16xf32>
    %cst_62 = arith.constant 1.000000e+00 : f32
    %209 = vector.broadcast %cst_62 : f32 to vector<8x1xf32>
    %210 = arith.subf %209, %178 : vector<8x1xf32>
    %211 = vector.broadcast %210 : vector<8x1xf32> to vector<8x16xf32>
    %212 = arith.mulf %211, %116 : vector<8x16xf32>
    %213 = arith.addf %208, %212 : vector<8x16xf32>
    %214 = vector.broadcast %178 : vector<8x1xf32> to vector<8x16xf32>
    %215 = arith.mulf %213, %214 : vector<8x16xf32>
    %216 = arith.index_cast %123 : i32 to index
    %c0_63 = arith.constant 0 : index
    %c0_64 = arith.constant 0 : index
    %217 = vector.load %arg19[%216, %c0_63, %c0_64] : memref<8x8x16xf32, #tpu.memory_space<vmem>>, vector<1x8x16xf32>
    %218 = vector.shape_cast %217 : vector<1x8x16xf32> to vector<8x16xf32>
    %219 = vector.shape_cast %215 : vector<8x16xf32> to vector<1x8x16xf32>
    tpu.vector_store %arg19[%216, %c0_63, %c0_64], %219 {strides = array<i32>} : memref<8x8x16xf32, #tpu.memory_space<vmem>>, vector<1x8x16xf32>,
    %c2_i32 = arith.constant 2 : i32
    %c7_i32_65 = arith.constant 7 : i32
    %220 = arith.subi %c7_i32_65, %c2_i32 : i32
    %221 = tpu.concatenate %166, %213 in 1 : vector<8x16xf32>, vector<8x16xf32> -> vector<8x32xf32>
    %cst_66 = arith.constant dense<0.000000e+00> : vector<8x96xf32>
    %222 = tpu.matmul %221, %21, %cst_66 {dimension_numbers = #tpu.dot_dimension_numbers<[1], [0], [0], [1], [0, 0, 1, 1], [], []>} : vector<8x32xf32>, vector<32x96xf32>, vector<8x96xf32> -> vector<8x96xf32>
    %223 = arith.index_cast %c2_i32 : i32 to index
    %c0_67 = arith.constant 0 : index
    %c0_68 = arith.constant 0 : index
    %224 = vector.load %arg16[%223, %c0_67, %c0_68] : memref<8x8x48xf32, #tpu.memory_space<vmem>>, vector<1x8x48xf32>
    %225 = vector.shape_cast %224 : vector<1x8x48xf32> to vector<8x48xf32>
    %226 = arith.index_cast %c2_i32 : i32 to index
    %c0_69 = arith.constant 0 : index
    %c0_70 = arith.constant 0 : index
    %227 = vector.load %arg20[%226, %c0_69, %c0_70] : memref<8x8x1xf32, #tpu.memory_space<vmem>>, vector<1x8x1xf32>
    %228 = vector.shape_cast %227 : vector<1x8x1xf32> to vector<8x1xf32>
    %229 = vector.extract_strided_slice %225 {offsets = [0, 0], sizes = [8, 16], strides = [1, 1]} : vector<8x48xf32> to vector<8x16xf32>
    %230 = vector.extract_strided_slice %222 {offsets = [0, 0], sizes = [8, 16], strides = [1, 1]} : vector<8x96xf32> to vector<8x16xf32>
    %231 = arith.addf %229, %230 : vector<8x16xf32>
    %232 = arith.negf %231 : vector<8x16xf32>
    %233 = math.exp %232 : vector<8x16xf32>
    %cst_71 = arith.constant 1.000000e+00 : f32
    %234 = vector.broadcast %cst_71 : f32 to vector<8x16xf32>
    %235 = arith.addf %234, %233 : vector<8x16xf32>
    %236 = arith.divf %234, %235 : vector<8x16xf32>
    %237 = vector.extract_strided_slice %225 {offsets = [0, 16], sizes = [8, 16], strides = [1, 1]} : vector<8x48xf32> to vector<8x16xf32>
    %238 = vector.extract_strided_slice %222 {offsets = [0, 16], sizes = [8, 16], strides = [1, 1]} : vector<8x96xf32> to vector<8x16xf32>
    %239 = arith.addf %237, %238 : vector<8x16xf32>
    %240 = arith.negf %239 : vector<8x16xf32>
    %241 = math.exp %240 : vector<8x16xf32>
    %cst_72 = arith.constant 1.000000e+00 : f32
    %242 = vector.broadcast %cst_72 : f32 to vector<8x16xf32>
    %243 = arith.addf %242, %241 : vector<8x16xf32>
    %244 = arith.divf %242, %243 : vector<8x16xf32>
    %245 = vector.extract_strided_slice %225 {offsets = [0, 32], sizes = [8, 16], strides = [1, 1]} : vector<8x48xf32> to vector<8x16xf32>
    %246 = vector.extract_strided_slice %222 {offsets = [0, 32], sizes = [8, 16], strides = [1, 1]} : vector<8x96xf32> to vector<8x16xf32>
    %247 = vector.broadcast %23 : vector<1x16xf32> to vector<8x16xf32>
    %248 = arith.addf %246, %247 : vector<8x16xf32>
    %249 = arith.mulf %236, %248 : vector<8x16xf32>
    %250 = arith.addf %245, %249 : vector<8x16xf32>
    %251 = math.tanh %250 : vector<8x16xf32>
    %cst_73 = arith.constant 1.000000e+00 : f32
    %252 = vector.broadcast %cst_73 : f32 to vector<8x16xf32>
    %253 = arith.subf %252, %244 : vector<8x16xf32>
    %254 = arith.mulf %253, %251 : vector<8x16xf32>
    %255 = arith.mulf %244, %166 : vector<8x16xf32>
    %256 = arith.addf %254, %255 : vector<8x16xf32>
    %257 = vector.broadcast %228 : vector<8x1xf32> to vector<8x16xf32>
    %258 = arith.mulf %257, %256 : vector<8x16xf32>
    %cst_74 = arith.constant 1.000000e+00 : f32
    %259 = vector.broadcast %cst_74 : f32 to vector<8x1xf32>
    %260 = arith.subf %259, %228 : vector<8x1xf32>
    %261 = vector.broadcast %260 : vector<8x1xf32> to vector<8x16xf32>
    %262 = arith.mulf %261, %166 : vector<8x16xf32>
    %263 = arith.addf %258, %262 : vector<8x16xf32>
    %264 = vector.broadcast %228 : vector<8x1xf32> to vector<8x16xf32>
    %265 = arith.mulf %263, %264 : vector<8x16xf32>
    %266 = arith.index_cast %c2_i32 : i32 to index
    %c0_75 = arith.constant 0 : index
    %c0_76 = arith.constant 0 : index
    %267 = vector.load %arg18[%266, %c0_75, %c0_76] : memref<8x8x16xf32, #tpu.memory_space<vmem>>, vector<1x8x16xf32>
    %268 = vector.shape_cast %267 : vector<1x8x16xf32> to vector<8x16xf32>
    %269 = vector.shape_cast %265 : vector<8x16xf32> to vector<1x8x16xf32>
    tpu.vector_store %arg18[%266, %c0_75, %c0_76], %269 {strides = array<i32>} : memref<8x8x16xf32, #tpu.memory_space<vmem>>, vector<1x8x16xf32>,
    %270 = arith.index_cast %220 : i32 to index
    %c0_77 = arith.constant 0 : index
    %c0_78 = arith.constant 0 : index
    %271 = vector.load %arg17[%270, %c0_77, %c0_78] : memref<8x8x48xf32, #tpu.memory_space<vmem>>, vector<1x8x48xf32>
    %272 = vector.shape_cast %271 : vector<1x8x48xf32> to vector<8x48xf32>
    %273 = arith.index_cast %220 : i32 to index
    %c0_79 = arith.constant 0 : index
    %c0_80 = arith.constant 0 : index
    %274 = vector.load %arg20[%273, %c0_79, %c0_80] : memref<8x8x1xf32, #tpu.memory_space<vmem>>, vector<1x8x1xf32>
    %275 = vector.shape_cast %274 : vector<1x8x1xf32> to vector<8x1xf32>
    %276 = vector.extract_strided_slice %272 {offsets = [0, 0], sizes = [8, 16], strides = [1, 1]} : vector<8x48xf32> to vector<8x16xf32>
    %277 = vector.extract_strided_slice %222 {offsets = [0, 48], sizes = [8, 16], strides = [1, 1]} : vector<8x96xf32> to vector<8x16xf32>
    %278 = arith.addf %276, %277 : vector<8x16xf32>
    %279 = arith.negf %278 : vector<8x16xf32>
    %280 = math.exp %279 : vector<8x16xf32>
    %cst_81 = arith.constant 1.000000e+00 : f32
    %281 = vector.broadcast %cst_81 : f32 to vector<8x16xf32>
    %282 = arith.addf %281, %280 : vector<8x16xf32>
    %283 = arith.divf %281, %282 : vector<8x16xf32>
    %284 = vector.extract_strided_slice %272 {offsets = [0, 16], sizes = [8, 16], strides = [1, 1]} : vector<8x48xf32> to vector<8x16xf32>
    %285 = vector.extract_strided_slice %222 {offsets = [0, 64], sizes = [8, 16], strides = [1, 1]} : vector<8x96xf32> to vector<8x16xf32>
    %286 = arith.addf %284, %285 : vector<8x16xf32>
    %287 = arith.negf %286 : vector<8x16xf32>
    %288 = math.exp %287 : vector<8x16xf32>
    %cst_82 = arith.constant 1.000000e+00 : f32
    %289 = vector.broadcast %cst_82 : f32 to vector<8x16xf32>
    %290 = arith.addf %289, %288 : vector<8x16xf32>
    %291 = arith.divf %289, %290 : vector<8x16xf32>
    %292 = vector.extract_strided_slice %272 {offsets = [0, 32], sizes = [8, 16], strides = [1, 1]} : vector<8x48xf32> to vector<8x16xf32>
    %293 = vector.extract_strided_slice %222 {offsets = [0, 80], sizes = [8, 16], strides = [1, 1]} : vector<8x96xf32> to vector<8x16xf32>
    %294 = vector.broadcast %24 : vector<1x16xf32> to vector<8x16xf32>
    %295 = arith.addf %293, %294 : vector<8x16xf32>
    %296 = arith.mulf %283, %295 : vector<8x16xf32>
    %297 = arith.addf %292, %296 : vector<8x16xf32>
    %298 = math.tanh %297 : vector<8x16xf32>
    %cst_83 = arith.constant 1.000000e+00 : f32
    %299 = vector.broadcast %cst_83 : f32 to vector<8x16xf32>
    %300 = arith.subf %299, %291 : vector<8x16xf32>
    %301 = arith.mulf %300, %298 : vector<8x16xf32>
    %302 = arith.mulf %291, %213 : vector<8x16xf32>
    %303 = arith.addf %301, %302 : vector<8x16xf32>
    %304 = vector.broadcast %275 : vector<8x1xf32> to vector<8x16xf32>
    %305 = arith.mulf %304, %303 : vector<8x16xf32>
    %cst_84 = arith.constant 1.000000e+00 : f32
    %306 = vector.broadcast %cst_84 : f32 to vector<8x1xf32>
    %307 = arith.subf %306, %275 : vector<8x1xf32>
    %308 = vector.broadcast %307 : vector<8x1xf32> to vector<8x16xf32>
    %309 = arith.mulf %308, %213 : vector<8x16xf32>
    %310 = arith.addf %305, %309 : vector<8x16xf32>
    %311 = vector.broadcast %275 : vector<8x1xf32> to vector<8x16xf32>
    %312 = arith.mulf %310, %311 : vector<8x16xf32>
    %313 = arith.index_cast %220 : i32 to index
    %c0_85 = arith.constant 0 : index
    %c0_86 = arith.constant 0 : index
    %314 = vector.load %arg19[%313, %c0_85, %c0_86] : memref<8x8x16xf32, #tpu.memory_space<vmem>>, vector<1x8x16xf32>
    %315 = vector.shape_cast %314 : vector<1x8x16xf32> to vector<8x16xf32>
    %316 = vector.shape_cast %312 : vector<8x16xf32> to vector<1x8x16xf32>
    tpu.vector_store %arg19[%313, %c0_85, %c0_86], %316 {strides = array<i32>} : memref<8x8x16xf32, #tpu.memory_space<vmem>>, vector<1x8x16xf32>,
    %c3_i32 = arith.constant 3 : i32
    %c7_i32_87 = arith.constant 7 : i32
    %317 = arith.subi %c7_i32_87, %c3_i32 : i32
    %318 = tpu.concatenate %263, %310 in 1 : vector<8x16xf32>, vector<8x16xf32> -> vector<8x32xf32>
    %cst_88 = arith.constant dense<0.000000e+00> : vector<8x96xf32>
    %319 = tpu.matmul %318, %21, %cst_88 {dimension_numbers = #tpu.dot_dimension_numbers<[1], [0], [0], [1], [0, 0, 1, 1], [], []>} : vector<8x32xf32>, vector<32x96xf32>, vector<8x96xf32> -> vector<8x96xf32>
    %320 = arith.index_cast %c3_i32 : i32 to index
    %c0_89 = arith.constant 0 : index
    %c0_90 = arith.constant 0 : index
    %321 = vector.load %arg16[%320, %c0_89, %c0_90] : memref<8x8x48xf32, #tpu.memory_space<vmem>>, vector<1x8x48xf32>
    %322 = vector.shape_cast %321 : vector<1x8x48xf32> to vector<8x48xf32>
    %323 = arith.index_cast %c3_i32 : i32 to index
    %c0_91 = arith.constant 0 : index
    %c0_92 = arith.constant 0 : index
    %324 = vector.load %arg20[%323, %c0_91, %c0_92] : memref<8x8x1xf32, #tpu.memory_space<vmem>>, vector<1x8x1xf32>
    %325 = vector.shape_cast %324 : vector<1x8x1xf32> to vector<8x1xf32>
    %326 = vector.extract_strided_slice %322 {offsets = [0, 0], sizes = [8, 16], strides = [1, 1]} : vector<8x48xf32> to vector<8x16xf32>
    %327 = vector.extract_strided_slice %319 {offsets = [0, 0], sizes = [8, 16], strides = [1, 1]} : vector<8x96xf32> to vector<8x16xf32>
    %328 = arith.addf %326, %327 : vector<8x16xf32>
    %329 = arith.negf %328 : vector<8x16xf32>
    %330 = math.exp %329 : vector<8x16xf32>
    %cst_93 = arith.constant 1.000000e+00 : f32
    %331 = vector.broadcast %cst_93 : f32 to vector<8x16xf32>
    %332 = arith.addf %331, %330 : vector<8x16xf32>
    %333 = arith.divf %331, %332 : vector<8x16xf32>
    %334 = vector.extract_strided_slice %322 {offsets = [0, 16], sizes = [8, 16], strides = [1, 1]} : vector<8x48xf32> to vector<8x16xf32>
    %335 = vector.extract_strided_slice %319 {offsets = [0, 16], sizes = [8, 16], strides = [1, 1]} : vector<8x96xf32> to vector<8x16xf32>
    %336 = arith.addf %334, %335 : vector<8x16xf32>
    %337 = arith.negf %336 : vector<8x16xf32>
    %338 = math.exp %337 : vector<8x16xf32>
    %cst_94 = arith.constant 1.000000e+00 : f32
    %339 = vector.broadcast %cst_94 : f32 to vector<8x16xf32>
    %340 = arith.addf %339, %338 : vector<8x16xf32>
    %341 = arith.divf %339, %340 : vector<8x16xf32>
    %342 = vector.extract_strided_slice %322 {offsets = [0, 32], sizes = [8, 16], strides = [1, 1]} : vector<8x48xf32> to vector<8x16xf32>
    %343 = vector.extract_strided_slice %319 {offsets = [0, 32], sizes = [8, 16], strides = [1, 1]} : vector<8x96xf32> to vector<8x16xf32>
    %344 = vector.broadcast %23 : vector<1x16xf32> to vector<8x16xf32>
    %345 = arith.addf %343, %344 : vector<8x16xf32>
    %346 = arith.mulf %333, %345 : vector<8x16xf32>
    %347 = arith.addf %342, %346 : vector<8x16xf32>
    %348 = math.tanh %347 : vector<8x16xf32>
    %cst_95 = arith.constant 1.000000e+00 : f32
    %349 = vector.broadcast %cst_95 : f32 to vector<8x16xf32>
    %350 = arith.subf %349, %341 : vector<8x16xf32>
    %351 = arith.mulf %350, %348 : vector<8x16xf32>
    %352 = arith.mulf %341, %263 : vector<8x16xf32>
    %353 = arith.addf %351, %352 : vector<8x16xf32>
    %354 = vector.broadcast %325 : vector<8x1xf32> to vector<8x16xf32>
    %355 = arith.mulf %354, %353 : vector<8x16xf32>
    %cst_96 = arith.constant 1.000000e+00 : f32
    %356 = vector.broadcast %cst_96 : f32 to vector<8x1xf32>
    %357 = arith.subf %356, %325 : vector<8x1xf32>
    %358 = vector.broadcast %357 : vector<8x1xf32> to vector<8x16xf32>
    %359 = arith.mulf %358, %263 : vector<8x16xf32>
    %360 = arith.addf %355, %359 : vector<8x16xf32>
    %361 = vector.broadcast %325 : vector<8x1xf32> to vector<8x16xf32>
    %362 = arith.mulf %360, %361 : vector<8x16xf32>
    %363 = arith.index_cast %c3_i32 : i32 to index
    %c0_97 = arith.constant 0 : index
    %c0_98 = arith.constant 0 : index
    %364 = vector.load %arg18[%363, %c0_97, %c0_98] : memref<8x8x16xf32, #tpu.memory_space<vmem>>, vector<1x8x16xf32>
    %365 = vector.shape_cast %364 : vector<1x8x16xf32> to vector<8x16xf32>
    %366 = vector.shape_cast %362 : vector<8x16xf32> to vector<1x8x16xf32>
    tpu.vector_store %arg18[%363, %c0_97, %c0_98], %366 {strides = array<i32>} : memref<8x8x16xf32, #tpu.memory_space<vmem>>, vector<1x8x16xf32>,
    %367 = arith.index_cast %317 : i32 to index
    %c0_99 = arith.constant 0 : index
    %c0_100 = arith.constant 0 : index
    %368 = vector.load %arg17[%367, %c0_99, %c0_100] : memref<8x8x48xf32, #tpu.memory_space<vmem>>, vector<1x8x48xf32>
    %369 = vector.shape_cast %368 : vector<1x8x48xf32> to vector<8x48xf32>
    %370 = arith.index_cast %317 : i32 to index
    %c0_101 = arith.constant 0 : index
    %c0_102 = arith.constant 0 : index
    %371 = vector.load %arg20[%370, %c0_101, %c0_102] : memref<8x8x1xf32, #tpu.memory_space<vmem>>, vector<1x8x1xf32>
    %372 = vector.shape_cast %371 : vector<1x8x1xf32> to vector<8x1xf32>
    %373 = vector.extract_strided_slice %369 {offsets = [0, 0], sizes = [8, 16], strides = [1, 1]} : vector<8x48xf32> to vector<8x16xf32>
    %374 = vector.extract_strided_slice %319 {offsets = [0, 48], sizes = [8, 16], strides = [1, 1]} : vector<8x96xf32> to vector<8x16xf32>
    %375 = arith.addf %373, %374 : vector<8x16xf32>
    %376 = arith.negf %375 : vector<8x16xf32>
    %377 = math.exp %376 : vector<8x16xf32>
    %cst_103 = arith.constant 1.000000e+00 : f32
    %378 = vector.broadcast %cst_103 : f32 to vector<8x16xf32>
    %379 = arith.addf %378, %377 : vector<8x16xf32>
    %380 = arith.divf %378, %379 : vector<8x16xf32>
    %381 = vector.extract_strided_slice %369 {offsets = [0, 16], sizes = [8, 16], strides = [1, 1]} : vector<8x48xf32> to vector<8x16xf32>
    %382 = vector.extract_strided_slice %319 {offsets = [0, 64], sizes = [8, 16], strides = [1, 1]} : vector<8x96xf32> to vector<8x16xf32>
    %383 = arith.addf %381, %382 : vector<8x16xf32>
    %384 = arith.negf %383 : vector<8x16xf32>
    %385 = math.exp %384 : vector<8x16xf32>
    %cst_104 = arith.constant 1.000000e+00 : f32
    %386 = vector.broadcast %cst_104 : f32 to vector<8x16xf32>
    %387 = arith.addf %386, %385 : vector<8x16xf32>
    %388 = arith.divf %386, %387 : vector<8x16xf32>
    %389 = vector.extract_strided_slice %369 {offsets = [0, 32], sizes = [8, 16], strides = [1, 1]} : vector<8x48xf32> to vector<8x16xf32>
    %390 = vector.extract_strided_slice %319 {offsets = [0, 80], sizes = [8, 16], strides = [1, 1]} : vector<8x96xf32> to vector<8x16xf32>
    %391 = vector.broadcast %24 : vector<1x16xf32> to vector<8x16xf32>
    %392 = arith.addf %390, %391 : vector<8x16xf32>
    %393 = arith.mulf %380, %392 : vector<8x16xf32>
    %394 = arith.addf %389, %393 : vector<8x16xf32>
    %395 = math.tanh %394 : vector<8x16xf32>
    %cst_105 = arith.constant 1.000000e+00 : f32
    %396 = vector.broadcast %cst_105 : f32 to vector<8x16xf32>
    %397 = arith.subf %396, %388 : vector<8x16xf32>
    %398 = arith.mulf %397, %395 : vector<8x16xf32>
    %399 = arith.mulf %388, %310 : vector<8x16xf32>
    %400 = arith.addf %398, %399 : vector<8x16xf32>
    %401 = vector.broadcast %372 : vector<8x1xf32> to vector<8x16xf32>
    %402 = arith.mulf %401, %400 : vector<8x16xf32>
    %cst_106 = arith.constant 1.000000e+00 : f32
    %403 = vector.broadcast %cst_106 : f32 to vector<8x1xf32>
    %404 = arith.subf %403, %372 : vector<8x1xf32>
    %405 = vector.broadcast %404 : vector<8x1xf32> to vector<8x16xf32>
    %406 = arith.mulf %405, %310 : vector<8x16xf32>
    %407 = arith.addf %402, %406 : vector<8x16xf32>
    %408 = vector.broadcast %372 : vector<8x1xf32> to vector<8x16xf32>
    %409 = arith.mulf %407, %408 : vector<8x16xf32>
    %410 = arith.index_cast %317 : i32 to index
    %c0_107 = arith.constant 0 : index
    %c0_108 = arith.constant 0 : index
    %411 = vector.load %arg19[%410, %c0_107, %c0_108] : memref<8x8x16xf32, #tpu.memory_space<vmem>>, vector<1x8x16xf32>
    %412 = vector.shape_cast %411 : vector<1x8x16xf32> to vector<8x16xf32>
    %413 = vector.shape_cast %409 : vector<8x16xf32> to vector<1x8x16xf32>
    tpu.vector_store %arg19[%410, %c0_107, %c0_108], %413 {strides = array<i32>} : memref<8x8x16xf32, #tpu.memory_space<vmem>>, vector<1x8x16xf32>,
    %c4_i32 = arith.constant 4 : i32
    %c7_i32_109 = arith.constant 7 : i32
    %414 = arith.subi %c7_i32_109, %c4_i32 : i32
    %415 = tpu.concatenate %360, %407 in 1 : vector<8x16xf32>, vector<8x16xf32> -> vector<8x32xf32>
    %cst_110 = arith.constant dense<0.000000e+00> : vector<8x96xf32>
    %416 = tpu.matmul %415, %21, %cst_110 {dimension_numbers = #tpu.dot_dimension_numbers<[1], [0], [0], [1], [0, 0, 1, 1], [], []>} : vector<8x32xf32>, vector<32x96xf32>, vector<8x96xf32> -> vector<8x96xf32>
    %417 = arith.index_cast %c4_i32 : i32 to index
    %c0_111 = arith.constant 0 : index
    %c0_112 = arith.constant 0 : index
    %418 = vector.load %arg16[%417, %c0_111, %c0_112] : memref<8x8x48xf32, #tpu.memory_space<vmem>>, vector<1x8x48xf32>
    %419 = vector.shape_cast %418 : vector<1x8x48xf32> to vector<8x48xf32>
    %420 = arith.index_cast %c4_i32 : i32 to index
    %c0_113 = arith.constant 0 : index
    %c0_114 = arith.constant 0 : index
    %421 = vector.load %arg20[%420, %c0_113, %c0_114] : memref<8x8x1xf32, #tpu.memory_space<vmem>>, vector<1x8x1xf32>
    %422 = vector.shape_cast %421 : vector<1x8x1xf32> to vector<8x1xf32>
    %423 = vector.extract_strided_slice %419 {offsets = [0, 0], sizes = [8, 16], strides = [1, 1]} : vector<8x48xf32> to vector<8x16xf32>
    %424 = vector.extract_strided_slice %416 {offsets = [0, 0], sizes = [8, 16], strides = [1, 1]} : vector<8x96xf32> to vector<8x16xf32>
    %425 = arith.addf %423, %424 : vector<8x16xf32>
    %426 = arith.negf %425 : vector<8x16xf32>
    %427 = math.exp %426 : vector<8x16xf32>
    %cst_115 = arith.constant 1.000000e+00 : f32
    %428 = vector.broadcast %cst_115 : f32 to vector<8x16xf32>
    %429 = arith.addf %428, %427 : vector<8x16xf32>
    %430 = arith.divf %428, %429 : vector<8x16xf32>
    %431 = vector.extract_strided_slice %419 {offsets = [0, 16], sizes = [8, 16], strides = [1, 1]} : vector<8x48xf32> to vector<8x16xf32>
    %432 = vector.extract_strided_slice %416 {offsets = [0, 16], sizes = [8, 16], strides = [1, 1]} : vector<8x96xf32> to vector<8x16xf32>
    %433 = arith.addf %431, %432 : vector<8x16xf32>
    %434 = arith.negf %433 : vector<8x16xf32>
    %435 = math.exp %434 : vector<8x16xf32>
    %cst_116 = arith.constant 1.000000e+00 : f32
    %436 = vector.broadcast %cst_116 : f32 to vector<8x16xf32>
    %437 = arith.addf %436, %435 : vector<8x16xf32>
    %438 = arith.divf %436, %437 : vector<8x16xf32>
    %439 = vector.extract_strided_slice %419 {offsets = [0, 32], sizes = [8, 16], strides = [1, 1]} : vector<8x48xf32> to vector<8x16xf32>
    %440 = vector.extract_strided_slice %416 {offsets = [0, 32], sizes = [8, 16], strides = [1, 1]} : vector<8x96xf32> to vector<8x16xf32>
    %441 = vector.broadcast %23 : vector<1x16xf32> to vector<8x16xf32>
    %442 = arith.addf %440, %441 : vector<8x16xf32>
    %443 = arith.mulf %430, %442 : vector<8x16xf32>
    %444 = arith.addf %439, %443 : vector<8x16xf32>
    %445 = math.tanh %444 : vector<8x16xf32>
    %cst_117 = arith.constant 1.000000e+00 : f32
    %446 = vector.broadcast %cst_117 : f32 to vector<8x16xf32>
    %447 = arith.subf %446, %438 : vector<8x16xf32>
    %448 = arith.mulf %447, %445 : vector<8x16xf32>
    %449 = arith.mulf %438, %360 : vector<8x16xf32>
    %450 = arith.addf %448, %449 : vector<8x16xf32>
    %451 = vector.broadcast %422 : vector<8x1xf32> to vector<8x16xf32>
    %452 = arith.mulf %451, %450 : vector<8x16xf32>
    %cst_118 = arith.constant 1.000000e+00 : f32
    %453 = vector.broadcast %cst_118 : f32 to vector<8x1xf32>
    %454 = arith.subf %453, %422 : vector<8x1xf32>
    %455 = vector.broadcast %454 : vector<8x1xf32> to vector<8x16xf32>
    %456 = arith.mulf %455, %360 : vector<8x16xf32>
    %457 = arith.addf %452, %456 : vector<8x16xf32>
    %458 = vector.broadcast %422 : vector<8x1xf32> to vector<8x16xf32>
    %459 = arith.mulf %457, %458 : vector<8x16xf32>
    %460 = arith.index_cast %c4_i32 : i32 to index
    %c0_119 = arith.constant 0 : index
    %c0_120 = arith.constant 0 : index
    %461 = vector.load %arg18[%460, %c0_119, %c0_120] : memref<8x8x16xf32, #tpu.memory_space<vmem>>, vector<1x8x16xf32>
    %462 = vector.shape_cast %461 : vector<1x8x16xf32> to vector<8x16xf32>
    %463 = vector.shape_cast %459 : vector<8x16xf32> to vector<1x8x16xf32>
    tpu.vector_store %arg18[%460, %c0_119, %c0_120], %463 {strides = array<i32>} : memref<8x8x16xf32, #tpu.memory_space<vmem>>, vector<1x8x16xf32>,
    %464 = arith.index_cast %414 : i32 to index
    %c0_121 = arith.constant 0 : index
    %c0_122 = arith.constant 0 : index
    %465 = vector.load %arg17[%464, %c0_121, %c0_122] : memref<8x8x48xf32, #tpu.memory_space<vmem>>, vector<1x8x48xf32>
    %466 = vector.shape_cast %465 : vector<1x8x48xf32> to vector<8x48xf32>
    %467 = arith.index_cast %414 : i32 to index
    %c0_123 = arith.constant 0 : index
    %c0_124 = arith.constant 0 : index
    %468 = vector.load %arg20[%467, %c0_123, %c0_124] : memref<8x8x1xf32, #tpu.memory_space<vmem>>, vector<1x8x1xf32>
    %469 = vector.shape_cast %468 : vector<1x8x1xf32> to vector<8x1xf32>
    %470 = vector.extract_strided_slice %466 {offsets = [0, 0], sizes = [8, 16], strides = [1, 1]} : vector<8x48xf32> to vector<8x16xf32>
    %471 = vector.extract_strided_slice %416 {offsets = [0, 48], sizes = [8, 16], strides = [1, 1]} : vector<8x96xf32> to vector<8x16xf32>
    %472 = arith.addf %470, %471 : vector<8x16xf32>
    %473 = arith.negf %472 : vector<8x16xf32>
    %474 = math.exp %473 : vector<8x16xf32>
    %cst_125 = arith.constant 1.000000e+00 : f32
    %475 = vector.broadcast %cst_125 : f32 to vector<8x16xf32>
    %476 = arith.addf %475, %474 : vector<8x16xf32>
    %477 = arith.divf %475, %476 : vector<8x16xf32>
    %478 = vector.extract_strided_slice %466 {offsets = [0, 16], sizes = [8, 16], strides = [1, 1]} : vector<8x48xf32> to vector<8x16xf32>
    %479 = vector.extract_strided_slice %416 {offsets = [0, 64], sizes = [8, 16], strides = [1, 1]} : vector<8x96xf32> to vector<8x16xf32>
    %480 = arith.addf %478, %479 : vector<8x16xf32>
    %481 = arith.negf %480 : vector<8x16xf32>
    %482 = math.exp %481 : vector<8x16xf32>
    %cst_126 = arith.constant 1.000000e+00 : f32
    %483 = vector.broadcast %cst_126 : f32 to vector<8x16xf32>
    %484 = arith.addf %483, %482 : vector<8x16xf32>
    %485 = arith.divf %483, %484 : vector<8x16xf32>
    %486 = vector.extract_strided_slice %466 {offsets = [0, 32], sizes = [8, 16], strides = [1, 1]} : vector<8x48xf32> to vector<8x16xf32>
    %487 = vector.extract_strided_slice %416 {offsets = [0, 80], sizes = [8, 16], strides = [1, 1]} : vector<8x96xf32> to vector<8x16xf32>
    %488 = vector.broadcast %24 : vector<1x16xf32> to vector<8x16xf32>
    %489 = arith.addf %487, %488 : vector<8x16xf32>
    %490 = arith.mulf %477, %489 : vector<8x16xf32>
    %491 = arith.addf %486, %490 : vector<8x16xf32>
    %492 = math.tanh %491 : vector<8x16xf32>
    %cst_127 = arith.constant 1.000000e+00 : f32
    %493 = vector.broadcast %cst_127 : f32 to vector<8x16xf32>
    %494 = arith.subf %493, %485 : vector<8x16xf32>
    %495 = arith.mulf %494, %492 : vector<8x16xf32>
    %496 = arith.mulf %485, %407 : vector<8x16xf32>
    %497 = arith.addf %495, %496 : vector<8x16xf32>
    %498 = vector.broadcast %469 : vector<8x1xf32> to vector<8x16xf32>
    %499 = arith.mulf %498, %497 : vector<8x16xf32>
    %cst_128 = arith.constant 1.000000e+00 : f32
    %500 = vector.broadcast %cst_128 : f32 to vector<8x1xf32>
    %501 = arith.subf %500, %469 : vector<8x1xf32>
    %502 = vector.broadcast %501 : vector<8x1xf32> to vector<8x16xf32>
    %503 = arith.mulf %502, %407 : vector<8x16xf32>
    %504 = arith.addf %499, %503 : vector<8x16xf32>
    %505 = vector.broadcast %469 : vector<8x1xf32> to vector<8x16xf32>
    %506 = arith.mulf %504, %505 : vector<8x16xf32>
    %507 = arith.index_cast %414 : i32 to index
    %c0_129 = arith.constant 0 : index
    %c0_130 = arith.constant 0 : index
    %508 = vector.load %arg19[%507, %c0_129, %c0_130] : memref<8x8x16xf32, #tpu.memory_space<vmem>>, vector<1x8x16xf32>
    %509 = vector.shape_cast %508 : vector<1x8x16xf32> to vector<8x16xf32>
    %510 = vector.shape_cast %506 : vector<8x16xf32> to vector<1x8x16xf32>
    tpu.vector_store %arg19[%507, %c0_129, %c0_130], %510 {strides = array<i32>} : memref<8x8x16xf32, #tpu.memory_space<vmem>>, vector<1x8x16xf32>,
    %c5_i32 = arith.constant 5 : i32
    %c7_i32_131 = arith.constant 7 : i32
    %511 = arith.subi %c7_i32_131, %c5_i32 : i32
    %512 = tpu.concatenate %457, %504 in 1 : vector<8x16xf32>, vector<8x16xf32> -> vector<8x32xf32>
    %cst_132 = arith.constant dense<0.000000e+00> : vector<8x96xf32>
    %513 = tpu.matmul %512, %21, %cst_132 {dimension_numbers = #tpu.dot_dimension_numbers<[1], [0], [0], [1], [0, 0, 1, 1], [], []>} : vector<8x32xf32>, vector<32x96xf32>, vector<8x96xf32> -> vector<8x96xf32>
    %514 = arith.index_cast %c5_i32 : i32 to index
    %c0_133 = arith.constant 0 : index
    %c0_134 = arith.constant 0 : index
    %515 = vector.load %arg16[%514, %c0_133, %c0_134] : memref<8x8x48xf32, #tpu.memory_space<vmem>>, vector<1x8x48xf32>
    %516 = vector.shape_cast %515 : vector<1x8x48xf32> to vector<8x48xf32>
    %517 = arith.index_cast %c5_i32 : i32 to index
    %c0_135 = arith.constant 0 : index
    %c0_136 = arith.constant 0 : index
    %518 = vector.load %arg20[%517, %c0_135, %c0_136] : memref<8x8x1xf32, #tpu.memory_space<vmem>>, vector<1x8x1xf32>
    %519 = vector.shape_cast %518 : vector<1x8x1xf32> to vector<8x1xf32>
    %520 = vector.extract_strided_slice %516 {offsets = [0, 0], sizes = [8, 16], strides = [1, 1]} : vector<8x48xf32> to vector<8x16xf32>
    %521 = vector.extract_strided_slice %513 {offsets = [0, 0], sizes = [8, 16], strides = [1, 1]} : vector<8x96xf32> to vector<8x16xf32>
    %522 = arith.addf %520, %521 : vector<8x16xf32>
    %523 = arith.negf %522 : vector<8x16xf32>
    %524 = math.exp %523 : vector<8x16xf32>
    %cst_137 = arith.constant 1.000000e+00 : f32
    %525 = vector.broadcast %cst_137 : f32 to vector<8x16xf32>
    %526 = arith.addf %525, %524 : vector<8x16xf32>
    %527 = arith.divf %525, %526 : vector<8x16xf32>
    %528 = vector.extract_strided_slice %516 {offsets = [0, 16], sizes = [8, 16], strides = [1, 1]} : vector<8x48xf32> to vector<8x16xf32>
    %529 = vector.extract_strided_slice %513 {offsets = [0, 16], sizes = [8, 16], strides = [1, 1]} : vector<8x96xf32> to vector<8x16xf32>
    %530 = arith.addf %528, %529 : vector<8x16xf32>
    %531 = arith.negf %530 : vector<8x16xf32>
    %532 = math.exp %531 : vector<8x16xf32>
    %cst_138 = arith.constant 1.000000e+00 : f32
    %533 = vector.broadcast %cst_138 : f32 to vector<8x16xf32>
    %534 = arith.addf %533, %532 : vector<8x16xf32>
    %535 = arith.divf %533, %534 : vector<8x16xf32>
    %536 = vector.extract_strided_slice %516 {offsets = [0, 32], sizes = [8, 16], strides = [1, 1]} : vector<8x48xf32> to vector<8x16xf32>
    %537 = vector.extract_strided_slice %513 {offsets = [0, 32], sizes = [8, 16], strides = [1, 1]} : vector<8x96xf32> to vector<8x16xf32>
    %538 = vector.broadcast %23 : vector<1x16xf32> to vector<8x16xf32>
    %539 = arith.addf %537, %538 : vector<8x16xf32>
    %540 = arith.mulf %527, %539 : vector<8x16xf32>
    %541 = arith.addf %536, %540 : vector<8x16xf32>
    %542 = math.tanh %541 : vector<8x16xf32>
    %cst_139 = arith.constant 1.000000e+00 : f32
    %543 = vector.broadcast %cst_139 : f32 to vector<8x16xf32>
    %544 = arith.subf %543, %535 : vector<8x16xf32>
    %545 = arith.mulf %544, %542 : vector<8x16xf32>
    %546 = arith.mulf %535, %457 : vector<8x16xf32>
    %547 = arith.addf %545, %546 : vector<8x16xf32>
    %548 = vector.broadcast %519 : vector<8x1xf32> to vector<8x16xf32>
    %549 = arith.mulf %548, %547 : vector<8x16xf32>
    %cst_140 = arith.constant 1.000000e+00 : f32
    %550 = vector.broadcast %cst_140 : f32 to vector<8x1xf32>
    %551 = arith.subf %550, %519 : vector<8x1xf32>
    %552 = vector.broadcast %551 : vector<8x1xf32> to vector<8x16xf32>
    %553 = arith.mulf %552, %457 : vector<8x16xf32>
    %554 = arith.addf %549, %553 : vector<8x16xf32>
    %555 = vector.broadcast %519 : vector<8x1xf32> to vector<8x16xf32>
    %556 = arith.mulf %554, %555 : vector<8x16xf32>
    %557 = arith.index_cast %c5_i32 : i32 to index
    %c0_141 = arith.constant 0 : index
    %c0_142 = arith.constant 0 : index
    %558 = vector.load %arg18[%557, %c0_141, %c0_142] : memref<8x8x16xf32, #tpu.memory_space<vmem>>, vector<1x8x16xf32>
    %559 = vector.shape_cast %558 : vector<1x8x16xf32> to vector<8x16xf32>
    %560 = vector.shape_cast %556 : vector<8x16xf32> to vector<1x8x16xf32>
    tpu.vector_store %arg18[%557, %c0_141, %c0_142], %560 {strides = array<i32>} : memref<8x8x16xf32, #tpu.memory_space<vmem>>, vector<1x8x16xf32>,
    %561 = arith.index_cast %511 : i32 to index
    %c0_143 = arith.constant 0 : index
    %c0_144 = arith.constant 0 : index
    %562 = vector.load %arg17[%561, %c0_143, %c0_144] : memref<8x8x48xf32, #tpu.memory_space<vmem>>, vector<1x8x48xf32>
    %563 = vector.shape_cast %562 : vector<1x8x48xf32> to vector<8x48xf32>
    %564 = arith.index_cast %511 : i32 to index
    %c0_145 = arith.constant 0 : index
    %c0_146 = arith.constant 0 : index
    %565 = vector.load %arg20[%564, %c0_145, %c0_146] : memref<8x8x1xf32, #tpu.memory_space<vmem>>, vector<1x8x1xf32>
    %566 = vector.shape_cast %565 : vector<1x8x1xf32> to vector<8x1xf32>
    %567 = vector.extract_strided_slice %563 {offsets = [0, 0], sizes = [8, 16], strides = [1, 1]} : vector<8x48xf32> to vector<8x16xf32>
    %568 = vector.extract_strided_slice %513 {offsets = [0, 48], sizes = [8, 16], strides = [1, 1]} : vector<8x96xf32> to vector<8x16xf32>
    %569 = arith.addf %567, %568 : vector<8x16xf32>
    %570 = arith.negf %569 : vector<8x16xf32>
    %571 = math.exp %570 : vector<8x16xf32>
    %cst_147 = arith.constant 1.000000e+00 : f32
    %572 = vector.broadcast %cst_147 : f32 to vector<8x16xf32>
    %573 = arith.addf %572, %571 : vector<8x16xf32>
    %574 = arith.divf %572, %573 : vector<8x16xf32>
    %575 = vector.extract_strided_slice %563 {offsets = [0, 16], sizes = [8, 16], strides = [1, 1]} : vector<8x48xf32> to vector<8x16xf32>
    %576 = vector.extract_strided_slice %513 {offsets = [0, 64], sizes = [8, 16], strides = [1, 1]} : vector<8x96xf32> to vector<8x16xf32>
    %577 = arith.addf %575, %576 : vector<8x16xf32>
    %578 = arith.negf %577 : vector<8x16xf32>
    %579 = math.exp %578 : vector<8x16xf32>
    %cst_148 = arith.constant 1.000000e+00 : f32
    %580 = vector.broadcast %cst_148 : f32 to vector<8x16xf32>
    %581 = arith.addf %580, %579 : vector<8x16xf32>
    %582 = arith.divf %580, %581 : vector<8x16xf32>
    %583 = vector.extract_strided_slice %563 {offsets = [0, 32], sizes = [8, 16], strides = [1, 1]} : vector<8x48xf32> to vector<8x16xf32>
    %584 = vector.extract_strided_slice %513 {offsets = [0, 80], sizes = [8, 16], strides = [1, 1]} : vector<8x96xf32> to vector<8x16xf32>
    %585 = vector.broadcast %24 : vector<1x16xf32> to vector<8x16xf32>
    %586 = arith.addf %584, %585 : vector<8x16xf32>
    %587 = arith.mulf %574, %586 : vector<8x16xf32>
    %588 = arith.addf %583, %587 : vector<8x16xf32>
    %589 = math.tanh %588 : vector<8x16xf32>
    %cst_149 = arith.constant 1.000000e+00 : f32
    %590 = vector.broadcast %cst_149 : f32 to vector<8x16xf32>
    %591 = arith.subf %590, %582 : vector<8x16xf32>
    %592 = arith.mulf %591, %589 : vector<8x16xf32>
    %593 = arith.mulf %582, %504 : vector<8x16xf32>
    %594 = arith.addf %592, %593 : vector<8x16xf32>
    %595 = vector.broadcast %566 : vector<8x1xf32> to vector<8x16xf32>
    %596 = arith.mulf %595, %594 : vector<8x16xf32>
    %cst_150 = arith.constant 1.000000e+00 : f32
    %597 = vector.broadcast %cst_150 : f32 to vector<8x1xf32>
    %598 = arith.subf %597, %566 : vector<8x1xf32>
    %599 = vector.broadcast %598 : vector<8x1xf32> to vector<8x16xf32>
    %600 = arith.mulf %599, %504 : vector<8x16xf32>
    %601 = arith.addf %596, %600 : vector<8x16xf32>
    %602 = vector.broadcast %566 : vector<8x1xf32> to vector<8x16xf32>
    %603 = arith.mulf %601, %602 : vector<8x16xf32>
    %604 = arith.index_cast %511 : i32 to index
    %c0_151 = arith.constant 0 : index
    %c0_152 = arith.constant 0 : index
    %605 = vector.load %arg19[%604, %c0_151, %c0_152] : memref<8x8x16xf32, #tpu.memory_space<vmem>>, vector<1x8x16xf32>
    %606 = vector.shape_cast %605 : vector<1x8x16xf32> to vector<8x16xf32>
    %607 = vector.shape_cast %603 : vector<8x16xf32> to vector<1x8x16xf32>
    tpu.vector_store %arg19[%604, %c0_151, %c0_152], %607 {strides = array<i32>} : memref<8x8x16xf32, #tpu.memory_space<vmem>>, vector<1x8x16xf32>,
    %c6_i32 = arith.constant 6 : i32
    %c7_i32_153 = arith.constant 7 : i32
    %608 = arith.subi %c7_i32_153, %c6_i32 : i32
    %609 = tpu.concatenate %554, %601 in 1 : vector<8x16xf32>, vector<8x16xf32> -> vector<8x32xf32>
    %cst_154 = arith.constant dense<0.000000e+00> : vector<8x96xf32>
    %610 = tpu.matmul %609, %21, %cst_154 {dimension_numbers = #tpu.dot_dimension_numbers<[1], [0], [0], [1], [0, 0, 1, 1], [], []>} : vector<8x32xf32>, vector<32x96xf32>, vector<8x96xf32> -> vector<8x96xf32>
    %611 = arith.index_cast %c6_i32 : i32 to index
    %c0_155 = arith.constant 0 : index
    %c0_156 = arith.constant 0 : index
    %612 = vector.load %arg16[%611, %c0_155, %c0_156] : memref<8x8x48xf32, #tpu.memory_space<vmem>>, vector<1x8x48xf32>
    %613 = vector.shape_cast %612 : vector<1x8x48xf32> to vector<8x48xf32>
    %614 = arith.index_cast %c6_i32 : i32 to index
    %c0_157 = arith.constant 0 : index
    %c0_158 = arith.constant 0 : index
    %615 = vector.load %arg20[%614, %c0_157, %c0_158] : memref<8x8x1xf32, #tpu.memory_space<vmem>>, vector<1x8x1xf32>
    %616 = vector.shape_cast %615 : vector<1x8x1xf32> to vector<8x1xf32>
    %617 = vector.extract_strided_slice %613 {offsets = [0, 0], sizes = [8, 16], strides = [1, 1]} : vector<8x48xf32> to vector<8x16xf32>
    %618 = vector.extract_strided_slice %610 {offsets = [0, 0], sizes = [8, 16], strides = [1, 1]} : vector<8x96xf32> to vector<8x16xf32>
    %619 = arith.addf %617, %618 : vector<8x16xf32>
    %620 = arith.negf %619 : vector<8x16xf32>
    %621 = math.exp %620 : vector<8x16xf32>
    %cst_159 = arith.constant 1.000000e+00 : f32
    %622 = vector.broadcast %cst_159 : f32 to vector<8x16xf32>
    %623 = arith.addf %622, %621 : vector<8x16xf32>
    %624 = arith.divf %622, %623 : vector<8x16xf32>
    %625 = vector.extract_strided_slice %613 {offsets = [0, 16], sizes = [8, 16], strides = [1, 1]} : vector<8x48xf32> to vector<8x16xf32>
    %626 = vector.extract_strided_slice %610 {offsets = [0, 16], sizes = [8, 16], strides = [1, 1]} : vector<8x96xf32> to vector<8x16xf32>
    %627 = arith.addf %625, %626 : vector<8x16xf32>
    %628 = arith.negf %627 : vector<8x16xf32>
    %629 = math.exp %628 : vector<8x16xf32>
    %cst_160 = arith.constant 1.000000e+00 : f32
    %630 = vector.broadcast %cst_160 : f32 to vector<8x16xf32>
    %631 = arith.addf %630, %629 : vector<8x16xf32>
    %632 = arith.divf %630, %631 : vector<8x16xf32>
    %633 = vector.extract_strided_slice %613 {offsets = [0, 32], sizes = [8, 16], strides = [1, 1]} : vector<8x48xf32> to vector<8x16xf32>
    %634 = vector.extract_strided_slice %610 {offsets = [0, 32], sizes = [8, 16], strides = [1, 1]} : vector<8x96xf32> to vector<8x16xf32>
    %635 = vector.broadcast %23 : vector<1x16xf32> to vector<8x16xf32>
    %636 = arith.addf %634, %635 : vector<8x16xf32>
    %637 = arith.mulf %624, %636 : vector<8x16xf32>
    %638 = arith.addf %633, %637 : vector<8x16xf32>
    %639 = math.tanh %638 : vector<8x16xf32>
    %cst_161 = arith.constant 1.000000e+00 : f32
    %640 = vector.broadcast %cst_161 : f32 to vector<8x16xf32>
    %641 = arith.subf %640, %632 : vector<8x16xf32>
    %642 = arith.mulf %641, %639 : vector<8x16xf32>
    %643 = arith.mulf %632, %554 : vector<8x16xf32>
    %644 = arith.addf %642, %643 : vector<8x16xf32>
    %645 = vector.broadcast %616 : vector<8x1xf32> to vector<8x16xf32>
    %646 = arith.mulf %645, %644 : vector<8x16xf32>
    %cst_162 = arith.constant 1.000000e+00 : f32
    %647 = vector.broadcast %cst_162 : f32 to vector<8x1xf32>
    %648 = arith.subf %647, %616 : vector<8x1xf32>
    %649 = vector.broadcast %648 : vector<8x1xf32> to vector<8x16xf32>
    %650 = arith.mulf %649, %554 : vector<8x16xf32>
    %651 = arith.addf %646, %650 : vector<8x16xf32>
    %652 = vector.broadcast %616 : vector<8x1xf32> to vector<8x16xf32>
    %653 = arith.mulf %651, %652 : vector<8x16xf32>
    %654 = arith.index_cast %c6_i32 : i32 to index
    %c0_163 = arith.constant 0 : index
    %c0_164 = arith.constant 0 : index
    %655 = vector.load %arg18[%654, %c0_163, %c0_164] : memref<8x8x16xf32, #tpu.memory_space<vmem>>, vector<1x8x16xf32>
    %656 = vector.shape_cast %655 : vector<1x8x16xf32> to vector<8x16xf32>
    %657 = vector.shape_cast %653 : vector<8x16xf32> to vector<1x8x16xf32>
    tpu.vector_store %arg18[%654, %c0_163, %c0_164], %657 {strides = array<i32>} : memref<8x8x16xf32, #tpu.memory_space<vmem>>, vector<1x8x16xf32>,
    %658 = arith.index_cast %608 : i32 to index
    %c0_165 = arith.constant 0 : index
    %c0_166 = arith.constant 0 : index
    %659 = vector.load %arg17[%658, %c0_165, %c0_166] : memref<8x8x48xf32, #tpu.memory_space<vmem>>, vector<1x8x48xf32>
    %660 = vector.shape_cast %659 : vector<1x8x48xf32> to vector<8x48xf32>
    %661 = arith.index_cast %608 : i32 to index
    %c0_167 = arith.constant 0 : index
    %c0_168 = arith.constant 0 : index
    %662 = vector.load %arg20[%661, %c0_167, %c0_168] : memref<8x8x1xf32, #tpu.memory_space<vmem>>, vector<1x8x1xf32>
    %663 = vector.shape_cast %662 : vector<1x8x1xf32> to vector<8x1xf32>
    %664 = vector.extract_strided_slice %660 {offsets = [0, 0], sizes = [8, 16], strides = [1, 1]} : vector<8x48xf32> to vector<8x16xf32>
    %665 = vector.extract_strided_slice %610 {offsets = [0, 48], sizes = [8, 16], strides = [1, 1]} : vector<8x96xf32> to vector<8x16xf32>
    %666 = arith.addf %664, %665 : vector<8x16xf32>
    %667 = arith.negf %666 : vector<8x16xf32>
    %668 = math.exp %667 : vector<8x16xf32>
    %cst_169 = arith.constant 1.000000e+00 : f32
    %669 = vector.broadcast %cst_169 : f32 to vector<8x16xf32>
    %670 = arith.addf %669, %668 : vector<8x16xf32>
    %671 = arith.divf %669, %670 : vector<8x16xf32>
    %672 = vector.extract_strided_slice %660 {offsets = [0, 16], sizes = [8, 16], strides = [1, 1]} : vector<8x48xf32> to vector<8x16xf32>
    %673 = vector.extract_strided_slice %610 {offsets = [0, 64], sizes = [8, 16], strides = [1, 1]} : vector<8x96xf32> to vector<8x16xf32>
    %674 = arith.addf %672, %673 : vector<8x16xf32>
    %675 = arith.negf %674 : vector<8x16xf32>
    %676 = math.exp %675 : vector<8x16xf32>
    %cst_170 = arith.constant 1.000000e+00 : f32
    %677 = vector.broadcast %cst_170 : f32 to vector<8x16xf32>
    %678 = arith.addf %677, %676 : vector<8x16xf32>
    %679 = arith.divf %677, %678 : vector<8x16xf32>
    %680 = vector.extract_strided_slice %660 {offsets = [0, 32], sizes = [8, 16], strides = [1, 1]} : vector<8x48xf32> to vector<8x16xf32>
    %681 = vector.extract_strided_slice %610 {offsets = [0, 80], sizes = [8, 16], strides = [1, 1]} : vector<8x96xf32> to vector<8x16xf32>
    %682 = vector.broadcast %24 : vector<1x16xf32> to vector<8x16xf32>
    %683 = arith.addf %681, %682 : vector<8x16xf32>
    %684 = arith.mulf %671, %683 : vector<8x16xf32>
    %685 = arith.addf %680, %684 : vector<8x16xf32>
    %686 = math.tanh %685 : vector<8x16xf32>
    %cst_171 = arith.constant 1.000000e+00 : f32
    %687 = vector.broadcast %cst_171 : f32 to vector<8x16xf32>
    %688 = arith.subf %687, %679 : vector<8x16xf32>
    %689 = arith.mulf %688, %686 : vector<8x16xf32>
    %690 = arith.mulf %679, %601 : vector<8x16xf32>
    %691 = arith.addf %689, %690 : vector<8x16xf32>
    %692 = vector.broadcast %663 : vector<8x1xf32> to vector<8x16xf32>
    %693 = arith.mulf %692, %691 : vector<8x16xf32>
    %cst_172 = arith.constant 1.000000e+00 : f32
    %694 = vector.broadcast %cst_172 : f32 to vector<8x1xf32>
    %695 = arith.subf %694, %663 : vector<8x1xf32>
    %696 = vector.broadcast %695 : vector<8x1xf32> to vector<8x16xf32>
    %697 = arith.mulf %696, %601 : vector<8x16xf32>
    %698 = arith.addf %693, %697 : vector<8x16xf32>
    %699 = vector.broadcast %663 : vector<8x1xf32> to vector<8x16xf32>
    %700 = arith.mulf %698, %699 : vector<8x16xf32>
    %701 = arith.index_cast %608 : i32 to index
    %c0_173 = arith.constant 0 : index
    %c0_174 = arith.constant 0 : index
    %702 = vector.load %arg19[%701, %c0_173, %c0_174] : memref<8x8x16xf32, #tpu.memory_space<vmem>>, vector<1x8x16xf32>
    %703 = vector.shape_cast %702 : vector<1x8x16xf32> to vector<8x16xf32>
    %704 = vector.shape_cast %700 : vector<8x16xf32> to vector<1x8x16xf32>
    tpu.vector_store %arg19[%701, %c0_173, %c0_174], %704 {strides = array<i32>} : memref<8x8x16xf32, #tpu.memory_space<vmem>>, vector<1x8x16xf32>,
    %c7_i32_175 = arith.constant 7 : i32
    %c7_i32_176 = arith.constant 7 : i32
    %705 = arith.subi %c7_i32_176, %c7_i32_175 : i32
    %706 = tpu.concatenate %651, %698 in 1 : vector<8x16xf32>, vector<8x16xf32> -> vector<8x32xf32>
    %cst_177 = arith.constant dense<0.000000e+00> : vector<8x96xf32>
    %707 = tpu.matmul %706, %21, %cst_177 {dimension_numbers = #tpu.dot_dimension_numbers<[1], [0], [0], [1], [0, 0, 1, 1], [], []>} : vector<8x32xf32>, vector<32x96xf32>, vector<8x96xf32> -> vector<8x96xf32>
    %708 = arith.index_cast %c7_i32_175 : i32 to index
    %c0_178 = arith.constant 0 : index
    %c0_179 = arith.constant 0 : index
    %709 = vector.load %arg16[%708, %c0_178, %c0_179] : memref<8x8x48xf32, #tpu.memory_space<vmem>>, vector<1x8x48xf32>
    %710 = vector.shape_cast %709 : vector<1x8x48xf32> to vector<8x48xf32>
    %711 = arith.index_cast %c7_i32_175 : i32 to index
    %c0_180 = arith.constant 0 : index
    %c0_181 = arith.constant 0 : index
    %712 = vector.load %arg20[%711, %c0_180, %c0_181] : memref<8x8x1xf32, #tpu.memory_space<vmem>>, vector<1x8x1xf32>
    %713 = vector.shape_cast %712 : vector<1x8x1xf32> to vector<8x1xf32>
    %714 = vector.extract_strided_slice %710 {offsets = [0, 0], sizes = [8, 16], strides = [1, 1]} : vector<8x48xf32> to vector<8x16xf32>
    %715 = vector.extract_strided_slice %707 {offsets = [0, 0], sizes = [8, 16], strides = [1, 1]} : vector<8x96xf32> to vector<8x16xf32>
    %716 = arith.addf %714, %715 : vector<8x16xf32>
    %717 = arith.negf %716 : vector<8x16xf32>
    %718 = math.exp %717 : vector<8x16xf32>
    %cst_182 = arith.constant 1.000000e+00 : f32
    %719 = vector.broadcast %cst_182 : f32 to vector<8x16xf32>
    %720 = arith.addf %719, %718 : vector<8x16xf32>
    %721 = arith.divf %719, %720 : vector<8x16xf32>
    %722 = vector.extract_strided_slice %710 {offsets = [0, 16], sizes = [8, 16], strides = [1, 1]} : vector<8x48xf32> to vector<8x16xf32>
    %723 = vector.extract_strided_slice %707 {offsets = [0, 16], sizes = [8, 16], strides = [1, 1]} : vector<8x96xf32> to vector<8x16xf32>
    %724 = arith.addf %722, %723 : vector<8x16xf32>
    %725 = arith.negf %724 : vector<8x16xf32>
    %726 = math.exp %725 : vector<8x16xf32>
    %cst_183 = arith.constant 1.000000e+00 : f32
    %727 = vector.broadcast %cst_183 : f32 to vector<8x16xf32>
    %728 = arith.addf %727, %726 : vector<8x16xf32>
    %729 = arith.divf %727, %728 : vector<8x16xf32>
    %730 = vector.extract_strided_slice %710 {offsets = [0, 32], sizes = [8, 16], strides = [1, 1]} : vector<8x48xf32> to vector<8x16xf32>
    %731 = vector.extract_strided_slice %707 {offsets = [0, 32], sizes = [8, 16], strides = [1, 1]} : vector<8x96xf32> to vector<8x16xf32>
    %732 = vector.broadcast %23 : vector<1x16xf32> to vector<8x16xf32>
    %733 = arith.addf %731, %732 : vector<8x16xf32>
    %734 = arith.mulf %721, %733 : vector<8x16xf32>
    %735 = arith.addf %730, %734 : vector<8x16xf32>
    %736 = math.tanh %735 : vector<8x16xf32>
    %cst_184 = arith.constant 1.000000e+00 : f32
    %737 = vector.broadcast %cst_184 : f32 to vector<8x16xf32>
    %738 = arith.subf %737, %729 : vector<8x16xf32>
    %739 = arith.mulf %738, %736 : vector<8x16xf32>
    %740 = arith.mulf %729, %651 : vector<8x16xf32>
    %741 = arith.addf %739, %740 : vector<8x16xf32>
    %742 = vector.broadcast %713 : vector<8x1xf32> to vector<8x16xf32>
    %743 = arith.mulf %742, %741 : vector<8x16xf32>
    %cst_185 = arith.constant 1.000000e+00 : f32
    %744 = vector.broadcast %cst_185 : f32 to vector<8x1xf32>
    %745 = arith.subf %744, %713 : vector<8x1xf32>
    %746 = vector.broadcast %745 : vector<8x1xf32> to vector<8x16xf32>
    %747 = arith.mulf %746, %651 : vector<8x16xf32>
    %748 = arith.addf %743, %747 : vector<8x16xf32>
    %749 = vector.broadcast %713 : vector<8x1xf32> to vector<8x16xf32>
    %750 = arith.mulf %748, %749 : vector<8x16xf32>
    %751 = arith.index_cast %c7_i32_175 : i32 to index
    %c0_186 = arith.constant 0 : index
    %c0_187 = arith.constant 0 : index
    %752 = vector.load %arg18[%751, %c0_186, %c0_187] : memref<8x8x16xf32, #tpu.memory_space<vmem>>, vector<1x8x16xf32>
    %753 = vector.shape_cast %752 : vector<1x8x16xf32> to vector<8x16xf32>
    %754 = vector.shape_cast %750 : vector<8x16xf32> to vector<1x8x16xf32>
    tpu.vector_store %arg18[%751, %c0_186, %c0_187], %754 {strides = array<i32>} : memref<8x8x16xf32, #tpu.memory_space<vmem>>, vector<1x8x16xf32>,
    %755 = arith.index_cast %705 : i32 to index
    %c0_188 = arith.constant 0 : index
    %c0_189 = arith.constant 0 : index
    %756 = vector.load %arg17[%755, %c0_188, %c0_189] : memref<8x8x48xf32, #tpu.memory_space<vmem>>, vector<1x8x48xf32>
    %757 = vector.shape_cast %756 : vector<1x8x48xf32> to vector<8x48xf32>
    %758 = arith.index_cast %705 : i32 to index
    %c0_190 = arith.constant 0 : index
    %c0_191 = arith.constant 0 : index
    %759 = vector.load %arg20[%758, %c0_190, %c0_191] : memref<8x8x1xf32, #tpu.memory_space<vmem>>, vector<1x8x1xf32>
    %760 = vector.shape_cast %759 : vector<1x8x1xf32> to vector<8x1xf32>
    %761 = vector.extract_strided_slice %757 {offsets = [0, 0], sizes = [8, 16], strides = [1, 1]} : vector<8x48xf32> to vector<8x16xf32>
    %762 = vector.extract_strided_slice %707 {offsets = [0, 48], sizes = [8, 16], strides = [1, 1]} : vector<8x96xf32> to vector<8x16xf32>
    %763 = arith.addf %761, %762 : vector<8x16xf32>
    %764 = arith.negf %763 : vector<8x16xf32>
    %765 = math.exp %764 : vector<8x16xf32>
    %cst_192 = arith.constant 1.000000e+00 : f32
    %766 = vector.broadcast %cst_192 : f32 to vector<8x16xf32>
    %767 = arith.addf %766, %765 : vector<8x16xf32>
    %768 = arith.divf %766, %767 : vector<8x16xf32>
    %769 = vector.extract_strided_slice %757 {offsets = [0, 16], sizes = [8, 16], strides = [1, 1]} : vector<8x48xf32> to vector<8x16xf32>
    %770 = vector.extract_strided_slice %707 {offsets = [0, 64], sizes = [8, 16], strides = [1, 1]} : vector<8x96xf32> to vector<8x16xf32>
    %771 = arith.addf %769, %770 : vector<8x16xf32>
    %772 = arith.negf %771 : vector<8x16xf32>
    %773 = math.exp %772 : vector<8x16xf32>
    %cst_193 = arith.constant 1.000000e+00 : f32
    %774 = vector.broadcast %cst_193 : f32 to vector<8x16xf32>
    %775 = arith.addf %774, %773 : vector<8x16xf32>
    %776 = arith.divf %774, %775 : vector<8x16xf32>
    %777 = vector.extract_strided_slice %757 {offsets = [0, 32], sizes = [8, 16], strides = [1, 1]} : vector<8x48xf32> to vector<8x16xf32>
    %778 = vector.extract_strided_slice %707 {offsets = [0, 80], sizes = [8, 16], strides = [1, 1]} : vector<8x96xf32> to vector<8x16xf32>
    %779 = vector.broadcast %24 : vector<1x16xf32> to vector<8x16xf32>
    %780 = arith.addf %778, %779 : vector<8x16xf32>
    %781 = arith.mulf %768, %780 : vector<8x16xf32>
    %782 = arith.addf %777, %781 : vector<8x16xf32>
    %783 = math.tanh %782 : vector<8x16xf32>
    %cst_194 = arith.constant 1.000000e+00 : f32
    %784 = vector.broadcast %cst_194 : f32 to vector<8x16xf32>
    %785 = arith.subf %784, %776 : vector<8x16xf32>
    %786 = arith.mulf %785, %783 : vector<8x16xf32>
    %787 = arith.mulf %776, %698 : vector<8x16xf32>
    %788 = arith.addf %786, %787 : vector<8x16xf32>
    %789 = vector.broadcast %760 : vector<8x1xf32> to vector<8x16xf32>
    %790 = arith.mulf %789, %788 : vector<8x16xf32>
    %cst_195 = arith.constant 1.000000e+00 : f32
    %791 = vector.broadcast %cst_195 : f32 to vector<8x1xf32>
    %792 = arith.subf %791, %760 : vector<8x1xf32>
    %793 = vector.broadcast %792 : vector<8x1xf32> to vector<8x16xf32>
    %794 = arith.mulf %793, %698 : vector<8x16xf32>
    %795 = arith.addf %790, %794 : vector<8x16xf32>
    %796 = vector.broadcast %760 : vector<8x1xf32> to vector<8x16xf32>
    %797 = arith.mulf %795, %796 : vector<8x16xf32>
    %798 = arith.index_cast %705 : i32 to index
    %c0_196 = arith.constant 0 : index
    %c0_197 = arith.constant 0 : index
    %799 = vector.load %arg19[%798, %c0_196, %c0_197] : memref<8x8x16xf32, #tpu.memory_space<vmem>>, vector<1x8x16xf32>
    %800 = vector.shape_cast %799 : vector<1x8x16xf32> to vector<8x16xf32>
    %801 = vector.shape_cast %797 : vector<8x16xf32> to vector<1x8x16xf32>
    tpu.vector_store %arg19[%798, %c0_196, %c0_197], %801 {strides = array<i32>} : memref<8x8x16xf32, #tpu.memory_space<vmem>>, vector<1x8x16xf32>,
    %c8_i32 = arith.constant 8 : i32
    %c0_198 = arith.constant 0 : index
    %c0_199 = arith.constant 0 : index
    %c0_200 = arith.constant 0 : index
    %802 = vector.load %arg18[%c0_198, %c0_199, %c0_200] : memref<8x8x16xf32, #tpu.memory_space<vmem>>, vector<8x8x16xf32>
    %c0_201 = arith.constant 0 : index
    %c0_202 = arith.constant 0 : index
    %c0_203 = arith.constant 0 : index
    %803 = vector.load %arg19[%c0_201, %c0_202, %c0_203] : memref<8x8x16xf32, #tpu.memory_space<vmem>>, vector<8x8x16xf32>
    %804 = tpu.concatenate %802, %803 in 2 : vector<8x8x16xf32>, vector<8x8x16xf32> -> vector<8x8x32xf32>
    %805 = vector.shape_cast %804 : vector<8x8x32xf32> to vector<64x32xf32>
    %c0_204 = arith.constant 0 : index
    %c0_205 = arith.constant 0 : index
    %806 = vector.load %arg7[%c0_204, %c0_205] : memref<32x32xf32, #tpu.memory_space<vmem>>, vector<32x32xf32>
    %cst_206 = arith.constant dense<0.000000e+00> : vector<64x32xf32>
    %807 = tpu.matmul %805, %806, %cst_206 {dimension_numbers = #tpu.dot_dimension_numbers<[1], [0], [0], [1], [0, 0, 1, 1], [], []>} : vector<64x32xf32>, vector<32x32xf32>, vector<64x32xf32> -> vector<64x32xf32>
    %c0_207 = arith.constant 0 : index
    %c0_208 = arith.constant 0 : index
    %808 = vector.load %arg8[%c0_207, %c0_208] : memref<1x32xf32, #tpu.memory_space<vmem>>, vector<1x32xf32>
    %809 = vector.broadcast %808 : vector<1x32xf32> to vector<64x32xf32>
    %810 = arith.addf %807, %809 : vector<64x32xf32>
    %811 = math.tanh %810 : vector<64x32xf32>
    %c0_209 = arith.constant 0 : index
    %c0_210 = arith.constant 0 : index
    %812 = vector.load %arg9[%c0_209, %c0_210] : memref<32x1xf32, #tpu.memory_space<vmem>>, vector<32x1xf32>
    %cst_211 = arith.constant dense<0.000000e+00> : vector<64x1xf32>
    %813 = tpu.matmul %811, %812, %cst_211 {dimension_numbers = #tpu.dot_dimension_numbers<[1], [0], [0], [1], [0, 0, 1, 1], [], []>} : vector<64x32xf32>, vector<32x1xf32>, vector<64x1xf32> -> vector<64x1xf32>
    %814 = vector.shape_cast %813 : vector<64x1xf32> to vector<8x8x1xf32>
    %c0_212 = arith.constant 0 : index
    %c0_213 = arith.constant 0 : index
    %c0_214 = arith.constant 0 : index
    %815 = vector.load %arg20[%c0_212, %c0_213, %c0_214] : memref<8x8x1xf32, #tpu.memory_space<vmem>>, vector<8x8x1xf32>
    %cst_215 = arith.constant 5.000000e-01 : f32
    %816 = vector.broadcast %cst_215 : f32 to vector<8x8x1xf32>
    %817 = arith.cmpf ogt, %815, %816 : vector<8x8x1xf32>
    %cst_216 = arith.constant -1.000000e+30 : f32
    %818 = vector.broadcast %cst_216 : f32 to vector<8x8x1xf32>
    %819 = arith.select %817, %814, %818 : vector<8x8x1xi1>, vector<8x8x1xf32>
    %cst_217 = arith.constant dense<0xFF800000> : vector<8x1xf32>
    %820 = vector.multi_reduction <maximumf>, %819, %cst_217 [0] : vector<8x8x1xf32> to vector<8x1xf32>
    %821 = vector.shape_cast %820 : vector<8x1xf32> to vector<1x8x1xf32>
    %822 = vector.broadcast %821 : vector<1x8x1xf32> to vector<8x8x1xf32>
    %823 = arith.subf %814, %822 : vector<8x8x1xf32>
    %cst_218 = arith.constant 0.000000e+00 : f32
    %824 = vector.broadcast %cst_218 : f32 to vector<8x8x1xf32>
    %825 = arith.minimumf %823, %824 : vector<8x8x1xf32>
    %826 = math.exp %825 : vector<8x8x1xf32>
    %827 = arith.mulf %826, %815 : vector<8x8x1xf32>
    %cst_219 = arith.constant dense<0.000000e+00> : vector<8x1xf32>
    %828 = vector.multi_reduction <add>, %827, %cst_219 [0] : vector<8x8x1xf32> to vector<8x1xf32>
    %829 = vector.shape_cast %828 : vector<8x1xf32> to vector<1x8x1xf32>
    %830 = vector.broadcast %829 : vector<1x8x1xf32> to vector<8x8x1xf32>
    %831 = arith.divf %827, %830 : vector<8x8x1xf32>
    %c0_220 = arith.constant 0 : index
    %c0_221 = arith.constant 0 : index
    %c0_222 = arith.constant 0 : index
    %832 = vector.load %arg15[%c0_220, %c0_221, %c0_222] : memref<8x8x1xf32, #tpu.memory_space<vmem>>, vector<8x8x1xf32>
    tpu.vector_store %arg15[%c0_220, %c0_221, %c0_222], %831 {strides = array<i32>} : memref<8x8x1xf32, #tpu.memory_space<vmem>>, vector<8x8x1xf32>,
    %833 = vector.broadcast %831 : vector<8x8x1xf32> to vector<8x8x32xf32>
    %834 = arith.mulf %804, %833 : vector<8x8x32xf32>
    %cst_223 = arith.constant dense<0.000000e+00> : vector<8x32xf32>
    %835 = vector.multi_reduction <add>, %834, %cst_223 [0] : vector<8x8x32xf32> to vector<8x32xf32>
    %c0_224 = arith.constant 0 : index
    %c0_225 = arith.constant 0 : index
    %836 = vector.load %arg10[%c0_224, %c0_225] : memref<32x64xf32, #tpu.memory_space<vmem>>, vector<32x64xf32>
    %cst_226 = arith.constant dense<0.000000e+00> : vector<8x64xf32>
    %837 = tpu.matmul %835, %836, %cst_226 {dimension_numbers = #tpu.dot_dimension_numbers<[1], [0], [0], [1], [0, 0, 1, 1], [], []>} : vector<8x32xf32>, vector<32x64xf32>, vector<8x64xf32> -> vector<8x64xf32>
    %c0_227 = arith.constant 0 : index
    %c0_228 = arith.constant 0 : index
    %838 = vector.load %arg11[%c0_227, %c0_228] : memref<1x64xf32, #tpu.memory_space<vmem>>, vector<1x64xf32>
    %839 = vector.broadcast %838 : vector<1x64xf32> to vector<8x64xf32>
    %840 = arith.addf %837, %839 : vector<8x64xf32>
    %c0_229 = arith.constant 0 : index
    %c0_230 = arith.constant 0 : index
    %841 = vector.load %arg12[%c0_229, %c0_230] : memref<64x2xf32, #tpu.memory_space<vmem>>, vector<64x2xf32>
    %cst_231 = arith.constant dense<0.000000e+00> : vector<8x2xf32>
    %842 = tpu.matmul %840, %841, %cst_231 {dimension_numbers = #tpu.dot_dimension_numbers<[1], [0], [0], [1], [0, 0, 1, 1], [], []>} : vector<8x64xf32>, vector<64x2xf32>, vector<8x2xf32> -> vector<8x2xf32>
    %c0_232 = arith.constant 0 : index
    %c0_233 = arith.constant 0 : index
    %843 = vector.load %arg13[%c0_232, %c0_233] : memref<1x2xf32, #tpu.memory_space<vmem>>, vector<1x2xf32>
    %844 = vector.broadcast %843 : vector<1x2xf32> to vector<8x2xf32>
    %845 = arith.addf %842, %844 : vector<8x2xf32>
    %c0_234 = arith.constant 0 : index
    %c0_235 = arith.constant 0 : index
    %846 = vector.load %arg14[%c0_234, %c0_235] : memref<8x2xf32, #tpu.memory_space<vmem>>, vector<8x2xf32>
    tpu.vector_store %arg14[%c0_234, %c0_235], %845 {strides = array<i32>} : memref<8x2xf32, #tpu.memory_space<vmem>>, vector<8x2xf32>,
    return
  }
  func.func @transform_0(%arg0: i32) -> (i32, i32, i32) {
    %c0_i32 = arith.constant 0 : i32
    %c0_i32_0 = arith.constant 0 : i32
    %c0_i32_1 = arith.constant 0 : i32
    return %c0_i32, %arg0, %c0_i32_0 : i32, i32, i32
  }
  func.func @transform_1(%arg0: i32) -> (i32, i32) {
    %c0_i32 = arith.constant 0 : i32
    %c0_i32_0 = arith.constant 0 : i32
    return %arg0, %c0_i32 : i32, i32
  }
  func.func @transform_2(%arg0: i32) -> (i32, i32) {
    %c0_i32 = arith.constant 0 : i32
    %c0_i32_0 = arith.constant 0 : i32
    %c0_i32_1 = arith.constant 0 : i32
    return %c0_i32, %c0_i32_0 : i32, i32
  }
  func.func @transform_3(%arg0: i32) -> (i32, i32) {
    %c0_i32 = arith.constant 0 : i32
    %c0_i32_0 = arith.constant 0 : i32
    %c0_i32_1 = arith.constant 0 : i32
    return %c0_i32, %c0_i32_0 : i32, i32
  }
  func.func @transform_4(%arg0: i32) -> (i32, i32) {
    %c0_i32 = arith.constant 0 : i32
    %c0_i32_0 = arith.constant 0 : i32
    %c0_i32_1 = arith.constant 0 : i32
    return %c0_i32, %c0_i32_0 : i32, i32
  }
  func.func @transform_5(%arg0: i32) -> (i32, i32) {
    %c0_i32 = arith.constant 0 : i32
    %c0_i32_0 = arith.constant 0 : i32
    %c0_i32_1 = arith.constant 0 : i32
    return %c0_i32, %c0_i32_0 : i32, i32
  }
  func.func @transform_6(%arg0: i32) -> (i32, i32) {
    %c0_i32 = arith.constant 0 : i32
    %c0_i32_0 = arith.constant 0 : i32
    %c0_i32_1 = arith.constant 0 : i32
    return %c0_i32, %c0_i32_0 : i32, i32
  }
  func.func @transform_7(%arg0: i32) -> (i32, i32) {
    %c0_i32 = arith.constant 0 : i32
    %c0_i32_0 = arith.constant 0 : i32
    %c0_i32_1 = arith.constant 0 : i32
    return %c0_i32, %c0_i32_0 : i32, i32
  }
  func.func @transform_8(%arg0: i32) -> (i32, i32) {
    %c0_i32 = arith.constant 0 : i32
    %c0_i32_0 = arith.constant 0 : i32
    %c0_i32_1 = arith.constant 0 : i32
    return %c0_i32, %c0_i32_0 : i32, i32
  }
  func.func @transform_9(%arg0: i32) -> (i32, i32) {
    %c0_i32 = arith.constant 0 : i32
    %c0_i32_0 = arith.constant 0 : i32
    %c0_i32_1 = arith.constant 0 : i32
    return %c0_i32, %c0_i32_0 : i32, i32
  }
  func.func @transform_10(%arg0: i32) -> (i32, i32) {
    %c0_i32 = arith.constant 0 : i32
    %c0_i32_0 = arith.constant 0 : i32
    %c0_i32_1 = arith.constant 0 : i32
    return %c0_i32, %c0_i32_0 : i32, i32
  }
  func.func @transform_11(%arg0: i32) -> (i32, i32) {
    %c0_i32 = arith.constant 0 : i32
    %c0_i32_0 = arith.constant 0 : i32
    %c0_i32_1 = arith.constant 0 : i32
    return %c0_i32, %c0_i32_0 : i32, i32
  }
  func.func @transform_12(%arg0: i32) -> (i32, i32) {
    %c0_i32 = arith.constant 0 : i32
    %c0_i32_0 = arith.constant 0 : i32
    %c0_i32_1 = arith.constant 0 : i32
    return %c0_i32, %c0_i32_0 : i32, i32
  }
  func.func @transform_13(%arg0: i32) -> (i32, i32) {
    %c0_i32 = arith.constant 0 : i32
    %c0_i32_0 = arith.constant 0 : i32
    return %arg0, %c0_i32 : i32, i32
  }
  func.func @transform_14(%arg0: i32) -> (i32, i32, i32) {
    %c0_i32 = arith.constant 0 : i32
    %c0_i32_0 = arith.constant 0 : i32
    %c0_i32_1 = arith.constant 0 : i32
    return %c0_i32, %arg0, %c0_i32_0 : i32, i32, i32
  }
}

</mosaic_0001>

<llo_original>
// kernel: word_attention_forward.1
$region0: #{word_attention_forward.1}
  #allocation0 [shape = 'u32[]', space=smem, size = 0x4, offset = 0x4, fixed_abs, tag = 'smem constant byte address 0x4 - core index']
  #allocation1 [shape = 'u32[72,128]{1,0:T(1,128)}', space=vmem, size = 0x9000, scoped, tag = 'internal scratch']
  #allocation2 [shape = 'f32[8,8,48]{2,1,0:T(8,128)}', space=vmem, size = 0x8000, scoped, tag = 'scratch operand']
  #allocation3 [shape = 'f32[8,8,48]{2,1,0:T(8,128)}', space=vmem, size = 0x8000, scoped, tag = 'scratch operand']
  #allocation4 [shape = 'f32[8,8,16]{2,1,0:T(8,128)}', space=vmem, size = 0x8000, scoped, tag = 'scratch operand']
  #allocation5 [shape = 'f32[8,8,16]{2,1,0:T(8,128)}', space=vmem, size = 0x8000, scoped, tag = 'scratch operand']
  #allocation6 [shape = 'f32[8,8,1]{2,1,0:T(8,128)}', space=vmem, size = 0x8000, scoped, tag = 'scratch operand']
  %s0 = inlined_call_operand.vmem [shape: f32[8,16,32], index: 0, kind: input, shape index: {}]
  %s1 = inlined_call_operand.vmem [shape: s32[16,1], index: 1, kind: input, shape index: {}]
  %s2 = inlined_call_operand.vmem [shape: f32[32,96], index: 2, kind: input, shape index: {}]
  %s3 = inlined_call_operand.vmem [shape: f32[1,96], index: 3, kind: input, shape index: {}]
  %s4 = inlined_call_operand.vmem [shape: f32[32,96], index: 4, kind: input, shape index: {}]
  %s5 = inlined_call_operand.vmem [shape: f32[1,32], index: 5, kind: input, shape index: {}]
  %s6 = inlined_call_operand.vmem [shape: f32[32,32], index: 6, kind: input, shape index: {}]
  %s7 = inlined_call_operand.vmem [shape: f32[1,32], index: 7, kind: input, shape index: {}]
  %s8 = inlined_call_operand.vmem [shape: f32[32,1], index: 8, kind: input, shape index: {}]
  %s9 = inlined_call_operand.vmem [shape: f32[32,64], index: 9, kind: input, shape index: {}]
  %s10 = inlined_call_operand.vmem [shape: f32[1,64], index: 10, kind: input, shape index: {}]
  %s11 = inlined_call_operand.vmem [shape: f32[64,2], index: 11, kind: input, shape index: {}]
  %s12 = inlined_call_operand.vmem [shape: f32[1,2], index: 12, kind: input, shape index: {}]
  %s13 = inlined_call_operand.vmem [shape: f32[16,2], index: 13, kind: output, shape index: {0}]
  %s14 = inlined_call_operand.vmem [shape: f32[8,16,1], index: 14, kind: output, shape index: {1}]
  %15 = xla_tuple %s13, %s14
  %s16 = sld [smem:[#allocation0]]
  $region165: #{word_attention_forward.1} parent=0
    _
  %s18 = ssub.s32 1, %s16
  %s19 = scalar_select 0, %s18, %s16
  $region1: #{word_attention_forward.1} parent=0
    #allocation7 [shape = 'u8[65536]{0}', space=vmem, size = 0x10000, scoped, tag = 'input window, operand 0']
    #allocation8 [shape = 'u8[65536]{0}', space=vmem, size = 0x10000, scoped, tag = 'output window, operand 1']
    loop: start=0, step=1, limit=4
    $region2: #{word_attention_forward.1} parent=1 // loop_pre_header
      _
    $region3: #{word_attention_forward.1} parent=1 // loop_header
      %s21 = sphi 0, %s25
      %p22 = scmp.ge.s32.totalorder %s21, 4
      %s31 = sphi 0, %s33
      %s34 = sphi 0, %s31
      %s35 = sphi 0, %s34
      %s51 = sphi 0, %s35
      %s57 = sphi 0, %s59
      %s60 = sphi 0, %s57
      %s61 = sphi 0, %s60
      %s77 = sphi 0, %s61
      %s81 = sphi 0, %s81
      %s83 = sphi 0, %s81
      %s84 = sphi 0, %s83
      %s98 = sphi 0, %s84
      %s102 = sphi 0, %s102
      %s104 = sphi 0, %s102
      %s105 = sphi 0, %s104
      %s119 = sphi 0, %s105
      %s123 = sphi 0, %s123
      %s125 = sphi 0, %s123
      %s126 = sphi 0, %s125
      %s140 = sphi 0, %s126
      %s144 = sphi 0, %s144
      %s146 = sphi 0, %s144
      %s147 = sphi 0, %s146
      %s161 = sphi 0, %s147
      %s165 = sphi 0, %s165
      %s167 = sphi 0, %s165
      %s168 = sphi 0, %s167
      %s182 = sphi 0, %s168
      %s186 = sphi 0, %s186
      %s188 = sphi 0, %s186
      %s189 = sphi 0, %s188
      %s203 = sphi 0, %s189
      %s207 = sphi 0, %s207
      %s209 = sphi 0, %s207
      %s210 = sphi 0, %s209
      %s224 = sphi 0, %s210
      %s228 = sphi 0, %s228
      %s230 = sphi 0, %s228
      %s231 = sphi 0, %s230
      %s245 = sphi 0, %s231
      %s249 = sphi 0, %s249
      %s251 = sphi 0, %s249
      %s252 = sphi 0, %s251
      %s266 = sphi 0, %s252
      %s270 = sphi 0, %s270
      %s272 = sphi 0, %s270
      %s273 = sphi 0, %s272
      %s287 = sphi 0, %s273
      %s291 = sphi 0, %s291
      %s293 = sphi 0, %s291
      %s294 = sphi 0, %s293
      %s308 = sphi 0, %s294
      %s314 = sphi 0, %s316
      %s317 = sphi 0, %s314
      %s318 = sphi 0, %s317
      %s334 = sphi 0, %s318
      %s340 = sphi 0, %s342
      %s343 = sphi 0, %s340
      %s344 = sphi 0, %s343
      %s360 = sphi 0, %s344
    $region4: #{word_attention_forward.1} parent=1 // loop_header_branch
      %24 = sbr.rel (%p22) target = $region8
    $region5: #{word_attention_forward.1} parent=1 // loop_body
      %s26 = ssub.s32 %s21, 1
      %s27 = ssub.s32 %s21, 2
      %s28 = sadd.s32 %s21, 1
      %s29 = ssub.s32 %s21, %s28
      %p30 = scmp.eq.s32.totalorder %s29, 0
      %s32 = sadd.s32 %s31, 1
      %s33 = scalar_select %p30, %s31, %s32
      %p36 = pneg %p30
      %p37 = scmp.eq.s32.totalorder %s21, 1
      %p38 = por %p36, %p37
      %p39 = scmp.ne.s32.totalorder %s31, %s34
      %p40 = scmp.eq.s32.totalorder %s21, 0
      %p41 = por %p39, %p40
      %p42 = scmp.ne.s32.totalorder %s31, %s34
      %p43 = scmp.eq.s32.totalorder %s26, 1
      %p44 = por %p42, %p43
      %p45 = scmp.ne.s32.totalorder %s34, %s35
      %p46 = scmp.eq.s32.totalorder %s26, 0
      %p47 = por %p45, %p46
      %p48 = scmp.ne.s32.totalorder %s34, %s35
      %p49 = scmp.eq.s32.totalorder %s27, 1
      %p50 = por %p48, %p49
      %p52 = scmp.ne.s32.totalorder %s35, %s51
      %p53 = scmp.eq.s32.totalorder %s27, 0
      %p54 = por %p52, %p53
      %s55 = ssub.s32 %s21, %s28
      %p56 = scmp.eq.s32.totalorder %s55, 0
      %s58 = sadd.s32 %s57, 1
      %s59 = scalar_select %p56, %s57, %s58
      %p62 = pneg %p56
      %p63 = scmp.eq.s32.totalorder %s21, 1
      %p64 = por %p62, %p63
      %p65 = scmp.ne.s32.totalorder %s57, %s60
      %p66 = scmp.eq.s32.totalorder %s21, 0
      %p67 = por %p65, %p66
      %p68 = scmp.ne.s32.totalorder %s57, %s60
      %p69 = scmp.eq.s32.totalorder %s26, 1
      %p70 = por %p68, %p69
      %p71 = scmp.ne.s32.totalorder %s60, %s61
      %p72 = scmp.eq.s32.totalorder %s26, 0
      %p73 = por %p71, %p72
      %p74 = scmp.ne.s32.totalorder %s60, %s61
      %p75 = scmp.eq.s32.totalorder %s27, 1
      %p76 = por %p74, %p75
      %p78 = scmp.ne.s32.totalorder %s61, %s77
      %p79 = scmp.eq.s32.totalorder %s27, 0
      %p80 = por %p78, %p79
      %s82 = sadd.s32 %s81, 1
      %p85 = scmp.eq.s32.totalorder %s21, 1
      %p86 = scmp.ne.s32.totalorder %s81, %s83
      %p87 = scmp.eq.s32.totalorder %s21, 0
      %p88 = por %p86, %p87
      %p89 = scmp.ne.s32.totalorder %s81, %s83
      %p90 = scmp.eq.s32.totalorder %s26, 1
      %p91 = por %p89, %p90
      %p92 = scmp.ne.s32.totalorder %s83, %s84
      %p93 = scmp.eq.s32.totalorder %s26, 0
      %p94 = por %p92, %p93
      %p95 = scmp.ne.s32.totalorder %s83, %s84
      %p96 = scmp.eq.s32.totalorder %s27, 1
      %p97 = por %p95, %p96
      %p99 = scmp.ne.s32.totalorder %s84, %s98
      %p100 = scmp.eq.s32.totalorder %s27, 0
      %p101 = por %p99, %p100
      %s103 = sadd.s32 %s102, 1
      %p106 = scmp.eq.s32.totalorder %s21, 1
      %p107 = scmp.ne.s32.totalorder %s102, %s104
      %p108 = scmp.eq.s32.totalorder %s21, 0
      %p109 = por %p107, %p108
      %p110 = scmp.ne.s32.totalorder %s102, %s104
      %p111 = scmp.eq.s32.totalorder %s26, 1
      %p112 = por %p110, %p111
      %p113 = scmp.ne.s32.totalorder %s104, %s105
      %p114 = scmp.eq.s32.totalorder %s26, 0
      %p115 = por %p113, %p114
      %p116 = scmp.ne.s32.totalorder %s104, %s105
      %p117 = scmp.eq.s32.totalorder %s27, 1
      %p118 = por %p116, %p117
      %p120 = scmp.ne.s32.totalorder %s105, %s119
      %p121 = scmp.eq.s32.totalorder %s27, 0
      %p122 = por %p120, %p121
      %s124 = sadd.s32 %s123, 1
      %p127 = scmp.eq.s32.totalorder %s21, 1
      %p128 = scmp.ne.s32.totalorder %s123, %s125
      %p129 = scmp.eq.s32.totalorder %s21, 0
      %p130 = por %p128, %p129
      %p131 = scmp.ne.s32.totalorder %s123, %s125
      %p132 = scmp.eq.s32.totalorder %s26, 1
      %p133 = por %p131, %p132
      %p134 = scmp.ne.s32.totalorder %s125, %s126
      %p135 = scmp.eq.s32.totalorder %s26, 0
      %p136 = por %p134, %p135
      %p137 = scmp.ne.s32.totalorder %s125, %s126
      %p138 = scmp.eq.s32.totalorder %s27, 1
      %p139 = por %p137, %p138
      %p141 = scmp.ne.s32.totalorder %s126, %s140
      %p142 = scmp.eq.s32.totalorder %s27, 0
      %p143 = por %p141, %p142
      %s145 = sadd.s32 %s144, 1
      %p148 = scmp.eq.s32.totalorder %s21, 1
      %p149 = scmp.ne.s32.totalorder %s144, %s146
      %p150 = scmp.eq.s32.totalorder %s21, 0
      %p151 = por %p149, %p150
      %p152 = scmp.ne.s32.totalorder %s144, %s146
      %p153 = scmp.eq.s32.totalorder %s26, 1
      %p154 = por %p152, %p153
      %p155 = scmp.ne.s32.totalorder %s146, %s147
      %p156 = scmp.eq.s32.totalorder %s26, 0
      %p157 = por %p155, %p156
      %p158 = scmp.ne.s32.totalorder %s146, %s147
      %p159 = scmp.eq.s32.totalorder %s27, 1
      %p160 = por %p158, %p159
      %p162 = scmp.ne.s32.totalorder %s147, %s161
      %p163 = scmp.eq.s32.totalorder %s27, 0
      %p164 = por %p162, %p163
      %s166 = sadd.s32 %s165, 1
      %p169 = scmp.eq.s32.totalorder %s21, 1
      %p170 = scmp.ne.s32.totalorder %s165, %s167
      %p171 = scmp.eq.s32.totalorder %s21, 0
      %p172 = por %p170, %p171
      %p173 = scmp.ne.s32.totalorder %s165, %s167
      %p174 = scmp.eq.s32.totalorder %s26, 1
      %p175 = por %p173, %p174
      %p176 = scmp.ne.s32.totalorder %s167, %s168
      %p177 = scmp.eq.s32.totalorder %s26, 0
      %p178 = por %p176, %p177
      %p179 = scmp.ne.s32.totalorder %s167, %s168
      %p180 = scmp.eq.s32.totalorder %s27, 1
      %p181 = por %p179, %p180
      %p183 = scmp.ne.s32.totalorder %s168, %s182
      %p184 = scmp.eq.s32.totalorder %s27, 0
      %p185 = por %p183, %p184
      %s187 = sadd.s32 %s186, 1
      %p190 = scmp.eq.s32.totalorder %s21, 1
      %p191 = scmp.ne.s32.totalorder %s186, %s188
      %p192 = scmp.eq.s32.totalorder %s21, 0
      %p193 = por %p191, %p192
      %p194 = scmp.ne.s32.totalorder %s186, %s188
      %p195 = scmp.eq.s32.totalorder %s26, 1
      %p196 = por %p194, %p195
      %p197 = scmp.ne.s32.totalorder %s188, %s189
      %p198 = scmp.eq.s32.totalorder %s26, 0
      %p199 = por %p197, %p198
      %p200 = scmp.ne.s32.totalorder %s188, %s189
      %p201 = scmp.eq.s32.totalorder %s27, 1
      %p202 = por %p200, %p201
      %p204 = scmp.ne.s32.totalorder %s189, %s203
      %p205 = scmp.eq.s32.totalorder %s27, 0
      %p206 = por %p204, %p205
      %s208 = sadd.s32 %s207, 1
      %p211 = scmp.eq.s32.totalorder %s21, 1
      %p212 = scmp.ne.s32.totalorder %s207, %s209
      %p213 = scmp.eq.s32.totalorder %s21, 0
      %p214 = por %p212, %p213
      %p215 = scmp.ne.s32.totalorder %s207, %s209
      %p216 = scmp.eq.s32.totalorder %s26, 1
      %p217 = por %p215, %p216
      %p218 = scmp.ne.s32.totalorder %s209, %s210
      %p219 = scmp.eq.s32.totalorder %s26, 0
      %p220 = por %p218, %p219
      %p221 = scmp.ne.s32.totalorder %s209, %s210
      %p222 = scmp.eq.s32.totalorder %s27, 1
      %p223 = por %p221, %p222
      %p225 = scmp.ne.s32.totalorder %s210, %s224
      %p226 = scmp.eq.s32.totalorder %s27, 0
      %p227 = por %p225, %p226
      %s229 = sadd.s32 %s228, 1
      %p232 = scmp.eq.s32.totalorder %s21, 1
      %p233 = scmp.ne.s32.totalorder %s228, %s230
      %p234 = scmp.eq.s32.totalorder %s21, 0
      %p235 = por %p233, %p234
      %p236 = scmp.ne.s32.totalorder %s228, %s230
      %p237 = scmp.eq.s32.totalorder %s26, 1
      %p238 = por %p236, %p237
      %p239 = scmp.ne.s32.totalorder %s230, %s231
      %p240 = scmp.eq.s32.totalorder %s26, 0
      %p241 = por %p239, %p240
      %p242 = scmp.ne.s32.totalorder %s230, %s231
      %p243 = scmp.eq.s32.totalorder %s27, 1
      %p244 = por %p242, %p243
      %p246 = scmp.ne.s32.totalorder %s231, %s245
      %p247 = scmp.eq.s32.totalorder %s27, 0
      %p248 = por %p246, %p247
      %s250 = sadd.s32 %s249, 1
      %p253 = scmp.eq.s32.totalorder %s21, 1
      %p254 = scmp.ne.s32.totalorder %s249, %s251
      %p255 = scmp.eq.s32.totalorder %s21, 0
      %p256 = por %p254, %p255
      %p257 = scmp.ne.s32.totalorder %s249, %s251
      %p258 = scmp.eq.s32.totalorder %s26, 1
      %p259 = por %p257, %p258
      %p260 = scmp.ne.s32.totalorder %s251, %s252
      %p261 = scmp.eq.s32.totalorder %s26, 0
      %p262 = por %p260, %p261
      %p263 = scmp.ne.s32.totalorder %s251, %s252
      %p264 = scmp.eq.s32.totalorder %s27, 1
      %p265 = por %p263, %p264
      %p267 = scmp.ne.s32.totalorder %s252, %s266
      %p268 = scmp.eq.s32.totalorder %s27, 0
      %p269 = por %p267, %p268
      %s271 = sadd.s32 %s270, 1
      %p274 = scmp.eq.s32.totalorder %s21, 1
      %p275 = scmp.ne.s32.totalorder %s270, %s272
      %p276 = scmp.eq.s32.totalorder %s21, 0
      %p277 = por %p275, %p276
      %p278 = scmp.ne.s32.totalorder %s270, %s272
      %p279 = scmp.eq.s32.totalorder %s26, 1
      %p280 = por %p278, %p279
      %p281 = scmp.ne.s32.totalorder %s272, %s273
      %p282 = scmp.eq.s32.totalorder %s26, 0
      %p283 = por %p281, %p282
      %p284 = scmp.ne.s32.totalorder %s272, %s273
      %p285 = scmp.eq.s32.totalorder %s27, 1
      %p286 = por %p284, %p285
      %p288 = scmp.ne.s32.totalorder %s273, %s287
      %p289 = scmp.eq.s32.totalorder %s27, 0
      %p290 = por %p288, %p289
      %s292 = sadd.s32 %s291, 1
      %p295 = scmp.eq.s32.totalorder %s21, 1
      %p296 = scmp.ne.s32.totalorder %s291, %s293
      %p297 = scmp.eq.s32.totalorder %s21, 0
      %p298 = por %p296, %p297
      %p299 = scmp.ne.s32.totalorder %s291, %s293
      %p300 = scmp.eq.s32.totalorder %s26, 1
      %p301 = por %p299, %p300
      %p302 = scmp.ne.s32.totalorder %s293, %s294
      %p303 = scmp.eq.s32.totalorder %s26, 0
      %p304 = por %p302, %p303
      %p305 = scmp.ne.s32.totalorder %s293, %s294
      %p306 = scmp.eq.s32.totalorder %s27, 1
      %p307 = por %p305, %p306
      %p309 = scmp.ne.s32.totalorder %s294, %s308
      %p310 = scmp.eq.s32.totalorder %s27, 0
      %p311 = por %p309, %p310
      %s312 = ssub.s32 %s21, %s28
      %p313 = scmp.eq.s32.totalorder %s312, 0
      %s315 = sadd.s32 %s314, 1
      %s316 = scalar_select %p313, %s314, %s315
      %p319 = pneg %p313
      %p320 = scmp.eq.s32.totalorder %s21, 1
      %p321 = por %p319, %p320
      %p322 = scmp.ne.s32.totalorder %s314, %s317
      %p323 = scmp.eq.s32.totalorder %s21, 0
      %p324 = por %p322, %p323
      %p325 = scmp.ne.s32.totalorder %s314, %s317
      %p326 = scmp.eq.s32.totalorder %s26, 1
      %p327 = por %p325, %p326
      %p328 = scmp.ne.s32.totalorder %s317, %s318
      %p329 = scmp.eq.s32.totalorder %s26, 0
      %p330 = por %p328, %p329
      %p331 = scmp.ne.s32.totalorder %s317, %s318
      %p332 = scmp.eq.s32.totalorder %s27, 1
      %p333 = por %p331, %p332
      %p335 = scmp.ne.s32.totalorder %s318, %s334
      %p336 = scmp.eq.s32.totalorder %s27, 0
      %p337 = por %p335, %p336
      %s338 = ssub.s32 %s21, %s28
      %p339 = scmp.eq.s32.totalorder %s338, 0
      %s341 = sadd.s32 %s340, 1
      %s342 = scalar_select %p339, %s340, %s341
      %p345 = pneg %p339
      %p346 = scmp.eq.s32.totalorder %s21, 1
      %p347 = por %p345, %p346
      %p348 = scmp.ne.s32.totalorder %s340, %s343
      %p349 = scmp.eq.s32.totalorder %s21, 0
      %p350 = por %p348, %p349
      %p351 = scmp.ne.s32.totalorder %s340, %s343
      %p352 = scmp.eq.s32.totalorder %s26, 1
      %p353 = por %p351, %p352
      %p354 = scmp.ne.s32.totalorder %s343, %s344
      %p355 = scmp.eq.s32.totalorder %s26, 0
      %p356 = por %p354, %p355
      %p357 = scmp.ne.s32.totalorder %s343, %s344
      %p358 = scmp.eq.s32.totalorder %s27, 1
      %p359 = por %p357, %p358
      %p361 = scmp.ne.s32.totalorder %s344, %s360
      %p362 = scmp.eq.s32.totalorder %s27, 0
      %p363 = por %p361, %p362
      %p364 = scmp.le.s32.totalorder 1, %s21
      %p365 = scmp.lt.s32.totalorder %s21, 3
      %p366 = pnand %p364, %p365
      %p367 = pneg %p366
      // Predicated region
      $region9: #{word_attention_forward.1} parent=5 // pred_check
        _
      $region10: #{word_attention_forward.1} parent=5 // pred_check_branch
        %369 = sbr.rel (%p366) target = $region12
      $region11: #{word_attention_forward.1} parent=5 // pred_region
        %s370 = ssub.s32 %s21, 1
        // Predicated region
        $region13: #{word_attention_forward.1} parent=11 // pred_check
          %p371 = pneg %p94
        $region14: #{word_attention_forward.1} parent=11 // pred_check_branch
          %373 = sbr.rel (%p371) target = $region16
        $region15: #{word_attention_forward.1} parent=11 // pred_region
          _
        $region16: #{word_attention_forward.1} parent=11 // pred_fallthru
          _
        // Predicated region
        $region17: #{word_attention_forward.1} parent=11 // pred_check
          %p374 = pneg %p115
        $region18: #{word_attention_forward.1} parent=11 // pred_check_branch
          %376 = sbr.rel (%p374) target = $region20
        $region19: #{word_attention_forward.1} parent=11 // pred_region
          _
        $region20: #{word_attention_forward.1} parent=11 // pred_fallthru
          _
        // Predicated region
        $region21: #{word_attention_forward.1} parent=11 // pred_check
          %p377 = pneg %p136
        $region22: #{word_attention_forward.1} parent=11 // pred_check_branch
          %379 = sbr.rel (%p377) target = $region24
        $region23: #{word_attention_forward.1} parent=11 // pred_region
          _
        $region24: #{word_attention_forward.1} parent=11 // pred_fallthru
          _
        // Predicated region
        $region25: #{word_attention_forward.1} parent=11 // pred_check
          %p380 = pneg %p157
        $region26: #{word_attention_forward.1} parent=11 // pred_check_branch
          %382 = sbr.rel (%p380) target = $region28
        $region27: #{word_attention_forward.1} parent=11 // pred_region
          _
        $region28: #{word_attention_forward.1} parent=11 // pred_fallthru
          _
        // Predicated region
        $region29: #{word_attention_forward.1} parent=11 // pred_check
          %p383 = pneg %p178
        $region30: #{word_attention_forward.1} parent=11 // pred_check_branch
          %385 = sbr.rel (%p383) target = $region32
        $region31: #{word_attention_forward.1} parent=11 // pred_region
          _
        $region32: #{word_attention_forward.1} parent=11 // pred_fallthru
          _
        // Predicated region
        $region33: #{word_attention_forward.1} parent=11 // pred_check
          %p386 = pneg %p199
        $region34: #{word_attention_forward.1} parent=11 // pred_check_branch
          %388 = sbr.rel (%p386) target = $region36
        $region35: #{word_attention_forward.1} parent=11 // pred_region
          _
        $region36: #{word_attention_forward.1} parent=11 // pred_fallthru
          _
        // Predicated region
        $region37: #{word_attention_forward.1} parent=11 // pred_check
          %p389 = pneg %p220
        $region38: #{word_attention_forward.1} parent=11 // pred_check_branch
          %391 = sbr.rel (%p389) target = $region40
        $region39: #{word_attention_forward.1} parent=11 // pred_region
          _
        $region40: #{word_attention_forward.1} parent=11 // pred_fallthru
          _
        // Predicated region
        $region41: #{word_attention_forward.1} parent=11 // pred_check
          %p392 = pneg %p241
        $region42: #{word_attention_forward.1} parent=11 // pred_check_branch
          %394 = sbr.rel (%p392) target = $region44
        $region43: #{word_attention_forward.1} parent=11 // pred_region
          _
        $region44: #{word_attention_forward.1} parent=11 // pred_fallthru
          _
        // Predicated region
        $region45: #{word_attention_forward.1} parent=11 // pred_check
          %p395 = pneg %p262
        $region46: #{word_attention_forward.1} parent=11 // pred_check_branch
          %397 = sbr.rel (%p395) target = $region48
        $region47: #{word_attention_forward.1} parent=11 // pred_region
          _
        $region48: #{word_attention_forward.1} parent=11 // pred_fallthru
          _
        // Predicated region
        $region49: #{word_attention_forward.1} parent=11 // pred_check
          %p398 = pneg %p283
        $region50: #{word_attention_forward.1} parent=11 // pred_check_branch
          %400 = sbr.rel (%p398) target = $region52
        $region51: #{word_attention_forward.1} parent=11 // pred_region
          _
        $region52: #{word_attention_forward.1} parent=11 // pred_fallthru
          _
        // Predicated region
        $region53: #{word_attention_forward.1} parent=11 // pred_check
          %p401 = pneg %p304
        $region54: #{word_attention_forward.1} parent=11 // pred_check_branch
          %403 = sbr.rel (%p401) target = $region56
        $region55: #{word_attention_forward.1} parent=11 // pred_region
          _
        $region56: #{word_attention_forward.1} parent=11 // pred_fallthru
          _
      $region12: #{word_attention_forward.1} parent=5 // pred_fallthru
        _
      %p404 = scmp.lt.s32.totalorder %s21, 2
      // Predicated region
      $region57: #{word_attention_forward.1} parent=5 // pred_check
        %p405 = pneg %p404
      $region58: #{word_attention_forward.1} parent=5 // pred_check_branch
        %407 = sbr.rel (%p405) target = $region60
      $region59: #{word_attention_forward.1} parent=5 // pred_region
        // Predicated region
        $region61: #{word_attention_forward.1} parent=59 // pred_check
          %p408 = pneg %p41
        $region62: #{word_attention_forward.1} parent=59 // pred_check_branch
          %410 = sbr.rel (%p408) target = $region64
        $region63: #{word_attention_forward.1} parent=59 // pred_region
          %s411 = sand.u32 %s31, 1
          %s412 = sand.u32 %s31, 1
          %s413 = smul.addr %s412, 64
          %s414 = scalar_lea.vmem [#allocation7], %s413
          %s415 = smul.addr %s21, 8
          %s416 = scalar_lea.vmem %s0, %s415
          // Predicated region
          $region65: #{word_attention_forward.1} parent=63 // pred_check
            _
          $region66: #{word_attention_forward.1} parent=63 // pred_check_branch
            %418 = sbr.rel (0) target = $region68
          $region67: #{word_attention_forward.1} parent=63 // pred_region
            // Predicated region
            $region69: #{word_attention_forward.1} parent=67 // pred_check
              _
            $region70: #{word_attention_forward.1} parent=67 // pred_check_branch
              %420 = sbr.rel (0) target = $region72
            $region71: #{word_attention_forward.1} parent=67 // pred_region
              // Predicated region
              $region84: #{word_attention_forward.1} parent=71 // pred_check
                _
              $region85: #{word_attention_forward.1} parent=71 // pred_check_branch
                %450 = sbr.rel (0) target = $region87
              $region86: #{word_attention_forward.1} parent=71 // pred_region
                loop: start=0, step=1, limit=1
                $region88: #{word_attention_forward.1} parent=86 // loop_pre_header
                  _
                $region89: #{word_attention_forward.1} parent=86 // loop_header
                  %s452 = sphi 0, %s456
                  %p453 = scmp.ge.s32.totalorder %s452, 1
                  %s457 = sphi %s416, %s416
                  %s458 = sphi %s414, %s414
                $region90: #{word_attention_forward.1} parent=86 // loop_header_branch
                  %455 = sbr.rel (%p453) target = $region94
                $region91: #{word_attention_forward.1} parent=86 // loop_body
                  %v459 = vld [vmem:[%s457] sm:$0xff]
                  %460 = vst [vmem:[%s458] sm:$0xff] %v459
                  %v461 = vld [vmem:[%s457 + $0x10] sm:$0xff]
                  %462 = vst [vmem:[%s458 + $0x8] sm:$0xff] %v461
                  %v463 = vld [vmem:[%s457 + $0x20] sm:$0xff]
                  %464 = vst [vmem:[%s458 + $0x10] sm:$0xff] %v463
                  %v465 = vld [vmem:[%s457 + $0x30] sm:$0xff]
                  %466 = vst [vmem:[%s458 + $0x18] sm:$0xff] %v465
                  %v467 = vld [vmem:[%s457 + $0x40] sm:$0xff]
                  %468 = vst [vmem:[%s458 + $0x20] sm:$0xff] %v467
                  %v469 = vld [vmem:[%s457 + $0x50] sm:$0xff]
                  %470 = vst [vmem:[%s458 + $0x28] sm:$0xff] %v469
                  %v471 = vld [vmem:[%s457 + $0x60] sm:$0xff]
                  %472 = vst [vmem:[%s458 + $0x30] sm:$0xff] %v471
                  %v473 = vld [vmem:[%s457 + $0x70] sm:$0xff]
                  %474 = vst [vmem:[%s458 + $0x38] sm:$0xff] %v473
                $region92: #{word_attention_forward.1} parent=86 // loop_footer
                  %s456 = sadd.s32 1, %s452
                $region93: #{word_attention_forward.1} parent=86 // loop_footer_branch
                  %451 = sbr.rel target = $region89
                $region94: #{word_attention_forward.1} parent=86 // loop_exit
                  _
              $region87: #{word_attention_forward.1} parent=71 // pred_fallthru
                _
              // Predicated region
              $region95: #{word_attention_forward.1} parent=71 // pred_check
                _
              $region96: #{word_attention_forward.1} parent=71 // pred_check_branch
                %476 = sbr.rel target = $region98
              $region97: #{word_attention_forward.1} parent=71 // pred_region
                _
              $region98: #{word_attention_forward.1} parent=71 // pred_fallthru
                _
            $region72: #{word_attention_forward.1} parent=67 // pred_fallthru
              _
            // Predicated region
            $region73: #{word_attention_forward.1} parent=67 // pred_check
              _
            $region74: #{word_attention_forward.1} parent=67 // pred_check_branch
              %422 = sbr.rel target = $region76
            $region75: #{word_attention_forward.1} parent=67 // pred_region
              %s424 = ssub.s32 256, 1
              loop: start=0, step=1, limit=1
              $region77: #{word_attention_forward.1} parent=75 // loop_pre_header
                _
              $region78: #{word_attention_forward.1} parent=75 // loop_header
                %s426 = sphi 0, %s430
                %p427 = scmp.ge.s32.totalorder %s426, 1
                %s431 = sphi %s416, %s416
                %s432 = sphi %s414, %s414
              $region79: #{word_attention_forward.1} parent=75 // loop_header_branch
                %429 = sbr.rel (%p427) target = $region83
              $region80: #{word_attention_forward.1} parent=75 // loop_body
                %v433 = vld [vmem:[%s431] sm:%s424]
                %434 = vst [vmem:[%s432] sm:%s424] %v433
                %v435 = vld [vmem:[%s431 + $0x10] sm:%s424]
                %436 = vst [vmem:[%s432 + $0x8] sm:%s424] %v435
                %v437 = vld [vmem:[%s431 + $0x20] sm:%s424]
                %438 = vst [vmem:[%s432 + $0x10] sm:%s424] %v437
                %v439 = vld [vmem:[%s431 + $0x30] sm:%s424]
                %440 = vst [vmem:[%s432 + $0x18] sm:%s424] %v439
                %v441 = vld [vmem:[%s431 + $0x40] sm:%s424]
                %442 = vst [vmem:[%s432 + $0x20] sm:%s424] %v441
                %v443 = vld [vmem:[%s431 + $0x50] sm:%s424]
                %444 = vst [vmem:[%s432 + $0x28] sm:%s424] %v443
                %v445 = vld [vmem:[%s431 + $0x60] sm:%s424]
                %446 = vst [vmem:[%s432 + $0x30] sm:%s424] %v445
                %v447 = vld [vmem:[%s431 + $0x70] sm:%s424]
                %448 = vst [vmem:[%s432 + $0x38] sm:%s424] %v447
              $region81: #{word_attention_forward.1} parent=75 // loop_footer
                %s430 = sadd.s32 1, %s426
              $region82: #{word_attention_forward.1} parent=75 // loop_footer_branch
                %425 = sbr.rel target = $region78
              $region83: #{word_attention_forward.1} parent=75 // loop_exit
                _
            $region76: #{word_attention_forward.1} parent=67 // pred_fallthru
              _
          $region68: #{word_attention_forward.1} parent=63 // pred_fallthru
            _
          %477 = vnop
        $region64: #{word_attention_forward.1} parent=59 // pred_fallthru
          _
        // Predicated region
        $region99: #{word_attention_forward.1} parent=59 // pred_check
          %p478 = pneg %p67
        $region100: #{word_attention_forward.1} parent=59 // pred_check_branch
          %480 = sbr.rel (%p478) target = $region102
        $region101: #{word_attention_forward.1} parent=59 // pred_region
          %p481 = scmp.lt.s32.totalorder %s21, 1
          %s482 = scalar_select %p481, %s21, 1
          %s483 = smul.addr %s482, 8
          %s484 = scalar_lea.vmem %s1, %s483
        $region102: #{word_attention_forward.1} parent=59 // pred_fallthru
          _
      $region60: #{word_attention_forward.1} parent=5 // pred_fallthru
        _
      %p485 = scmp.le.s32.totalorder 1, %s21
      %p486 = scmp.lt.s32.totalorder %s21, 3
      %p487 = pnand %p485, %p486
      %p488 = pneg %p487
      // Predicated region
      $region103: #{word_attention_forward.1} parent=5 // pred_check
        _
      $region104: #{word_attention_forward.1} parent=5 // pred_check_branch
        %490 = sbr.rel (%p487) target = $region106
      $region105: #{word_attention_forward.1} parent=5 // pred_region
        %s491 = ssub.s32 %s21, 1
        %s492 = sand.u32 %s34, 1
        %s493 = sand.u32 %s34, 1
        %s494 = smul.addr %s493, 64
        %s495 = scalar_lea.vmem [#allocation7], %s494
        // Predicated region
        $region107: #{word_attention_forward.1} parent=105 // pred_check
          %p496 = pneg %p47
        $region108: #{word_attention_forward.1} parent=105 // pred_check_branch
          %498 = sbr.rel (%p496) target = $region110
        $region109: #{word_attention_forward.1} parent=105 // pred_region
          _
        $region110: #{word_attention_forward.1} parent=105 // pred_fallthru
          _
        %s499 = sand.u32 %s34, 1
        %s500 = sand.u32 %s34, 1
        %s501 = smul.addr %s500, 64
        %s502 = scalar_lea.vmem [#allocation7], %s501
        %p503 = pneg %p47
        %p504 = pneg %p44
        %p505 = scmp.lt.s32.totalorder %s26, 1
        %s506 = scalar_select %p505, %s26, 1
        %s507 = smul.addr %s506, 8
        %s508 = scalar_lea.vmem %s1, %s507
        %p509 = pneg %p73
        %p510 = pneg %p70
        %p511 = pneg %p94
        %p512 = pneg %p91
        %p513 = pneg %p115
        %p514 = pneg %p112
        %p515 = pneg %p136
        %p516 = pneg %p133
        %p517 = pneg %p157
        %p518 = pneg %p154
        %p519 = pneg %p178
        %p520 = pneg %p175
        %p521 = pneg %p199
        %p522 = pneg %p196
        %p523 = pneg %p220
        %p524 = pneg %p217
        %p525 = pneg %p241
        %p526 = pneg %p238
        %p527 = pneg %p262
        %p528 = pneg %p259
        %p529 = pneg %p283
        %p530 = pneg %p280
        %p531 = pneg %p304
        %p532 = pneg %p301
        %p533 = pneg %p330
        %p534 = pneg %p327
        %p535 = scmp.lt.s32.totalorder %s26, 1
        %s536 = scalar_select %p535, %s26, 1
        %s537 = smul.addr %s536, 8
        %s538 = scalar_lea.vmem %s13, %s537
        %p539 = pneg %p356
        %p540 = pneg %p353
        %s541 = sand.u32 %s343, 1
        %s542 = sand.u32 %s343, 1
        %s543 = smul.addr %s542, 64
        %s544 = scalar_lea.vmem [#allocation8], %s543
        %p545 = scmp.lt.s32.totalorder %s26, 1
        %s546 = scalar_select %p545, %s26, 1
        %s547 = smul.addr %s546, 8
        %s548 = scalar_lea.vmem %s1, %s547
        %p549 = scmp.lt.s32.totalorder %s26, 1
        %s550 = scalar_select %p549, %s26, 1
        %s551 = smul.addr %s550, 8
        %s552 = scalar_lea.vmem %s13, %s551
        %v553 = vld [vmem:[%s495] sm:$0xff]
        %v554 = vld [vmem:[%s495 + $0x8] sm:$0xff]
        %v555 = vld [vmem:[%s495 + $0x10] sm:$0xff]
        %v556 = vld [vmem:[%s495 + $0x18] sm:$0xff]
        %v557 = vld [vmem:[%s495 + $0x20] sm:$0xff]
        %v558 = vld [vmem:[%s495 + $0x28] sm:$0xff]
        %v559 = vld [vmem:[%s495 + $0x30] sm:$0xff]
        %v560 = vld [vmem:[%s495 + $0x38] sm:$0xff]
        %v561 = vld [vmem:[%s2] sm:$0xff]
        %v562 = vld [vmem:[%s2 + $0x8] sm:$0xff]
        %v563 = vld [vmem:[%s2 + $0x10] sm:$0xff]
        %v564 = vld [vmem:[%s2 + $0x18] sm:$0xff]
        %v565 = vld [vmem:[%s3] sm:$0x1]
        %v567 = vperm.slane %v565, 0
        %vm569 = vcmask 261120
        %v571 = vsel %vm569, %v553, 0
        %v574 = vsel %vm569, %v554, 0
        %v577 = vsel %vm569, %v555, 0
        %v580 = vsel %vm569, %v556, 0
        %v583 = vsel %vm569, %v557, 0
        %v586 = vsel %vm569, %v558, 0
        %v589 = vsel %vm569, %v559, 0
        %v592 = vsel %vm569, %v560, 0
        %594 = vmatpush.msra.mxu0 0.0
        %595 = vmatpush.msra.mxu0 0.0
        %596 = vmatpush.msra.mxu0 0.0
        %597 = vmatpush.msra.mxu0 0.0
        %598 = vmatpush.msra.mxu0 0.0
        %599 = vmatpush.msra.mxu0 0.0
        %600 = vmatpush.msra.mxu0 0.0
        %601 = vmatpush.msra.mxu0 0.0
        %602 = vmatpush.msra.mxu0 0.0
        %603 = vmatpush.msra.mxu0 0.0
        %604 = vmatpush.msra.mxu0 0.0
        %605 = vmatpush.msra.mxu0 0.0
        %606 = vmatpush.msra.mxu0 %v564
        %607 = vmatpush.msra.mxu0 %v563
        %608 = vmatpush.msra.mxu0 %v562
        %609 = vmatpush.msra.mxu0 %v561
        %610 = vmatmul.f32.gmra.mxu0 %v571
        %v611 = vpop.f32.mrf.mxu0
        %v612 = vadd.f32 %v567, %v611
        %613 = vmatmul.f32.gmra.mxu0 %v574
        %v614 = vpop.f32.mrf.mxu0
        %v615 = vadd.f32 %v567, %v614
        %616 = vmatmul.f32.gmra.mxu0 %v577
        %v617 = vpop.f32.mrf.mxu0
        %v618 = vadd.f32 %v567, %v617
        %619 = vmatmul.f32.gmra.mxu0 %v580
        %v620 = vpop.f32.mrf.mxu0
        %v621 = vadd.f32 %v567, %v620
        %622 = vmatmul.f32.gmra.mxu0 %v583
        %v623 = vpop.f32.mrf.mxu0
        %v624 = vadd.f32 %v567, %v623
        %625 = vmatmul.f32.gmra.mxu0 %v586
        %v626 = vpop.f32.mrf.mxu0
        %v627 = vadd.f32 %v567, %v626
        %628 = vmatmul.f32.gmra.mxu0 %v589
        %v629 = vpop.f32.mrf.mxu0
        %v630 = vadd.f32 %v567, %v629
        %631 = vmatmul.f32.gmra.mxu0 %v592
        %v632 = vpop.f32.mrf.mxu0
        %v633 = vadd.f32 %v567, %v632
        %634 = vdwg.mxu0
        %vm635 = vcmask 392192
        %636 = vst.msk [vmem:[#allocation2] sm:$0xff] %vm635, %v612
        %637 = vst.msk [vmem:[#allocation2 + $0x8] sm:$0xff] %vm635, %v615
        %638 = vst.msk [vmem:[#allocation2 + $0x10] sm:$0xff] %vm635, %v618
        %639 = vst.msk [vmem:[#allocation2 + $0x18] sm:$0xff] %vm635, %v621
        %640 = vst.msk [vmem:[#allocation2 + $0x20] sm:$0xff] %vm635, %v624
        %641 = vst.msk [vmem:[#allocation2 + $0x28] sm:$0xff] %vm635, %v627
        %642 = vst.msk [vmem:[#allocation2 + $0x30] sm:$0xff] %vm635, %v630
        %643 = vst.msk [vmem:[#allocation2 + $0x38] sm:$0xff] %vm635, %v633
        %652 = vrot.lane.b32.xlu0 %v612, 80
        %v653 = vpop.permute.xlu0 %652
        %654 = vrot.lane.b32.xlu0 %v615, 80
        %v655 = vpop.permute.xlu0 %654
        %656 = vrot.lane.b32.xlu0 %v618, 80
        %v657 = vpop.permute.xlu0 %656
        %658 = vrot.lane.b32.xlu0 %v621, 80
        %v659 = vpop.permute.xlu0 %658
        %660 = vrot.lane.b32.xlu0 %v624, 80
        %v661 = vpop.permute.xlu0 %660
        %662 = vrot.lane.b32.xlu0 %v627, 80
        %v663 = vpop.permute.xlu0 %662
        %664 = vrot.lane.b32.xlu0 %v630, 80
        %v665 = vpop.permute.xlu0 %664
        %666 = vrot.lane.b32.xlu0 %v633, 80
        %v667 = vpop.permute.xlu0 %666
        %676 = vst.msk [vmem:[#allocation3] sm:$0xff] %vm635, %v653
        %677 = vst.msk [vmem:[#allocation3 + $0x8] sm:$0xff] %vm635, %v655
        %678 = vst.msk [vmem:[#allocation3 + $0x10] sm:$0xff] %vm635, %v657
        %679 = vst.msk [vmem:[#allocation3 + $0x18] sm:$0xff] %vm635, %v659
        %680 = vst.msk [vmem:[#allocation3 + $0x20] sm:$0xff] %vm635, %v661
        %681 = vst.msk [vmem:[#allocation3 + $0x28] sm:$0xff] %vm635, %v663
        %682 = vst.msk [vmem:[#allocation3 + $0x30] sm:$0xff] %vm635, %v665
        %683 = vst.msk [vmem:[#allocation3 + $0x38] sm:$0xff] %vm635, %v667
        %v684 = vld [vmem:[%s548] sm:$0xff]
        %vm685 = vcmp.gt.s32.totalorder %v684, 0
        %vm686 = vcmp.gt.s32.totalorder %v684, 1
        %vm687 = vcmp.gt.s32.totalorder %v684, 2
        %vm688 = vcmp.gt.s32.totalorder %v684, 3
        %vm689 = vcmp.gt.s32.totalorder %v684, 4
        %vm690 = vcmp.gt.s32.totalorder %v684, 5
        %vm691 = vcmp.gt.s32.totalorder %v684, 6
        %vm692 = vcmp.gt.s32.totalorder %v684, 7
        %v693 = vsel %vm685, 1, 0
        %v694 = vsel %vm686, 1, 0
        %v695 = vsel %vm687, 1, 0
        %v696 = vsel %vm688, 1, 0
        %v697 = vsel %vm689, 1, 0
        %v698 = vsel %vm690, 1, 0
        %v699 = vsel %vm691, 1, 0
        %v700 = vsel %vm692, 1, 0
        %v701 = vcvt.s32.f32 %v693
        %v702 = vcvt.s32.f32 %v694
        %v703 = vcvt.s32.f32 %v695
        %v704 = vcvt.s32.f32 %v696
        %v705 = vcvt.s32.f32 %v697
        %v706 = vcvt.s32.f32 %v698
        %v707 = vcvt.s32.f32 %v699
        %v708 = vcvt.s32.f32 %v700
        %vm709 = vcmask 7168
        %710 = vst.msk [vmem:[#allocation6] sm:$0xff] %vm709, %v701
        %711 = vst.msk [vmem:[#allocation6 + $0x8] sm:$0xff] %vm709, %v702
        %712 = vst.msk [vmem:[#allocation6 + $0x10] sm:$0xff] %vm709, %v703
        %713 = vst.msk [vmem:[#allocation6 + $0x18] sm:$0xff] %vm709, %v704
        %714 = vst.msk [vmem:[#allocation6 + $0x20] sm:$0xff] %vm709, %v705
        %715 = vst.msk [vmem:[#allocation6 + $0x28] sm:$0xff] %vm709, %v706
        %716 = vst.msk [vmem:[#allocation6 + $0x30] sm:$0xff] %vm709, %v707
        %717 = vst.msk [vmem:[#allocation6 + $0x38] sm:$0xff] %vm709, %v708
        %v718 = vld [vmem:[%s4] sm:$0xff]
        %v719 = vld [vmem:[%s4 + $0x8] sm:$0xff]
        %v720 = vld [vmem:[%s4 + $0x10] sm:$0xff]
        %v721 = vld [vmem:[%s4 + $0x18] sm:$0xff]
        %v722 = vld [vmem:[%s5] sm:$0x1]
        %v724 = vsel %vm569, 0.0, 0
        %726 = vmatpush.msra.mxu0 0.0
        %727 = vmatpush.msra.mxu0 0.0
        %728 = vmatpush.msra.mxu0 0.0
        %729 = vmatpush.msra.mxu0 0.0
        %730 = vmatpush.msra.mxu0 0.0
        %731 = vmatpush.msra.mxu0 0.0
        %732 = vmatpush.msra.mxu0 0.0
        %733 = vmatpush.msra.mxu0 0.0
        %734 = vmatpush.msra.mxu0 0.0
        %735 = vmatpush.msra.mxu0 0.0
        %736 = vmatpush.msra.mxu0 0.0
        %737 = vmatpush.msra.mxu0 0.0
        %738 = vmatpush.msra.mxu0 %v721
        %739 = vmatpush.msra.mxu0 %v720
        %740 = vmatpush.msra.mxu0 %v719
        %741 = vmatpush.msra.mxu0 %v718
        %742 = vmatmul.f32.gmra.mxu0 %v724
        %v743 = vpop.f32.mrf.mxu0
        %v744 = vadd.f32 0.0, %v743
        %745 = vdwg.mxu0
        %v746 = vld [vmem:[#allocation2] sm:$0xff]
        %v747 = vld [vmem:[#allocation6] sm:$0xff]
        %v748 = vadd.f32 %v746, %v744
        %v749 = vxor.u32 %v748, 2147483648
        %v750 = vmul.f32 %v749, 1.442695
        %v751 = vpow.pop %v750
        %v752 = vadd.f32 %v751, 1.0
        %v753 = vrcp.pop %v752
        %v754 = vmul.f32 %v752, %v753
        %v755 = vsub.f32 1.0, %v754
        %v756 = vmul.f32 %v753, %v755
        %v757 = vadd.f32 %v753, %v756
        %vm758 = vweird.f32 %v752
        %vm759 = vweird.f32 %v753
        %vm760 = vmor %vm758, %vm759
        %v761 = vsel %vm760, %v753, %v757
        %v762 = vand.u32 2147483647, %v752
        %vm763 = vcmp.eq.f32.partialorder %v762, 8.507059e+37
        %v764 = vand.u32 %v752, 2147483648
        %v765 = vor.u32 1.1754944e-38, %v764
        %v766 = vsel %vm763, %v765, %v761
        %v767 = vmul.f32 1.0, %v766
        %v769 = vperm.slane %v722, 0
        %770 = vrot.lane.b32.xlu0 %v769, 32
        %v771 = vpop.permute.xlu0 %770
        %v773 = vadd.f32 %v744, %v771
        %775 = vrot.lane.b32.xlu0 %v773, 96
        %v776 = vpop.permute.xlu0 %775
        %v778 = vmul.f32 %v767, %v776
        %780 = vrot.lane.b32.xlu0 %v778, 32
        %v781 = vpop.permute.xlu0 %780
        %v783 = vadd.f32 %v746, %v781
        %v784 = vtanh.pop %v783
        %v785 = vsub.f32 1.0, %v767
        %787 = vrot.lane.b32.xlu0 %v784, 112
        %v788 = vpop.permute.xlu0 %787
        %v790 = vmul.f32 %v785, %v788
        %v791 = vmul.f32 %v767, 0.0
        %v792 = vadd.f32 %v790, %v791
        %794 = vset.pattern.permute.xlu0 0
        %795 = vperm.xlu0 %794, %v747
        %v796 = vpop.permute.xlu0 %795
        %v798 = vmul.f32 %v796, %v792
        %v799 = vsub.f32 1.0, %v747
        %801 = vset.pattern.permute.xlu0 0
        %802 = vperm.xlu0 %801, %v799
        %v803 = vpop.permute.xlu0 %802
        %v805 = vmul.f32 %v803, 0.0
        %v806 = vadd.f32 %v798, %v805
        %v807 = vmul.f32 %v806, %v796
        %809 = vrot.lane.b32.xlu0 %v807, 112
        %v810 = vpop.permute.xlu0 %809
        %vm812 = vcmask 130048
        %813 = vst.msk [vmem:[#allocation4] sm:$0xff] %vm812, %v810
        %s814 = scalar_lea.vmem [#allocation3], 56
        %v815 = vld [vmem:[%s814] sm:$0xff]
        %s816 = scalar_lea.vmem [#allocation6], 56
        %v817 = vld [vmem:[%s816] sm:$0xff]
        %819 = vrot.lane.b32.xlu0 %v744, 80
        %v820 = vpop.permute.xlu0 %819
        %v822 = vadd.f32 %v815, %v820
        %v823 = vxor.u32 %v822, 2147483648
        %v824 = vmul.f32 %v823, 1.442695
        %v825 = vpow.pop %v824
        %v826 = vadd.f32 %v825, 1.0
        %v827 = vrcp.pop %v826
        %v828 = vmul.f32 %v826, %v827
        %v829 = vsub.f32 1.0, %v828
        %v830 = vmul.f32 %v827, %v829
        %v831 = vadd.f32 %v827, %v830
        %vm832 = vweird.f32 %v826
        %vm833 = vweird.f32 %v827
        %vm834 = vmor %vm832, %vm833
        %v835 = vsel %vm834, %v827, %v831
        %v836 = vand.u32 2147483647, %v826
        %vm837 = vcmp.eq.f32.partialorder %v836, 8.507059e+37
        %v838 = vand.u32 %v826, 2147483648
        %v839 = vor.u32 1.1754944e-38, %v838
        %v840 = vsel %vm837, %v839, %v835
        %v841 = vmul.f32 1.0, %v840
        %842 = vrot.lane.b32.xlu0 %v769, 64
        %v843 = vpop.permute.xlu0 %842
        %v845 = vadd.f32 %v744, %v843
        %847 = vrot.lane.b32.xlu0 %v845, 48
        %v848 = vpop.permute.xlu0 %847
        %v850 = vmul.f32 %v841, %v848
        %852 = vrot.lane.b32.xlu0 %v850, 32
        %v853 = vpop.permute.xlu0 %852
        %v855 = vadd.f32 %v815, %v853
        %v856 = vtanh.pop %v855
        %v857 = vsub.f32 1.0, %v841
        %859 = vrot.lane.b32.xlu0 %v856, 112
        %v860 = vpop.permute.xlu0 %859
        %v862 = vmul.f32 %v857, %v860
        %v863 = vmul.f32 %v841, 0.0
        %v864 = vadd.f32 %v862, %v863
        %866 = vset.pattern.permute.xlu0 0
        %867 = vperm.xlu0 %866, %v817
        %v868 = vpop.permute.xlu0 %867
        %v870 = vmul.f32 %v868, %v864
        %v871 = vsub.f32 1.0, %v817
        %873 = vset.pattern.permute.xlu0 0
        %874 = vperm.xlu0 %873, %v871
        %v875 = vpop.permute.xlu0 %874
        %v877 = vmul.f32 %v875, 0.0
        %v878 = vadd.f32 %v870, %v877
        %v879 = vmul.f32 %v878, %v868
        %881 = vrot.lane.b32.xlu0 %v879, 112
        %v882 = vpop.permute.xlu0 %881
        %s884 = scalar_lea.vmem [#allocation5], 56
        %885 = vst.msk [vmem:[%s884] sm:$0xff] %vm812, %v882
        %887 = vrot.lane.b32.xlu0 %v806, 112
        %v888 = vpop.permute.xlu0 %887
        %v890 = vsel %vm812, %v888, %v878
        %v892 = vsel %vm569, %v890, 0
        %894 = vmatpush.msra.mxu0 0.0
        %895 = vmatpush.msra.mxu0 0.0
        %896 = vmatpush.msra.mxu0 0.0
        %897 = vmatpush.msra.mxu0 0.0
        %898 = vmatpush.msra.mxu0 0.0
        %899 = vmatpush.msra.mxu0 0.0
        %900 = vmatpush.msra.mxu0 0.0
        %901 = vmatpush.msra.mxu0 0.0
        %902 = vmatpush.msra.mxu0 0.0
        %903 = vmatpush.msra.mxu0 0.0
        %904 = vmatpush.msra.mxu0 0.0
        %905 = vmatpush.msra.mxu0 0.0
        %906 = vmatpush.msra.mxu0 %v721
        %907 = vmatpush.msra.mxu0 %v720
        %908 = vmatpush.msra.mxu0 %v719
        %909 = vmatpush.msra.mxu0 %v718
        %910 = vmatmul.f32.gmra.mxu0 %v892
        %v911 = vpop.f32.mrf.mxu0
        %v912 = vadd.f32 0.0, %v911
        %913 = vdwg.mxu0
        %s914 = scalar_lea.vmem [#allocation2], 8
        %v915 = vld [vmem:[%s914] sm:$0xff]
        %s916 = scalar_lea.vmem [#allocation6], 8
        %v917 = vld [vmem:[%s916] sm:$0xff]
        %v918 = vadd.f32 %v915, %v912
        %v919 = vxor.u32 %v918, 2147483648
        %v920 = vmul.f32 %v919, 1.442695
        %v921 = vpow.pop %v920
        %v922 = vadd.f32 %v921, 1.0
        %v923 = vrcp.pop %v922
        %v924 = vmul.f32 %v922, %v923
        %v925 = vsub.f32 1.0, %v924
        %v926 = vmul.f32 %v923, %v925
        %v927 = vadd.f32 %v923, %v926
        %vm928 = vweird.f32 %v922
        %vm929 = vweird.f32 %v923
        %vm930 = vmor %vm928, %vm929
        %v931 = vsel %vm930, %v923, %v927
        %v932 = vand.u32 2147483647, %v922
        %vm933 = vcmp.eq.f32.partialorder %v932, 8.507059e+37
        %v934 = vand.u32 %v922, 2147483648
        %v935 = vor.u32 1.1754944e-38, %v934
        %v936 = vsel %vm933, %v935, %v931
        %v937 = vmul.f32 1.0, %v936
        %v938 = vadd.f32 %v912, %v771
        %940 = vrot.lane.b32.xlu0 %v938, 96
        %v941 = vpop.permute.xlu0 %940
        %v943 = vmul.f32 %v937, %v941
        %945 = vrot.lane.b32.xlu0 %v943, 32
        %v946 = vpop.permute.xlu0 %945
        %v948 = vadd.f32 %v915, %v946
        %v949 = vtanh.pop %v948
        %v950 = vsub.f32 1.0, %v937
        %952 = vrot.lane.b32.xlu0 %v949, 112
        %v953 = vpop.permute.xlu0 %952
        %v955 = vmul.f32 %v950, %v953
        %v956 = vmul.f32 %v937, %v806
        %v957 = vadd.f32 %v955, %v956
        %959 = vset.pattern.permute.xlu0 0
        %960 = vperm.xlu0 %959, %v917
        %v961 = vpop.permute.xlu0 %960
        %v963 = vmul.f32 %v961, %v957
        %v964 = vsub.f32 1.0, %v917
        %966 = vset.pattern.permute.xlu0 0
        %967 = vperm.xlu0 %966, %v964
        %v968 = vpop.permute.xlu0 %967
        %v970 = vmul.f32 %v968, %v806
        %v971 = vadd.f32 %v963, %v970
        %v972 = vmul.f32 %v971, %v961
        %974 = vrot.lane.b32.xlu0 %v972, 112
        %v975 = vpop.permute.xlu0 %974
        %s977 = scalar_lea.vmem [#allocation4], 8
        %978 = vst.msk [vmem:[%s977] sm:$0xff] %vm812, %v975
        %s979 = scalar_lea.vmem [#allocation3], 48
        %v980 = vld [vmem:[%s979] sm:$0xff]
        %s981 = scalar_lea.vmem [#allocation6], 48
        %v982 = vld [vmem:[%s981] sm:$0xff]
        %984 = vrot.lane.b32.xlu0 %v912, 80
        %v985 = vpop.permute.xlu0 %984
        %v987 = vadd.f32 %v980, %v985
        %v988 = vxor.u32 %v987, 2147483648
        %v989 = vmul.f32 %v988, 1.442695
        %v990 = vpow.pop %v989
        %v991 = vadd.f32 %v990, 1.0
        %v992 = vrcp.pop %v991
        %v993 = vmul.f32 %v991, %v992
        %v994 = vsub.f32 1.0, %v993
        %v995 = vmul.f32 %v992, %v994
        %v996 = vadd.f32 %v992, %v995
        %vm997 = vweird.f32 %v991
        %vm998 = vweird.f32 %v992
        %vm999 = vmor %vm997, %vm998
        %v1000 = vsel %vm999, %v992, %v996
        %v1001 = vand.u32 2147483647, %v991
        %vm1002 = vcmp.eq.f32.partialorder %v1001, 8.507059e+37
        %v1003 = vand.u32 %v991, 2147483648
        %v1004 = vor.u32 1.1754944e-38, %v1003
        %v1005 = vsel %vm1002, %v1004, %v1000
        %v1006 = vmul.f32 1.0, %v1005
        %v1007 = vadd.f32 %v912, %v843
        %1009 = vrot.lane.b32.xlu0 %v1007, 48
        %v1010 = vpop.permute.xlu0 %1009
        %v1012 = vmul.f32 %v1006, %v1010
        %1014 = vrot.lane.b32.xlu0 %v1012, 32
        %v1015 = vpop.permute.xlu0 %1014
        %v1017 = vadd.f32 %v980, %v1015
        %v1018 = vtanh.pop %v1017
        %v1019 = vsub.f32 1.0, %v1006
        %1021 = vrot.lane.b32.xlu0 %v1018, 112
        %v1022 = vpop.permute.xlu0 %1021
        %v1024 = vmul.f32 %v1019, %v1022
        %v1025 = vmul.f32 %v1006, %v878
        %v1026 = vadd.f32 %v1024, %v1025
        %1028 = vset.pattern.permute.xlu0 0
        %1029 = vperm.xlu0 %1028, %v982
        %v1030 = vpop.permute.xlu0 %1029
        %v1032 = vmul.f32 %v1030, %v1026
        %v1033 = vsub.f32 1.0, %v982
        %1035 = vset.pattern.permute.xlu0 0
        %1036 = vperm.xlu0 %1035, %v1033
        %v1037 = vpop.permute.xlu0 %1036
        %v1039 = vmul.f32 %v1037, %v878
        %v1040 = vadd.f32 %v1032, %v1039
        %v1041 = vmul.f32 %v1040, %v1030
        %1043 = vrot.lane.b32.xlu0 %v1041, 112
        %v1044 = vpop.permute.xlu0 %1043
        %s1046 = scalar_lea.vmem [#allocation5], 48
        %1047 = vst.msk [vmem:[%s1046] sm:$0xff] %vm812, %v1044
        %1049 = vrot.lane.b32.xlu0 %v971, 112
        %v1050 = vpop.permute.xlu0 %1049
        %v1052 = vsel %vm812, %v1050, %v1040
        %v1054 = vsel %vm569, %v1052, 0
        %1056 = vmatpush.msra.mxu0 0.0
        %1057 = vmatpush.msra.mxu0 0.0
        %1058 = vmatpush.msra.mxu0 0.0
        %1059 = vmatpush.msra.mxu0 0.0
        %1060 = vmatpush.msra.mxu0 0.0
        %1061 = vmatpush.msra.mxu0 0.0
        %1062 = vmatpush.msra.mxu0 0.0
        %1063 = vmatpush.msra.mxu0 0.0
        %1064 = vmatpush.msra.mxu0 0.0
        %1065 = vmatpush.msra.mxu0 0.0
        %1066 = vmatpush.msra.mxu0 0.0
        %1067 = vmatpush.msra.mxu0 0.0
        %1068 = vmatpush.msra.mxu0 %v721
        %1069 = vmatpush.msra.mxu0 %v720
        %1070 = vmatpush.msra.mxu0 %v719
        %1071 = vmatpush.msra.mxu0 %v718
        %1072 = vmatmul.f32.gmra.mxu0 %v1054
        %v1073 = vpop.f32.mrf.mxu0
        %v1074 = vadd.f32 0.0, %v1073
        %1075 = vdwg.mxu0
        %s1076 = scalar_lea.vmem [#allocation2], 16
        %v1077 = vld [vmem:[%s1076] sm:$0xff]
        %s1078 = scalar_lea.vmem [#allocation6], 16
        %v1079 = vld [vmem:[%s1078] sm:$0xff]
        %v1080 = vadd.f32 %v1077, %v1074
        %v1081 = vxor.u32 %v1080, 2147483648
        %v1082 = vmul.f32 %v1081, 1.442695
        %v1083 = vpow.pop %v1082
        %v1084 = vadd.f32 %v1083, 1.0
        %v1085 = vrcp.pop %v1084
        %v1086 = vmul.f32 %v1084, %v1085
        %v1087 = vsub.f32 1.0, %v1086
        %v1088 = vmul.f32 %v1085, %v1087
        %v1089 = vadd.f32 %v1085, %v1088
        %vm1090 = vweird.f32 %v1084
        %vm1091 = vweird.f32 %v1085
        %vm1092 = vmor %vm1090, %vm1091
        %v1093 = vsel %vm1092, %v1085, %v1089
        %v1094 = vand.u32 2147483647, %v1084
        %vm1095 = vcmp.eq.f32.partialorder %v1094, 8.507059e+37
        %v1096 = vand.u32 %v1084, 2147483648
        %v1097 = vor.u32 1.1754944e-38, %v1096
        %v1098 = vsel %vm1095, %v1097, %v1093
        %v1099 = vmul.f32 1.0, %v1098
        %v1100 = vadd.f32 %v1074, %v771
        %1102 = vrot.lane.b32.xlu0 %v1100, 96
        %v1103 = vpop.permute.xlu0 %1102
        %v1105 = vmul.f32 %v1099, %v1103
        %1107 = vrot.lane.b32.xlu0 %v1105, 32
        %v1108 = vpop.permute.xlu0 %1107
        %v1110 = vadd.f32 %v1077, %v1108
        %v1111 = vtanh.pop %v1110
        %v1112 = vsub.f32 1.0, %v1099
        %1114 = vrot.lane.b32.xlu0 %v1111, 112
        %v1115 = vpop.permute.xlu0 %1114
        %v1117 = vmul.f32 %v1112, %v1115
        %v1118 = vmul.f32 %v1099, %v971
        %v1119 = vadd.f32 %v1117, %v1118
        %1121 = vset.pattern.permute.xlu0 0
        %1122 = vperm.xlu0 %1121, %v1079
        %v1123 = vpop.permute.xlu0 %1122
        %v1125 = vmul.f32 %v1123, %v1119
        %v1126 = vsub.f32 1.0, %v1079
        %1128 = vset.pattern.permute.xlu0 0
        %1129 = vperm.xlu0 %1128, %v1126
        %v1130 = vpop.permute.xlu0 %1129
        %v1132 = vmul.f32 %v1130, %v971
        %v1133 = vadd.f32 %v1125, %v1132
        %v1134 = vmul.f32 %v1133, %v1123
        %1136 = vrot.lane.b32.xlu0 %v1134, 112
        %v1137 = vpop.permute.xlu0 %1136
        %s1139 = scalar_lea.vmem [#allocation4], 16
        %1140 = vst.msk [vmem:[%s1139] sm:$0xff] %vm812, %v1137
        %s1141 = scalar_lea.vmem [#allocation3], 40
        %v1142 = vld [vmem:[%s1141] sm:$0xff]
        %s1143 = scalar_lea.vmem [#allocation6], 40
        %v1144 = vld [vmem:[%s1143] sm:$0xff]
        %1146 = vrot.lane.b32.xlu0 %v1074, 80
        %v1147 = vpop.permute.xlu0 %1146
        %v1149 = vadd.f32 %v1142, %v1147
        %v1150 = vxor.u32 %v1149, 2147483648
        %v1151 = vmul.f32 %v1150, 1.442695
        %v1152 = vpow.pop %v1151
        %v1153 = vadd.f32 %v1152, 1.0
        %v1154 = vrcp.pop %v1153
        %v1155 = vmul.f32 %v1153, %v1154
        %v1156 = vsub.f32 1.0, %v1155
        %v1157 = vmul.f32 %v1154, %v1156
        %v1158 = vadd.f32 %v1154, %v1157
        %vm1159 = vweird.f32 %v1153
        %vm1160 = vweird.f32 %v1154
        %vm1161 = vmor %vm1159, %vm1160
        %v1162 = vsel %vm1161, %v1154, %v1158
        %v1163 = vand.u32 2147483647, %v1153
        %vm1164 = vcmp.eq.f32.partialorder %v1163, 8.507059e+37
        %v1165 = vand.u32 %v1153, 2147483648
        %v1166 = vor.u32 1.1754944e-38, %v1165
        %v1167 = vsel %vm1164, %v1166, %v1162
        %v1168 = vmul.f32 1.0, %v1167
        %v1169 = vadd.f32 %v1074, %v843
        %1171 = vrot.lane.b32.xlu0 %v1169, 48
        %v1172 = vpop.permute.xlu0 %1171
        %v1174 = vmul.f32 %v1168, %v1172
        %1176 = vrot.lane.b32.xlu0 %v1174, 32
        %v1177 = vpop.permute.xlu0 %1176
        %v1179 = vadd.f32 %v1142, %v1177
        %v1180 = vtanh.pop %v1179
        %v1181 = vsub.f32 1.0, %v1168
        %1183 = vrot.lane.b32.xlu0 %v1180, 112
        %v1184 = vpop.permute.xlu0 %1183
        %v1186 = vmul.f32 %v1181, %v1184
        %v1187 = vmul.f32 %v1168, %v1040
        %v1188 = vadd.f32 %v1186, %v1187
        %1190 = vset.pattern.permute.xlu0 0
        %1191 = vperm.xlu0 %1190, %v1144
        %v1192 = vpop.permute.xlu0 %1191
        %v1194 = vmul.f32 %v1192, %v1188
        %v1195 = vsub.f32 1.0, %v1144
        %1197 = vset.pattern.permute.xlu0 0
        %1198 = vperm.xlu0 %1197, %v1195
        %v1199 = vpop.permute.xlu0 %1198
        %v1201 = vmul.f32 %v1199, %v1040
        %v1202 = vadd.f32 %v1194, %v1201
        %v1203 = vmul.f32 %v1202, %v1192
        %1205 = vrot.lane.b32.xlu0 %v1203, 112
        %v1206 = vpop.permute.xlu0 %1205
        %s1208 = scalar_lea.vmem [#allocation5], 40
        %1209 = vst.msk [vmem:[%s1208] sm:$0xff] %vm812, %v1206
        %1211 = vrot.lane.b32.xlu0 %v1133, 112
        %v1212 = vpop.permute.xlu0 %1211
        %v1214 = vsel %vm812, %v1212, %v1202
        %v1216 = vsel %vm569, %v1214, 0
        %1218 = vmatpush.msra.mxu0 0.0
        %1219 = vmatpush.msra.mxu0 0.0
        %1220 = vmatpush.msra.mxu0 0.0
        %1221 = vmatpush.msra.mxu0 0.0
        %1222 = vmatpush.msra.mxu0 0.0
        %1223 = vmatpush.msra.mxu0 0.0
        %1224 = vmatpush.msra.mxu0 0.0
        %1225 = vmatpush.msra.mxu0 0.0
        %1226 = vmatpush.msra.mxu0 0.0
        %1227 = vmatpush.msra.mxu0 0.0
        %1228 = vmatpush.msra.mxu0 0.0
        %1229 = vmatpush.msra.mxu0 0.0
        %1230 = vmatpush.msra.mxu0 %v721
        %1231 = vmatpush.msra.mxu0 %v720
        %1232 = vmatpush.msra.mxu0 %v719
        %1233 = vmatpush.msra.mxu0 %v718
        %1234 = vmatmul.f32.gmra.mxu0 %v1216
        %v1235 = vpop.f32.mrf.mxu0
        %v1236 = vadd.f32 0.0, %v1235
        %1237 = vdwg.mxu0
        %s1238 = scalar_lea.vmem [#allocation2], 24
        %v1239 = vld [vmem:[%s1238] sm:$0xff]
        %s1240 = scalar_lea.vmem [#allocation6], 24
        %v1241 = vld [vmem:[%s1240] sm:$0xff]
        %v1242 = vadd.f32 %v1239, %v1236
        %v1243 = vxor.u32 %v1242, 2147483648
        %v1244 = vmul.f32 %v1243, 1.442695
        %v1245 = vpow.pop %v1244
        %v1246 = vadd.f32 %v1245, 1.0
        %v1247 = vrcp.pop %v1246
        %v1248 = vmul.f32 %v1246, %v1247
        %v1249 = vsub.f32 1.0, %v1248
        %v1250 = vmul.f32 %v1247, %v1249
        %v1251 = vadd.f32 %v1247, %v1250
        %vm1252 = vweird.f32 %v1246
        %vm1253 = vweird.f32 %v1247
        %vm1254 = vmor %vm1252, %vm1253
        %v1255 = vsel %vm1254, %v1247, %v1251
        %v1256 = vand.u32 2147483647, %v1246
        %vm1257 = vcmp.eq.f32.partialorder %v1256, 8.507059e+37
        %v1258 = vand.u32 %v1246, 2147483648
        %v1259 = vor.u32 1.1754944e-38, %v1258
        %v1260 = vsel %vm1257, %v1259, %v1255
        %v1261 = vmul.f32 1.0, %v1260
        %v1262 = vadd.f32 %v1236, %v771
        %1264 = vrot.lane.b32.xlu0 %v1262, 96
        %v1265 = vpop.permute.xlu0 %1264
        %v1267 = vmul.f32 %v1261, %v1265
        %1269 = vrot.lane.b32.xlu0 %v1267, 32
        %v1270 = vpop.permute.xlu0 %1269
        %v1272 = vadd.f32 %v1239, %v1270
        %v1273 = vtanh.pop %v1272
        %v1274 = vsub.f32 1.0, %v1261
        %1276 = vrot.lane.b32.xlu0 %v1273, 112
        %v1277 = vpop.permute.xlu0 %1276
        %v1279 = vmul.f32 %v1274, %v1277
        %v1280 = vmul.f32 %v1261, %v1133
        %v1281 = vadd.f32 %v1279, %v1280
        %1283 = vset.pattern.permute.xlu0 0
        %1284 = vperm.xlu0 %1283, %v1241
        %v1285 = vpop.permute.xlu0 %1284
        %v1287 = vmul.f32 %v1285, %v1281
        %v1288 = vsub.f32 1.0, %v1241
        %1290 = vset.pattern.permute.xlu0 0
        %1291 = vperm.xlu0 %1290, %v1288
        %v1292 = vpop.permute.xlu0 %1291
        %v1294 = vmul.f32 %v1292, %v1133
        %v1295 = vadd.f32 %v1287, %v1294
        %v1296 = vmul.f32 %v1295, %v1285
        %1298 = vrot.lane.b32.xlu0 %v1296, 112
        %v1299 = vpop.permute.xlu0 %1298
        %s1301 = scalar_lea.vmem [#allocation4], 24
        %1302 = vst.msk [vmem:[%s1301] sm:$0xff] %vm812, %v1299
        %s1303 = scalar_lea.vmem [#allocation3], 32
        %v1304 = vld [vmem:[%s1303] sm:$0xff]
        %s1305 = scalar_lea.vmem [#allocation6], 32
        %v1306 = vld [vmem:[%s1305] sm:$0xff]
        %1308 = vrot.lane.b32.xlu0 %v1236, 80
        %v1309 = vpop.permute.xlu0 %1308
        %v1311 = vadd.f32 %v1304, %v1309
        %v1312 = vxor.u32 %v1311, 2147483648
        %v1313 = vmul.f32 %v1312, 1.442695
        %v1314 = vpow.pop %v1313
        %v1315 = vadd.f32 %v1314, 1.0
        %v1316 = vrcp.pop %v1315
        %v1317 = vmul.f32 %v1315, %v1316
        %v1318 = vsub.f32 1.0, %v1317
        %v1319 = vmul.f32 %v1316, %v1318
        %v1320 = vadd.f32 %v1316, %v1319
        %vm1321 = vweird.f32 %v1315
        %vm1322 = vweird.f32 %v1316
        %vm1323 = vmor %vm1321, %vm1322
        %v1324 = vsel %vm1323, %v1316, %v1320
        %v1325 = vand.u32 2147483647, %v1315
        %vm1326 = vcmp.eq.f32.partialorder %v1325, 8.507059e+37
        %v1327 = vand.u32 %v1315, 2147483648
        %v1328 = vor.u32 1.1754944e-38, %v1327
        %v1329 = vsel %vm1326, %v1328, %v1324
        %v1330 = vmul.f32 1.0, %v1329
        %v1331 = vadd.f32 %v1236, %v843
        %1333 = vrot.lane.b32.xlu0 %v1331, 48
        %v1334 = vpop.permute.xlu0 %1333
        %v1336 = vmul.f32 %v1330, %v1334
        %1338 = vrot.lane.b32.xlu0 %v1336, 32
        %v1339 = vpop.permute.xlu0 %1338
        %v1341 = vadd.f32 %v1304, %v1339
        %v1342 = vtanh.pop %v1341
        %v1343 = vsub.f32 1.0, %v1330
        %1345 = vrot.lane.b32.xlu0 %v1342, 112
        %v1346 = vpop.permute.xlu0 %1345
        %v1348 = vmul.f32 %v1343, %v1346
        %v1349 = vmul.f32 %v1330, %v1202
        %v1350 = vadd.f32 %v1348, %v1349
        %1352 = vset.pattern.permute.xlu0 0
        %1353 = vperm.xlu0 %1352, %v1306
        %v1354 = vpop.permute.xlu0 %1353
        %v1356 = vmul.f32 %v1354, %v1350
        %v1357 = vsub.f32 1.0, %v1306
        %1359 = vset.pattern.permute.xlu0 0
        %1360 = vperm.xlu0 %1359, %v1357
        %v1361 = vpop.permute.xlu0 %1360
        %v1363 = vmul.f32 %v1361, %v1202
        %v1364 = vadd.f32 %v1356, %v1363
        %v1365 = vmul.f32 %v1364, %v1354
        %1367 = vrot.lane.b32.xlu0 %v1365, 112
        %v1368 = vpop.permute.xlu0 %1367
        %s1370 = scalar_lea.vmem [#allocation5], 32
        %1371 = vst.msk [vmem:[%s1370] sm:$0xff] %vm812, %v1368
        %1373 = vrot.lane.b32.xlu0 %v1295, 112
        %v1374 = vpop.permute.xlu0 %1373
        %v1376 = vsel %vm812, %v1374, %v1364
        %v1378 = vsel %vm569, %v1376, 0
        %1380 = vmatpush.msra.mxu0 0.0
        %1381 = vmatpush.msra.mxu0 0.0
        %1382 = vmatpush.msra.mxu0 0.0
        %1383 = vmatpush.msra.mxu0 0.0
        %1384 = vmatpush.msra.mxu0 0.0
        %1385 = vmatpush.msra.mxu0 0.0
        %1386 = vmatpush.msra.mxu0 0.0
        %1387 = vmatpush.msra.mxu0 0.0
        %1388 = vmatpush.msra.mxu0 0.0
        %1389 = vmatpush.msra.mxu0 0.0
        %1390 = vmatpush.msra.mxu0 0.0
        %1391 = vmatpush.msra.mxu0 0.0
        %1392 = vmatpush.msra.mxu0 %v721
        %1393 = vmatpush.msra.mxu0 %v720
        %1394 = vmatpush.msra.mxu0 %v719
        %1395 = vmatpush.msra.mxu0 %v718
        %1396 = vmatmul.f32.gmra.mxu0 %v1378
        %v1397 = vpop.f32.mrf.mxu0
        %v1398 = vadd.f32 0.0, %v1397
        %1399 = vdwg.mxu0
        %s1400 = scalar_lea.vmem [#allocation2], 32
        %v1401 = vld [vmem:[%s1400] sm:$0xff]
        %v1402 = vld [vmem:[%s1305] sm:$0xff]
        %v1403 = vadd.f32 %v1401, %v1398
        %v1404 = vxor.u32 %v1403, 2147483648
        %v1405 = vmul.f32 %v1404, 1.442695
        %v1406 = vpow.pop %v1405
        %v1407 = vadd.f32 %v1406, 1.0
        %v1408 = vrcp.pop %v1407
        %v1409 = vmul.f32 %v1407, %v1408
        %v1410 = vsub.f32 1.0, %v1409
        %v1411 = vmul.f32 %v1408, %v1410
        %v1412 = vadd.f32 %v1408, %v1411
        %vm1413 = vweird.f32 %v1407
        %vm1414 = vweird.f32 %v1408
        %vm1415 = vmor %vm1413, %vm1414
        %v1416 = vsel %vm1415, %v1408, %v1412
        %v1417 = vand.u32 2147483647, %v1407
        %vm1418 = vcmp.eq.f32.partialorder %v1417, 8.507059e+37
        %v1419 = vand.u32 %v1407, 2147483648
        %v1420 = vor.u32 1.1754944e-38, %v1419
        %v1421 = vsel %vm1418, %v1420, %v1416
        %v1422 = vmul.f32 1.0, %v1421
        %v1423 = vadd.f32 %v1398, %v771
        %1425 = vrot.lane.b32.xlu0 %v1423, 96
        %v1426 = vpop.permute.xlu0 %1425
        %v1428 = vmul.f32 %v1422, %v1426
        %1430 = vrot.lane.b32.xlu0 %v1428, 32
        %v1431 = vpop.permute.xlu0 %1430
        %v1433 = vadd.f32 %v1401, %v1431
        %v1434 = vtanh.pop %v1433
        %v1435 = vsub.f32 1.0, %v1422
        %1437 = vrot.lane.b32.xlu0 %v1434, 112
        %v1438 = vpop.permute.xlu0 %1437
        %v1440 = vmul.f32 %v1435, %v1438
        %v1441 = vmul.f32 %v1422, %v1295
        %v1442 = vadd.f32 %v1440, %v1441
        %1444 = vset.pattern.permute.xlu0 0
        %1445 = vperm.xlu0 %1444, %v1402
        %v1446 = vpop.permute.xlu0 %1445
        %v1448 = vmul.f32 %v1446, %v1442
        %v1449 = vsub.f32 1.0, %v1402
        %1451 = vset.pattern.permute.xlu0 0
        %1452 = vperm.xlu0 %1451, %v1449
        %v1453 = vpop.permute.xlu0 %1452
        %v1455 = vmul.f32 %v1453, %v1295
        %v1456 = vadd.f32 %v1448, %v1455
        %v1457 = vmul.f32 %v1456, %v1446
        %1459 = vrot.lane.b32.xlu0 %v1457, 112
        %v1460 = vpop.permute.xlu0 %1459
        %s1462 = scalar_lea.vmem [#allocation4], 32
        %1463 = vst.msk [vmem:[%s1462] sm:$0xff] %vm812, %v1460
        %s1464 = scalar_lea.vmem [#allocation3], 24
        %v1465 = vld [vmem:[%s1464] sm:$0xff]
        %v1466 = vld [vmem:[%s1240] sm:$0xff]
        %1468 = vrot.lane.b32.xlu0 %v1398, 80
        %v1469 = vpop.permute.xlu0 %1468
        %v1471 = vadd.f32 %v1465, %v1469
        %v1472 = vxor.u32 %v1471, 2147483648
        %v1473 = vmul.f32 %v1472, 1.442695
        %v1474 = vpow.pop %v1473
        %v1475 = vadd.f32 %v1474, 1.0
        %v1476 = vrcp.pop %v1475
        %v1477 = vmul.f32 %v1475, %v1476
        %v1478 = vsub.f32 1.0, %v1477
        %v1479 = vmul.f32 %v1476, %v1478
        %v1480 = vadd.f32 %v1476, %v1479
        %vm1481 = vweird.f32 %v1475
        %vm1482 = vweird.f32 %v1476
        %vm1483 = vmor %vm1481, %vm1482
        %v1484 = vsel %vm1483, %v1476, %v1480
        %v1485 = vand.u32 2147483647, %v1475
        %vm1486 = vcmp.eq.f32.partialorder %v1485, 8.507059e+37
        %v1487 = vand.u32 %v1475, 2147483648
        %v1488 = vor.u32 1.1754944e-38, %v1487
        %v1489 = vsel %vm1486, %v1488, %v1484
        %v1490 = vmul.f32 1.0, %v1489
        %v1491 = vadd.f32 %v1398, %v843
        %1493 = vrot.lane.b32.xlu0 %v1491, 48
        %v1494 = vpop.permute.xlu0 %1493
        %v1496 = vmul.f32 %v1490, %v1494
        %1498 = vrot.lane.b32.xlu0 %v1496, 32
        %v1499 = vpop.permute.xlu0 %1498
        %v1501 = vadd.f32 %v1465, %v1499
        %v1502 = vtanh.pop %v1501
        %v1503 = vsub.f32 1.0, %v1490
        %1505 = vrot.lane.b32.xlu0 %v1502, 112
        %v1506 = vpop.permute.xlu0 %1505
        %v1508 = vmul.f32 %v1503, %v1506
        %v1509 = vmul.f32 %v1490, %v1364
        %v1510 = vadd.f32 %v1508, %v1509
        %1512 = vset.pattern.permute.xlu0 0
        %1513 = vperm.xlu0 %1512, %v1466
        %v1514 = vpop.permute.xlu0 %1513
        %v1516 = vmul.f32 %v1514, %v1510
        %v1517 = vsub.f32 1.0, %v1466
        %1519 = vset.pattern.permute.xlu0 0
        %1520 = vperm.xlu0 %1519, %v1517
        %v1521 = vpop.permute.xlu0 %1520
        %v1523 = vmul.f32 %v1521, %v1364
        %v1524 = vadd.f32 %v1516, %v1523
        %v1525 = vmul.f32 %v1524, %v1514
        %1527 = vrot.lane.b32.xlu0 %v1525, 112
        %v1528 = vpop.permute.xlu0 %1527
        %s1530 = scalar_lea.vmem [#allocation5], 24
        %1531 = vst.msk [vmem:[%s1530] sm:$0xff] %vm812, %v1528
        %1533 = vrot.lane.b32.xlu0 %v1456, 112
        %v1534 = vpop.permute.xlu0 %1533
        %v1536 = vsel %vm812, %v1534, %v1524
        %v1538 = vsel %vm569, %v1536, 0
        %1540 = vmatpush.msra.mxu0 0.0
        %1541 = vmatpush.msra.mxu0 0.0
        %1542 = vmatpush.msra.mxu0 0.0
        %1543 = vmatpush.msra.mxu0 0.0
        %1544 = vmatpush.msra.mxu0 0.0
        %1545 = vmatpush.msra.mxu0 0.0
        %1546 = vmatpush.msra.mxu0 0.0
        %1547 = vmatpush.msra.mxu0 0.0
        %1548 = vmatpush.msra.mxu0 0.0
        %1549 = vmatpush.msra.mxu0 0.0
        %1550 = vmatpush.msra.mxu0 0.0
        %1551 = vmatpush.msra.mxu0 0.0
        %1552 = vmatpush.msra.mxu0 %v721
        %1553 = vmatpush.msra.mxu0 %v720
        %1554 = vmatpush.msra.mxu0 %v719
        %1555 = vmatpush.msra.mxu0 %v718
        %1556 = vmatmul.f32.gmra.mxu0 %v1538
        %v1557 = vpop.f32.mrf.mxu0
        %v1558 = vadd.f32 0.0, %v1557
        %1559 = vdwg.mxu0
        %s1560 = scalar_lea.vmem [#allocation2], 40
        %v1561 = vld [vmem:[%s1560] sm:$0xff]
        %v1562 = vld [vmem:[%s1143] sm:$0xff]
        %v1563 = vadd.f32 %v1561, %v1558
        %v1564 = vxor.u32 %v1563, 2147483648
        %v1565 = vmul.f32 %v1564, 1.442695
        %v1566 = vpow.pop %v1565
        %v1567 = vadd.f32 %v1566, 1.0
        %v1568 = vrcp.pop %v1567
        %v1569 = vmul.f32 %v1567, %v1568
        %v1570 = vsub.f32 1.0, %v1569
        %v1571 = vmul.f32 %v1568, %v1570
        %v1572 = vadd.f32 %v1568, %v1571
        %vm1573 = vweird.f32 %v1567
        %vm1574 = vweird.f32 %v1568
        %vm1575 = vmor %vm1573, %vm1574
        %v1576 = vsel %vm1575, %v1568, %v1572
        %v1577 = vand.u32 2147483647, %v1567
        %vm1578 = vcmp.eq.f32.partialorder %v1577, 8.507059e+37
        %v1579 = vand.u32 %v1567, 2147483648
        %v1580 = vor.u32 1.1754944e-38, %v1579
        %v1581 = vsel %vm1578, %v1580, %v1576
        %v1582 = vmul.f32 1.0, %v1581
        %v1583 = vadd.f32 %v1558, %v771
        %1585 = vrot.lane.b32.xlu0 %v1583, 96
        %v1586 = vpop.permute.xlu0 %1585
        %v1588 = vmul.f32 %v1582, %v1586
        %1590 = vrot.lane.b32.xlu0 %v1588, 32
        %v1591 = vpop.permute.xlu0 %1590
        %v1593 = vadd.f32 %v1561, %v1591
        %v1594 = vtanh.pop %v1593
        %v1595 = vsub.f32 1.0, %v1582
        %1597 = vrot.lane.b32.xlu0 %v1594, 112
        %v1598 = vpop.permute.xlu0 %1597
        %v1600 = vmul.f32 %v1595, %v1598
        %v1601 = vmul.f32 %v1582, %v1456
        %v1602 = vadd.f32 %v1600, %v1601
        %1604 = vset.pattern.permute.xlu0 0
        %1605 = vperm.xlu0 %1604, %v1562
        %v1606 = vpop.permute.xlu0 %1605
        %v1608 = vmul.f32 %v1606, %v1602
        %v1609 = vsub.f32 1.0, %v1562
        %1611 = vset.pattern.permute.xlu0 0
        %1612 = vperm.xlu0 %1611, %v1609
        %v1613 = vpop.permute.xlu0 %1612
        %v1615 = vmul.f32 %v1613, %v1456
        %v1616 = vadd.f32 %v1608, %v1615
        %v1617 = vmul.f32 %v1616, %v1606
        %1619 = vrot.lane.b32.xlu0 %v1617, 112
        %v1620 = vpop.permute.xlu0 %1619
        %s1622 = scalar_lea.vmem [#allocation4], 40
        %1623 = vst.msk [vmem:[%s1622] sm:$0xff] %vm812, %v1620
        %s1624 = scalar_lea.vmem [#allocation3], 16
        %v1625 = vld [vmem:[%s1624] sm:$0xff]
        %v1626 = vld [vmem:[%s1078] sm:$0xff]
        %1628 = vrot.lane.b32.xlu0 %v1558, 80
        %v1629 = vpop.permute.xlu0 %1628
        %v1631 = vadd.f32 %v1625, %v1629
        %v1632 = vxor.u32 %v1631, 2147483648
        %v1633 = vmul.f32 %v1632, 1.442695
        %v1634 = vpow.pop %v1633
        %v1635 = vadd.f32 %v1634, 1.0
        %v1636 = vrcp.pop %v1635
        %v1637 = vmul.f32 %v1635, %v1636
        %v1638 = vsub.f32 1.0, %v1637
        %v1639 = vmul.f32 %v1636, %v1638
        %v1640 = vadd.f32 %v1636, %v1639
        %vm1641 = vweird.f32 %v1635
        %vm1642 = vweird.f32 %v1636
        %vm1643 = vmor %vm1641, %vm1642
        %v1644 = vsel %vm1643, %v1636, %v1640
        %v1645 = vand.u32 2147483647, %v1635
        %vm1646 = vcmp.eq.f32.partialorder %v1645, 8.507059e+37
        %v1647 = vand.u32 %v1635, 2147483648
        %v1648 = vor.u32 1.1754944e-38, %v1647
        %v1649 = vsel %vm1646, %v1648, %v1644
        %v1650 = vmul.f32 1.0, %v1649
        %v1651 = vadd.f32 %v1558, %v843
        %1653 = vrot.lane.b32.xlu0 %v1651, 48
        %v1654 = vpop.permute.xlu0 %1653
        %v1656 = vmul.f32 %v1650, %v1654
        %1658 = vrot.lane.b32.xlu0 %v1656, 32
        %v1659 = vpop.permute.xlu0 %1658
        %v1661 = vadd.f32 %v1625, %v1659
        %v1662 = vtanh.pop %v1661
        %v1663 = vsub.f32 1.0, %v1650
        %1665 = vrot.lane.b32.xlu0 %v1662, 112
        %v1666 = vpop.permute.xlu0 %1665
        %v1668 = vmul.f32 %v1663, %v1666
        %v1669 = vmul.f32 %v1650, %v1524
        %v1670 = vadd.f32 %v1668, %v1669
        %1672 = vset.pattern.permute.xlu0 0
        %1673 = vperm.xlu0 %1672, %v1626
        %v1674 = vpop.permute.xlu0 %1673
        %v1676 = vmul.f32 %v1674, %v1670
        %v1677 = vsub.f32 1.0, %v1626
        %1679 = vset.pattern.permute.xlu0 0
        %1680 = vperm.xlu0 %1679, %v1677
        %v1681 = vpop.permute.xlu0 %1680
        %v1683 = vmul.f32 %v1681, %v1524
        %v1684 = vadd.f32 %v1676, %v1683
        %v1685 = vmul.f32 %v1684, %v1674
        %1687 = vrot.lane.b32.xlu0 %v1685, 112
        %v1688 = vpop.permute.xlu0 %1687
        %s1690 = scalar_lea.vmem [#allocation5], 16
        %1691 = vst.msk [vmem:[%s1690] sm:$0xff] %vm812, %v1688
        %1693 = vrot.lane.b32.xlu0 %v1616, 112
        %v1694 = vpop.permute.xlu0 %1693
        %v1696 = vsel %vm812, %v1694, %v1684
        %v1698 = vsel %vm569, %v1696, 0
        %1700 = vmatpush.msra.mxu0 0.0
        %1701 = vmatpush.msra.mxu0 0.0
        %1702 = vmatpush.msra.mxu0 0.0
        %1703 = vmatpush.msra.mxu0 0.0
        %1704 = vmatpush.msra.mxu0 0.0
        %1705 = vmatpush.msra.mxu0 0.0
        %1706 = vmatpush.msra.mxu0 0.0
        %1707 = vmatpush.msra.mxu0 0.0
        %1708 = vmatpush.msra.mxu0 0.0
        %1709 = vmatpush.msra.mxu0 0.0
        %1710 = vmatpush.msra.mxu0 0.0
        %1711 = vmatpush.msra.mxu0 0.0
        %1712 = vmatpush.msra.mxu0 %v721
        %1713 = vmatpush.msra.mxu0 %v720
        %1714 = vmatpush.msra.mxu0 %v719
        %1715 = vmatpush.msra.mxu0 %v718
        %1716 = vmatmul.f32.gmra.mxu0 %v1698
        %v1717 = vpop.f32.mrf.mxu0
        %v1718 = vadd.f32 0.0, %v1717
        %1719 = vdwg.mxu0
        %s1720 = scalar_lea.vmem [#allocation2], 48
        %v1721 = vld [vmem:[%s1720] sm:$0xff]
        %v1722 = vld [vmem:[%s981] sm:$0xff]
        %v1723 = vadd.f32 %v1721, %v1718
        %v1724 = vxor.u32 %v1723, 2147483648
        %v1725 = vmul.f32 %v1724, 1.442695
        %v1726 = vpow.pop %v1725
        %v1727 = vadd.f32 %v1726, 1.0
        %v1728 = vrcp.pop %v1727
        %v1729 = vmul.f32 %v1727, %v1728
        %v1730 = vsub.f32 1.0, %v1729
        %v1731 = vmul.f32 %v1728, %v1730
        %v1732 = vadd.f32 %v1728, %v1731
        %vm1733 = vweird.f32 %v1727
        %vm1734 = vweird.f32 %v1728
        %vm1735 = vmor %vm1733, %vm1734
        %v1736 = vsel %vm1735, %v1728, %v1732
        %v1737 = vand.u32 2147483647, %v1727
        %vm1738 = vcmp.eq.f32.partialorder %v1737, 8.507059e+37
        %v1739 = vand.u32 %v1727, 2147483648
        %v1740 = vor.u32 1.1754944e-38, %v1739
        %v1741 = vsel %vm1738, %v1740, %v1736
        %v1742 = vmul.f32 1.0, %v1741
        %v1743 = vadd.f32 %v1718, %v771
        %1745 = vrot.lane.b32.xlu0 %v1743, 96
        %v1746 = vpop.permute.xlu0 %1745
        %v1748 = vmul.f32 %v1742, %v1746
        %1750 = vrot.lane.b32.xlu0 %v1748, 32
        %v1751 = vpop.permute.xlu0 %1750
        %v1753 = vadd.f32 %v1721, %v1751
        %v1754 = vtanh.pop %v1753
        %v1755 = vsub.f32 1.0, %v1742
        %1757 = vrot.lane.b32.xlu0 %v1754, 112
        %v1758 = vpop.permute.xlu0 %1757
        %v1760 = vmul.f32 %v1755, %v1758
        %v1761 = vmul.f32 %v1742, %v1616
        %v1762 = vadd.f32 %v1760, %v1761
        %1764 = vset.pattern.permute.xlu0 0
        %1765 = vperm.xlu0 %1764, %v1722
        %v1766 = vpop.permute.xlu0 %1765
        %v1768 = vmul.f32 %v1766, %v1762
        %v1769 = vsub.f32 1.0, %v1722
        %1771 = vset.pattern.permute.xlu0 0
        %1772 = vperm.xlu0 %1771, %v1769
        %v1773 = vpop.permute.xlu0 %1772
        %v1775 = vmul.f32 %v1773, %v1616
        %v1776 = vadd.f32 %v1768, %v1775
        %v1777 = vmul.f32 %v1776, %v1766
        %1779 = vrot.lane.b32.xlu0 %v1777, 112
        %v1780 = vpop.permute.xlu0 %1779
        %s1782 = scalar_lea.vmem [#allocation4], 48
        %1783 = vst.msk [vmem:[%s1782] sm:$0xff] %vm812, %v1780
        %s1784 = scalar_lea.vmem [#allocation3], 8
        %v1785 = vld [vmem:[%s1784] sm:$0xff]
        %v1786 = vld [vmem:[%s916] sm:$0xff]
        %1788 = vrot.lane.b32.xlu0 %v1718, 80
        %v1789 = vpop.permute.xlu0 %1788
        %v1791 = vadd.f32 %v1785, %v1789
        %v1792 = vxor.u32 %v1791, 2147483648
        %v1793 = vmul.f32 %v1792, 1.442695
        %v1794 = vpow.pop %v1793
        %v1795 = vadd.f32 %v1794, 1.0
        %v1796 = vrcp.pop %v1795
        %v1797 = vmul.f32 %v1795, %v1796
        %v1798 = vsub.f32 1.0, %v1797
        %v1799 = vmul.f32 %v1796, %v1798
        %v1800 = vadd.f32 %v1796, %v1799
        %vm1801 = vweird.f32 %v1795
        %vm1802 = vweird.f32 %v1796
        %vm1803 = vmor %vm1801, %vm1802
        %v1804 = vsel %vm1803, %v1796, %v1800
        %v1805 = vand.u32 2147483647, %v1795
        %vm1806 = vcmp.eq.f32.partialorder %v1805, 8.507059e+37
        %v1807 = vand.u32 %v1795, 2147483648
        %v1808 = vor.u32 1.1754944e-38, %v1807
        %v1809 = vsel %vm1806, %v1808, %v1804
        %v1810 = vmul.f32 1.0, %v1809
        %v1811 = vadd.f32 %v1718, %v843
        %1813 = vrot.lane.b32.xlu0 %v1811, 48
        %v1814 = vpop.permute.xlu0 %1813
        %v1816 = vmul.f32 %v1810, %v1814
        %1818 = vrot.lane.b32.xlu0 %v1816, 32
        %v1819 = vpop.permute.xlu0 %1818
        %v1821 = vadd.f32 %v1785, %v1819
        %v1822 = vtanh.pop %v1821
        %v1823 = vsub.f32 1.0, %v1810
        %1825 = vrot.lane.b32.xlu0 %v1822, 112
        %v1826 = vpop.permute.xlu0 %1825
        %v1828 = vmul.f32 %v1823, %v1826
        %v1829 = vmul.f32 %v1810, %v1684
        %v1830 = vadd.f32 %v1828, %v1829
        %1832 = vset.pattern.permute.xlu0 0
        %1833 = vperm.xlu0 %1832, %v1786
        %v1834 = vpop.permute.xlu0 %1833
        %v1836 = vmul.f32 %v1834, %v1830
        %v1837 = vsub.f32 1.0, %v1786
        %1839 = vset.pattern.permute.xlu0 0
        %1840 = vperm.xlu0 %1839, %v1837
        %v1841 = vpop.permute.xlu0 %1840
        %v1843 = vmul.f32 %v1841, %v1684
        %v1844 = vadd.f32 %v1836, %v1843
        %v1845 = vmul.f32 %v1844, %v1834
        %1847 = vrot.lane.b32.xlu0 %v1845, 112
        %v1848 = vpop.permute.xlu0 %1847
        %s1850 = scalar_lea.vmem [#allocation5], 8
        %1851 = vst.msk [vmem:[%s1850] sm:$0xff] %vm812, %v1848
        %1853 = vrot.lane.b32.xlu0 %v1776, 112
        %v1854 = vpop.permute.xlu0 %1853
        %v1856 = vsel %vm812, %v1854, %v1844
        %v1858 = vsel %vm569, %v1856, 0
        %1860 = vmatpush.msra.mxu0 0.0
        %1861 = vmatpush.msra.mxu0 0.0
        %1862 = vmatpush.msra.mxu0 0.0
        %1863 = vmatpush.msra.mxu0 0.0
        %1864 = vmatpush.msra.mxu0 0.0
        %1865 = vmatpush.msra.mxu0 0.0
        %1866 = vmatpush.msra.mxu0 0.0
        %1867 = vmatpush.msra.mxu0 0.0
        %1868 = vmatpush.msra.mxu0 0.0
        %1869 = vmatpush.msra.mxu0 0.0
        %1870 = vmatpush.msra.mxu0 0.0
        %1871 = vmatpush.msra.mxu0 0.0
        %1872 = vmatpush.msra.mxu0 %v721
        %1873 = vmatpush.msra.mxu0 %v720
        %1874 = vmatpush.msra.mxu0 %v719
        %1875 = vmatpush.msra.mxu0 %v718
        %1876 = vmatmul.f32.gmra.mxu0 %v1858
        %v1877 = vpop.f32.mrf.mxu0
        %v1878 = vadd.f32 0.0, %v1877
        %1879 = vdwg.mxu0
        %s1880 = scalar_lea.vmem [#allocation2], 56
        %v1881 = vld [vmem:[%s1880] sm:$0xff]
        %v1882 = vld [vmem:[%s816] sm:$0xff]
        %v1883 = vadd.f32 %v1881, %v1878
        %v1884 = vxor.u32 %v1883, 2147483648
        %v1885 = vmul.f32 %v1884, 1.442695
        %v1886 = vpow.pop %v1885
        %v1887 = vadd.f32 %v1886, 1.0
        %v1888 = vrcp.pop %v1887
        %v1889 = vmul.f32 %v1887, %v1888
        %v1890 = vsub.f32 1.0, %v1889
        %v1891 = vmul.f32 %v1888, %v1890
        %v1892 = vadd.f32 %v1888, %v1891
        %vm1893 = vweird.f32 %v1887
        %vm1894 = vweird.f32 %v1888
        %vm1895 = vmor %vm1893, %vm1894
        %v1896 = vsel %vm1895, %v1888, %v1892
        %v1897 = vand.u32 2147483647, %v1887
        %vm1898 = vcmp.eq.f32.partialorder %v1897, 8.507059e+37
        %v1899 = vand.u32 %v1887, 2147483648
        %v1900 = vor.u32 1.1754944e-38, %v1899
        %v1901 = vsel %vm1898, %v1900, %v1896
        %v1902 = vmul.f32 1.0, %v1901
        %v1903 = vadd.f32 %v1878, %v771
        %1905 = vrot.lane.b32.xlu0 %v1903, 96
        %v1906 = vpop.permute.xlu0 %1905
        %v1908 = vmul.f32 %v1902, %v1906
        %1910 = vrot.lane.b32.xlu0 %v1908, 32
        %v1911 = vpop.permute.xlu0 %1910
        %v1913 = vadd.f32 %v1881, %v1911
        %v1914 = vtanh.pop %v1913
        %v1915 = vsub.f32 1.0, %v1902
        %1917 = vrot.lane.b32.xlu0 %v1914, 112
        %v1918 = vpop.permute.xlu0 %1917
        %v1920 = vmul.f32 %v1915, %v1918
        %v1921 = vmul.f32 %v1902, %v1776
        %v1922 = vadd.f32 %v1920, %v1921
        %1924 = vset.pattern.permute.xlu0 0
        %1925 = vperm.xlu0 %1924, %v1882
        %v1926 = vpop.permute.xlu0 %1925
        %v1928 = vmul.f32 %v1926, %v1922
        %v1929 = vsub.f32 1.0, %v1882
        %1931 = vset.pattern.permute.xlu0 0
        %1932 = vperm.xlu0 %1931, %v1929
        %v1933 = vpop.permute.xlu0 %1932
        %v1935 = vmul.f32 %v1933, %v1776
        %v1936 = vadd.f32 %v1928, %v1935
        %v1937 = vmul.f32 %v1936, %v1926
        %1939 = vrot.lane.b32.xlu0 %v1937, 112
        %v1940 = vpop.permute.xlu0 %1939
        %s1942 = scalar_lea.vmem [#allocation4], 56
        %1943 = vst.msk [vmem:[%s1942] sm:$0xff] %vm812, %v1940
        %v1944 = vld [vmem:[#allocation3] sm:$0xff]
        %v1945 = vld [vmem:[#allocation6] sm:$0xff]
        %1947 = vrot.lane.b32.xlu0 %v1878, 80
        %v1948 = vpop.permute.xlu0 %1947
        %v1950 = vadd.f32 %v1944, %v1948
        %v1951 = vxor.u32 %v1950, 2147483648
        %v1952 = vmul.f32 %v1951, 1.442695
        %v1953 = vpow.pop %v1952
        %v1954 = vadd.f32 %v1953, 1.0
        %v1955 = vrcp.pop %v1954
        %v1956 = vmul.f32 %v1954, %v1955
        %v1957 = vsub.f32 1.0, %v1956
        %v1958 = vmul.f32 %v1955, %v1957
        %v1959 = vadd.f32 %v1955, %v1958
        %vm1960 = vweird.f32 %v1954
        %vm1961 = vweird.f32 %v1955
        %vm1962 = vmor %vm1960, %vm1961
        %v1963 = vsel %vm1962, %v1955, %v1959
        %v1964 = vand.u32 2147483647, %v1954
        %vm1965 = vcmp.eq.f32.partialorder %v1964, 8.507059e+37
        %v1966 = vand.u32 %v1954, 2147483648
        %v1967 = vor.u32 1.1754944e-38, %v1966
        %v1968 = vsel %vm1965, %v1967, %v1963
        %v1969 = vmul.f32 1.0, %v1968
        %v1970 = vadd.f32 %v1878, %v843
        %1972 = vrot.lane.b32.xlu0 %v1970, 48
        %v1973 = vpop.permute.xlu0 %1972
        %v1975 = vmul.f32 %v1969, %v1973
        %1977 = vrot.lane.b32.xlu0 %v1975, 32
        %v1978 = vpop.permute.xlu0 %1977
        %v1980 = vadd.f32 %v1944, %v1978
        %v1981 = vtanh.pop %v1980
        %v1982 = vsub.f32 1.0, %v1969
        %1984 = vrot.lane.b32.xlu0 %v1981, 112
        %v1985 = vpop.permute.xlu0 %1984
        %v1987 = vmul.f32 %v1982, %v1985
        %v1988 = vmul.f32 %v1969, %v1844
        %v1989 = vadd.f32 %v1987, %v1988
        %1991 = vset.pattern.permute.xlu0 0
        %1992 = vperm.xlu0 %1991, %v1945
        %v1993 = vpop.permute.xlu0 %1992
        %v1995 = vmul.f32 %v1993, %v1989
        %v1996 = vsub.f32 1.0, %v1945
        %1998 = vset.pattern.permute.xlu0 0
        %1999 = vperm.xlu0 %1998, %v1996
        %v2000 = vpop.permute.xlu0 %1999
        %v2002 = vmul.f32 %v2000, %v1844
        %v2003 = vadd.f32 %v1995, %v2002
        %v2004 = vmul.f32 %v2003, %v1993
        %2006 = vrot.lane.b32.xlu0 %v2004, 112
        %v2007 = vpop.permute.xlu0 %2006
        %2009 = vst.msk [vmem:[#allocation5] sm:$0xff] %vm812, %v2007
        %v2010 = vld [vmem:[#allocation4] sm:$0xff]
        %v2011 = vld [vmem:[#allocation4 + $0x8] sm:$0xff]
        %v2012 = vld [vmem:[#allocation4 + $0x10] sm:$0xff]
        %v2013 = vld [vmem:[#allocation4 + $0x18] sm:$0xff]
        %v2014 = vld [vmem:[#allocation4 + $0x20] sm:$0xff]
        %v2015 = vld [vmem:[#allocation4 + $0x28] sm:$0xff]
        %v2016 = vld [vmem:[#allocation4 + $0x30] sm:$0xff]
        %v2017 = vld [vmem:[#allocation4 + $0x38] sm:$0xff]
        %v2018 = vld [vmem:[#allocation5] sm:$0xff]
        %v2019 = vld [vmem:[#allocation5 + $0x8] sm:$0xff]
        %v2020 = vld [vmem:[#allocation5 + $0x10] sm:$0xff]
        %v2021 = vld [vmem:[#allocation5 + $0x18] sm:$0xff]
        %v2022 = vld [vmem:[#allocation5 + $0x20] sm:$0xff]
        %v2023 = vld [vmem:[#allocation5 + $0x28] sm:$0xff]
        %v2024 = vld [vmem:[#allocation5 + $0x30] sm:$0xff]
        %v2025 = vld [vmem:[#allocation5 + $0x38] sm:$0xff]
        %2034 = vrot.lane.b32.xlu0 %v2018, 16
        %v2035 = vpop.permute.xlu0 %2034
        %2036 = vrot.lane.b32.xlu0 %v2019, 16
        %v2037 = vpop.permute.xlu0 %2036
        %2038 = vrot.lane.b32.xlu0 %v2020, 16
        %v2039 = vpop.permute.xlu0 %2038
        %2040 = vrot.lane.b32.xlu0 %v2021, 16
        %v2041 = vpop.permute.xlu0 %2040
        %2042 = vrot.lane.b32.xlu0 %v2022, 16
        %v2043 = vpop.permute.xlu0 %2042
        %2044 = vrot.lane.b32.xlu0 %v2023, 16
        %v2045 = vpop.permute.xlu0 %2044
        %2046 = vrot.lane.b32.xlu0 %v2024, 16
        %v2047 = vpop.permute.xlu0 %2046
        %2048 = vrot.lane.b32.xlu0 %v2025, 16
        %v2049 = vpop.permute.xlu0 %2048
        %v2058 = vsel %vm812, %v2010, %v2035
        %v2059 = vsel %vm812, %v2011, %v2037
        %v2060 = vsel %vm812, %v2012, %v2039
        %v2061 = vsel %vm812, %v2013, %v2041
        %v2062 = vsel %vm812, %v2014, %v2043
        %v2063 = vsel %vm812, %v2015, %v2045
        %v2064 = vsel %vm812, %v2016, %v2047
        %v2065 = vsel %vm812, %v2017, %v2049
        %v2066 = vld [vmem:[%s6] sm:$0xff]
        %v2067 = vld [vmem:[%s6 + $0x8] sm:$0xff]
        %v2068 = vld [vmem:[%s6 + $0x10] sm:$0xff]
        %v2069 = vld [vmem:[%s6 + $0x18] sm:$0xff]
        %v2070 = vld [vmem:[%s7] sm:$0x1]
        %v2072 = vperm.slane %v2070, 0
        %v2075 = vsel %vm569, %v2058, 0
        %v2078 = vsel %vm569, %v2059, 0
        %v2081 = vsel %vm569, %v2060, 0
        %v2084 = vsel %vm569, %v2061, 0
        %v2087 = vsel %vm569, %v2062, 0
        %v2090 = vsel %vm569, %v2063, 0
        %v2093 = vsel %vm569, %v2064, 0
        %v2096 = vsel %vm569, %v2065, 0
        %2098 = vmatpush.msra.mxu0 0.0
        %2099 = vmatpush.msra.mxu0 0.0
        %2100 = vmatpush.msra.mxu0 0.0
        %2101 = vmatpush.msra.mxu0 0.0
        %2102 = vmatpush.msra.mxu0 0.0
        %2103 = vmatpush.msra.mxu0 0.0
        %2104 = vmatpush.msra.mxu0 0.0
        %2105 = vmatpush.msra.mxu0 0.0
        %2106 = vmatpush.msra.mxu0 0.0
        %2107 = vmatpush.msra.mxu0 0.0
        %2108 = vmatpush.msra.mxu0 0.0
        %2109 = vmatpush.msra.mxu0 0.0
        %2110 = vmatpush.msra.mxu0 %v2069
        %2111 = vmatpush.msra.mxu0 %v2068
        %2112 = vmatpush.msra.mxu0 %v2067
        %2113 = vmatpush.msra.mxu0 %v2066
        %2114 = vmatmul.f32.gmra.mxu0 %v2075
        %v2115 = vpop.f32.mrf.mxu0
        %v2116 = vadd.f32 %v2072, %v2115
        %2117 = vmatmul.f32.gmra.mxu0 %v2078
        %v2118 = vpop.f32.mrf.mxu0
        %v2119 = vadd.f32 %v2072, %v2118
        %2120 = vmatmul.f32.gmra.mxu0 %v2081
        %v2121 = vpop.f32.mrf.mxu0
        %v2122 = vadd.f32 %v2072, %v2121
        %2123 = vmatmul.f32.gmra.mxu0 %v2084
        %v2124 = vpop.f32.mrf.mxu0
        %v2125 = vadd.f32 %v2072, %v2124
        %2126 = vmatmul.f32.gmra.mxu0 %v2087
        %v2127 = vpop.f32.mrf.mxu0
        %v2128 = vadd.f32 %v2072, %v2127
        %2129 = vmatmul.f32.gmra.mxu0 %v2090
        %v2130 = vpop.f32.mrf.mxu0
        %v2131 = vadd.f32 %v2072, %v2130
        %2132 = vmatmul.f32.gmra.mxu0 %v2093
        %v2133 = vpop.f32.mrf.mxu0
        %v2134 = vadd.f32 %v2072, %v2133
        %2135 = vmatmul.f32.gmra.mxu0 %v2096
        %v2136 = vpop.f32.mrf.mxu0
        %v2137 = vadd.f32 %v2072, %v2136
        %2138 = vdwg.mxu0
        %v2139 = vtanh.pop %v2116
        %v2140 = vtanh.pop %v2119
        %v2141 = vtanh.pop %v2122
        %v2142 = vtanh.pop %v2125
        %v2143 = vtanh.pop %v2128
        %v2144 = vtanh.pop %v2131
        %v2145 = vtanh.pop %v2134
        %v2146 = vtanh.pop %v2137
        %v2147 = vld [vmem:[%s8] sm:$0xff]
        %v2148 = vld [vmem:[%s8 + $0x8] sm:$0xff]
        %v2149 = vld [vmem:[%s8 + $0x10] sm:$0xff]
        %v2150 = vld [vmem:[%s8 + $0x18] sm:$0xff]
        %v2152 = vsel %vm569, %v2139, 0
        %v2155 = vsel %vm569, %v2140, 0
        %v2158 = vsel %vm569, %v2141, 0
        %v2161 = vsel %vm569, %v2142, 0
        %v2164 = vsel %vm569, %v2143, 0
        %v2167 = vsel %vm569, %v2144, 0
        %v2170 = vsel %vm569, %v2145, 0
        %v2173 = vsel %vm569, %v2146, 0
        %2175 = vmatpush.msra.mxu0 0.0
        %2176 = vmatpush.msra.mxu0 0.0
        %2177 = vmatpush.msra.mxu0 0.0
        %2178 = vmatpush.msra.mxu0 0.0
        %2179 = vmatpush.msra.mxu0 0.0
        %2180 = vmatpush.msra.mxu0 0.0
        %2181 = vmatpush.msra.mxu0 0.0
        %2182 = vmatpush.msra.mxu0 0.0
        %2183 = vmatpush.msra.mxu0 0.0
        %2184 = vmatpush.msra.mxu0 0.0
        %2185 = vmatpush.msra.mxu0 0.0
        %2186 = vmatpush.msra.mxu0 0.0
        %2187 = vmatpush.msra.mxu0 %v2150
        %2188 = vmatpush.msra.mxu0 %v2149
        %2189 = vmatpush.msra.mxu0 %v2148
        %2190 = vmatpush.msra.mxu0 %v2147
        %2191 = vmatmul.f32.gmra.mxu0 %v2152
        %v2192 = vpop.f32.mrf.mxu0
        %v2193 = vadd.f32 0.0, %v2192
        %2194 = vmatmul.f32.gmra.mxu0 %v2155
        %v2195 = vpop.f32.mrf.mxu0
        %v2196 = vadd.f32 0.0, %v2195
        %2197 = vmatmul.f32.gmra.mxu0 %v2158
        %v2198 = vpop.f32.mrf.mxu0
        %v2199 = vadd.f32 0.0, %v2198
        %2200 = vmatmul.f32.gmra.mxu0 %v2161
        %v2201 = vpop.f32.mrf.mxu0
        %v2202 = vadd.f32 0.0, %v2201
        %2203 = vmatmul.f32.gmra.mxu0 %v2164
        %v2204 = vpop.f32.mrf.mxu0
        %v2205 = vadd.f32 0.0, %v2204
        %2206 = vmatmul.f32.gmra.mxu0 %v2167
        %v2207 = vpop.f32.mrf.mxu0
        %v2208 = vadd.f32 0.0, %v2207
        %2209 = vmatmul.f32.gmra.mxu0 %v2170
        %v2210 = vpop.f32.mrf.mxu0
        %v2211 = vadd.f32 0.0, %v2210
        %2212 = vmatmul.f32.gmra.mxu0 %v2173
        %v2213 = vpop.f32.mrf.mxu0
        %v2214 = vadd.f32 0.0, %v2213
        %2215 = vdwg.mxu0
        %v2216 = vld [vmem:[#allocation6] sm:$0xff]
        %v2217 = vld [vmem:[#allocation6 + $0x8] sm:$0xff]
        %v2218 = vld [vmem:[#allocation6 + $0x10] sm:$0xff]
        %v2219 = vld [vmem:[#allocation6 + $0x18] sm:$0xff]
        %v2220 = vld [vmem:[#allocation6 + $0x20] sm:$0xff]
        %v2221 = vld [vmem:[#allocation6 + $0x28] sm:$0xff]
        %v2222 = vld [vmem:[#allocation6 + $0x30] sm:$0xff]
        %v2223 = vld [vmem:[#allocation6 + $0x38] sm:$0xff]
        %vm2224 = vcmp.gt.f32.partialorder %v2216, 0.5
        %vm2225 = vcmp.gt.f32.partialorder %v2217, 0.5
        %vm2226 = vcmp.gt.f32.partialorder %v2218, 0.5
        %vm2227 = vcmp.gt.f32.partialorder %v2219, 0.5
        %vm2228 = vcmp.gt.f32.partialorder %v2220, 0.5
        %vm2229 = vcmp.gt.f32.partialorder %v2221, 0.5
        %vm2230 = vcmp.gt.f32.partialorder %v2222, 0.5
        %vm2231 = vcmp.gt.f32.partialorder %v2223, 0.5
        %v2232 = vsel %vm2224, %v2193, -1e+30
        %v2233 = vsel %vm2225, %v2196, -1e+30
        %v2234 = vsel %vm2226, %v2199, -1e+30
        %v2235 = vsel %vm2227, %v2202, -1e+30
        %v2236 = vsel %vm2228, %v2205, -1e+30
        %v2237 = vsel %vm2229, %v2208, -1e+30
        %v2238 = vsel %vm2230, %v2211, -1e+30
        %v2239 = vsel %vm2231, %v2214, -1e+30
        %v2240 = vsel %vm709, %v2232, -inf
        %v2241 = vsel %vm709, %v2233, -inf
        %v2242 = vsel %vm709, %v2234, -inf
        %v2243 = vsel %vm709, %v2235, -inf
        %v2244 = vsel %vm709, %v2236, -inf
        %v2245 = vmax.f32 %v2240, %v2244
        %v2246 = vsel %vm709, %v2237, -inf
        %v2247 = vmax.f32 %v2241, %v2246
        %v2248 = vsel %vm709, %v2238, -inf
        %v2249 = vmax.f32 %v2242, %v2248
        %v2250 = vsel %vm709, %v2239, -inf
        %v2251 = vmax.f32 %v2243, %v2250
        %v2252 = vmax.f32 %v2245, %v2247
        %v2253 = vmax.f32 %v2249, %v2251
        %v2254 = vmax.f32 %v2252, %v2253
        %v2255 = vsub.f32 %v2193, %v2254
        %v2256 = vsub.f32 %v2196, %v2254
        %v2257 = vsub.f32 %v2199, %v2254
        %v2258 = vsub.f32 %v2202, %v2254
        %v2259 = vsub.f32 %v2205, %v2254
        %v2260 = vsub.f32 %v2208, %v2254
        %v2261 = vsub.f32 %v2211, %v2254
        %v2262 = vsub.f32 %v2214, %v2254
        %v2263 = vmin.f32 %v2255, 0.0
        %v2264 = vmin.f32 %v2256, 0.0
        %v2265 = vmin.f32 %v2257, 0.0
        %v2266 = vmin.f32 %v2258, 0.0
        %v2267 = vmin.f32 %v2259, 0.0
        %v2268 = vmin.f32 %v2260, 0.0
        %v2269 = vmin.f32 %v2261, 0.0
        %v2270 = vmin.f32 %v2262, 0.0
        %v2271 = vmul.f32 %v2263, 1.442695
        %v2272 = vpow.pop %v2271
        %v2273 = vmul.f32 %v2264, 1.442695
        %v2274 = vpow.pop %v2273
        %v2275 = vmul.f32 %v2265, 1.442695
        %v2276 = vpow.pop %v2275
        %v2277 = vmul.f32 %v2266, 1.442695
        %v2278 = vpow.pop %v2277
        %v2279 = vmul.f32 %v2267, 1.442695
        %v2280 = vpow.pop %v2279
        %v2281 = vmul.f32 %v2268, 1.442695
        %v2282 = vpow.pop %v2281
        %v2283 = vmul.f32 %v2269, 1.442695
        %v2284 = vpow.pop %v2283
        %v2285 = vmul.f32 %v2270, 1.442695
        %v2286 = vpow.pop %v2285
        %v2287 = vmul.f32 %v2272, %v2216
        %v2288 = vmul.f32 %v2274, %v2217
        %v2289 = vmul.f32 %v2276, %v2218
        %v2290 = vmul.f32 %v2278, %v2219
        %v2291 = vmul.f32 %v2280, %v2220
        %v2292 = vmul.f32 %v2282, %v2221
        %v2293 = vmul.f32 %v2284, %v2222
        %v2294 = vmul.f32 %v2286, %v2223
        %v2295 = vsel %vm709, %v2287, 0.0
        %v2296 = vsel %vm709, %v2288, 0.0
        %v2297 = vadd.f32 %v2295, %v2296
        %v2298 = vsel %vm709, %v2289, 0.0
        %v2299 = vadd.f32 %v2297, %v2298
        %v2300 = vsel %vm709, %v2290, 0.0
        %v2301 = vadd.f32 %v2299, %v2300
        %v2302 = vsel %vm709, %v2291, 0.0
        %v2303 = vadd.f32 %v2301, %v2302
        %v2304 = vsel %vm709, %v2292, 0.0
        %v2305 = vadd.f32 %v2303, %v2304
        %v2306 = vsel %vm709, %v2293, 0.0
        %v2307 = vadd.f32 %v2305, %v2306
        %v2308 = vsel %vm709, %v2294, 0.0
        %v2309 = vadd.f32 %v2307, %v2308
        %v2310 = vrcp.pop %v2309
        %v2311 = vmul.f32 %v2309, %v2310
        %v2312 = vsub.f32 1.0, %v2311
        %v2313 = vmul.f32 %v2310, %v2312
        %v2314 = vadd.f32 %v2310, %v2313
        %vm2315 = vweird.f32 %v2309
        %vm2316 = vweird.f32 %v2310
        %vm2317 = vmor %vm2315, %vm2316
        %v2318 = vsel %vm2317, %v2310, %v2314
        %v2319 = vand.u32 2147483647, %v2309
        %vm2320 = vcmp.eq.f32.partialorder %v2319, 8.507059e+37
        %v2321 = vand.u32 %v2309, 2147483648
        %v2322 = vor.u32 1.1754944e-38, %v2321
        %v2323 = vsel %vm2320, %v2322, %v2318
        %v2324 = vmul.f32 %v2287, %v2323
        %v2325 = vmul.f32 %v2288, %v2323
        %v2326 = vmul.f32 %v2289, %v2323
        %v2327 = vmul.f32 %v2290, %v2323
        %v2328 = vmul.f32 %v2291, %v2323
        %v2329 = vmul.f32 %v2292, %v2323
        %v2330 = vmul.f32 %v2293, %v2323
        %v2331 = vmul.f32 %v2294, %v2323
        %2332 = vst.msk [vmem:[%s544] sm:$0xff] %vm709, %v2324
        %2333 = vst.msk [vmem:[%s544 + $0x8] sm:$0xff] %vm709, %v2325
        %2334 = vst.msk [vmem:[%s544 + $0x10] sm:$0xff] %vm709, %v2326
        %2335 = vst.msk [vmem:[%s544 + $0x18] sm:$0xff] %vm709, %v2327
        %2336 = vst.msk [vmem:[%s544 + $0x20] sm:$0xff] %vm709, %v2328
        %2337 = vst.msk [vmem:[%s544 + $0x28] sm:$0xff] %vm709, %v2329
        %2338 = vst.msk [vmem:[%s544 + $0x30] sm:$0xff] %vm709, %v2330
        %2339 = vst.msk [vmem:[%s544 + $0x38] sm:$0xff] %vm709, %v2331
        %2341 = vset.pattern.permute.xlu0 0
        %2342 = vperm.xlu0 %2341, %v2324
        %v2343 = vpop.permute.xlu0 %2342
        %2346 = vset.pattern.permute.xlu0 0
        %2347 = vperm.xlu0 %2346, %v2325
        %v2348 = vpop.permute.xlu0 %2347
        %2351 = vset.pattern.permute.xlu0 0
        %2352 = vperm.xlu0 %2351, %v2326
        %v2353 = vpop.permute.xlu0 %2352
        %2356 = vset.pattern.permute.xlu0 0
        %2357 = vperm.xlu0 %2356, %v2327
        %v2358 = vpop.permute.xlu0 %2357
        %2361 = vset.pattern.permute.xlu0 0
        %2362 = vperm.xlu0 %2361, %v2328
        %v2363 = vpop.permute.xlu0 %2362
        %2366 = vset.pattern.permute.xlu0 0
        %2367 = vperm.xlu0 %2366, %v2329
        %v2368 = vpop.permute.xlu0 %2367
        %2371 = vset.pattern.permute.xlu0 0
        %2372 = vperm.xlu0 %2371, %v2330
        %v2373 = vpop.permute.xlu0 %2372
        %2376 = vset.pattern.permute.xlu0 0
        %2377 = vperm.xlu0 %2376, %v2331
        %v2378 = vpop.permute.xlu0 %2377
        %v2380 = vmul.f32 %v2058, %v2343
        %v2381 = vmul.f32 %v2059, %v2348
        %v2382 = vmul.f32 %v2060, %v2353
        %v2383 = vmul.f32 %v2061, %v2358
        %v2384 = vmul.f32 %v2062, %v2363
        %v2385 = vmul.f32 %v2063, %v2368
        %v2386 = vmul.f32 %v2064, %v2373
        %v2387 = vmul.f32 %v2065, %v2378
        %v2388 = vsel %vm569, %v2380, 0.0
        %v2389 = vsel %vm569, %v2381, 0.0
        %v2390 = vadd.f32 %v2388, %v2389
        %v2391 = vsel %vm569, %v2382, 0.0
        %v2392 = vadd.f32 %v2390, %v2391
        %v2393 = vsel %vm569, %v2383, 0.0
        %v2394 = vadd.f32 %v2392, %v2393
        %v2395 = vsel %vm569, %v2384, 0.0
        %v2396 = vadd.f32 %v2394, %v2395
        %v2397 = vsel %vm569, %v2385, 0.0
        %v2398 = vadd.f32 %v2396, %v2397
        %v2399 = vsel %vm569, %v2386, 0.0
        %v2400 = vadd.f32 %v2398, %v2399
        %v2401 = vsel %vm569, %v2387, 0.0
        %v2402 = vadd.f32 %v2400, %v2401
        %v2403 = vld [vmem:[%s9] sm:$0xff]
        %v2404 = vld [vmem:[%s9 + $0x8] sm:$0xff]
        %v2405 = vld [vmem:[%s9 + $0x10] sm:$0xff]
        %v2406 = vld [vmem:[%s9 + $0x18] sm:$0xff]
        %v2407 = vld [vmem:[%s10] sm:$0x1]
        %v2409 = vperm.slane %v2407, 0
        %v2412 = vsel %vm569, %v2402, 0
        %2414 = vmatpush.msra.mxu0 0.0
        %2415 = vmatpush.msra.mxu0 0.0
        %2416 = vmatpush.msra.mxu0 0.0
        %2417 = vmatpush.msra.mxu0 0.0
        %2418 = vmatpush.msra.mxu0 0.0
        %2419 = vmatpush.msra.mxu0 0.0
        %2420 = vmatpush.msra.mxu0 0.0
        %2421 = vmatpush.msra.mxu0 0.0
        %2422 = vmatpush.msra.mxu0 0.0
        %2423 = vmatpush.msra.mxu0 0.0
        %2424 = vmatpush.msra.mxu0 0.0
        %2425 = vmatpush.msra.mxu0 0.0
        %2426 = vmatpush.msra.mxu0 %v2406
        %2427 = vmatpush.msra.mxu0 %v2405
        %2428 = vmatpush.msra.mxu0 %v2404
        %2429 = vmatpush.msra.mxu0 %v2403
        %2430 = vmatmul.f32.gmra.mxu0 %v2412
        %v2431 = vpop.f32.mrf.mxu0
        %v2432 = vadd.f32 %v2409, %v2431
        %2433 = vdwg.mxu0
        %v2434 = vld [vmem:[%s11] sm:$0xff]
        %v2435 = vld [vmem:[%s11 + $0x8] sm:$0xff]
        %v2436 = vld [vmem:[%s11 + $0x10] sm:$0xff]
        %v2437 = vld [vmem:[%s11 + $0x18] sm:$0xff]
        %v2438 = vld [vmem:[%s11 + $0x20] sm:$0xff]
        %v2439 = vld [vmem:[%s11 + $0x28] sm:$0xff]
        %v2440 = vld [vmem:[%s11 + $0x30] sm:$0xff]
        %v2441 = vld [vmem:[%s11 + $0x38] sm:$0xff]
        %v2442 = vld [vmem:[%s12] sm:$0x1]
        %v2444 = vperm.slane %v2442, 0
        %vm2446 = vcmask 523264
        %v2448 = vsel %vm2446, %v2432, 0
        %2450 = vmatpush.msra.mxu0 0.0
        %2451 = vmatpush.msra.mxu0 0.0
        %2452 = vmatpush.msra.mxu0 0.0
        %2453 = vmatpush.msra.mxu0 0.0
        %2454 = vmatpush.msra.mxu0 0.0
        %2455 = vmatpush.msra.mxu0 0.0
        %2456 = vmatpush.msra.mxu0 0.0
        %2457 = vmatpush.msra.mxu0 0.0
        %2458 = vmatpush.msra.mxu0 %v2441
        %2459 = vmatpush.msra.mxu0 %v2440
        %2460 = vmatpush.msra.mxu0 %v2439
        %2461 = vmatpush.msra.mxu0 %v2438
        %2462 = vmatpush.msra.mxu0 %v2437
        %2463 = vmatpush.msra.mxu0 %v2436
        %2464 = vmatpush.msra.mxu0 %v2435
        %2465 = vmatpush.msra.mxu0 %v2434
        %2466 = vmatmul.f32.gmra.mxu0 %v2448
        %v2467 = vpop.f32.mrf.mxu0
        %v2468 = vadd.f32 %v2444, %v2467
        %2469 = vdwg.mxu0
        %vm2470 = vcmask 15360
        %2471 = vst.msk [vmem:[%s552] sm:$0xff] %vm2470, %v2468
        %p2472 = scmp.lt.s32.totalorder %s26, 1
        %s2473 = scalar_select %p2472, %s26, 1
        %s2474 = smul.addr %s2473, 8
        %s2475 = scalar_lea.vmem %s13, %s2474
        %s2476 = sand.u32 %s343, 1
        %s2477 = sand.u32 %s343, 1
        %s2478 = smul.addr %s2477, 64
        %s2479 = scalar_lea.vmem [#allocation8], %s2478
        // Predicated region
        $region111: #{word_attention_forward.1} parent=105 // pred_check
          %p2480 = pneg %p327
        $region112: #{word_attention_forward.1} parent=105 // pred_check_branch
          %2482 = sbr.rel (%p2480) target = $region114
        $region113: #{word_attention_forward.1} parent=105 // pred_region
          _
        $region114: #{word_attention_forward.1} parent=105 // pred_fallthru
          _
        // Predicated region
        $region115: #{word_attention_forward.1} parent=105 // pred_check
          %p2483 = pneg %p353
        $region116: #{word_attention_forward.1} parent=105 // pred_check_branch
          %2485 = sbr.rel (%p2483) target = $region118
        $region117: #{word_attention_forward.1} parent=105 // pred_region
          %s2486 = smul.addr %s26, 8
          %s2487 = scalar_lea.vmem %s14, %s2486
          // Predicated region
          $region119: #{word_attention_forward.1} parent=117 // pred_check
            _
          $region120: #{word_attention_forward.1} parent=117 // pred_check_branch
            %2489 = sbr.rel (0) target = $region122
          $region121: #{word_attention_forward.1} parent=117 // pred_region
            // Predicated region
            $region123: #{word_attention_forward.1} parent=121 // pred_check
              _
            $region124: #{word_attention_forward.1} parent=121 // pred_check_branch
              %2491 = sbr.rel (0) target = $region126
            $region125: #{word_attention_forward.1} parent=121 // pred_region
              // Predicated region
              $region138: #{word_attention_forward.1} parent=125 // pred_check
                _
              $region139: #{word_attention_forward.1} parent=125 // pred_check_branch
                %2521 = sbr.rel (0) target = $region141
              $region140: #{word_attention_forward.1} parent=125 // pred_region
                loop: start=0, step=1, limit=1
                $region142: #{word_attention_forward.1} parent=140 // loop_pre_header
                  _
                $region143: #{word_attention_forward.1} parent=140 // loop_header
                  %s2523 = sphi 0, %s2527
                  %p2524 = scmp.ge.s32.totalorder %s2523, 1
                  %s2528 = sphi %s2479, %s2479
                  %s2529 = sphi %s2487, %s2487
                $region144: #{word_attention_forward.1} parent=140 // loop_header_branch
                  %2526 = sbr.rel (%p2524) target = $region148
                $region145: #{word_attention_forward.1} parent=140 // loop_body
                  %v2530 = vld [vmem:[%s2528] sm:$0xff]
                  %2531 = vst [vmem:[%s2529] sm:$0xff] %v2530
                  %v2532 = vld [vmem:[%s2528 + $0x8] sm:$0xff]
                  %2533 = vst [vmem:[%s2529 + $0x10] sm:$0xff] %v2532
                  %v2534 = vld [vmem:[%s2528 + $0x10] sm:$0xff]
                  %2535 = vst [vmem:[%s2529 + $0x20] sm:$0xff] %v2534
                  %v2536 = vld [vmem:[%s2528 + $0x18] sm:$0xff]
                  %2537 = vst [vmem:[%s2529 + $0x30] sm:$0xff] %v2536
                  %v2538 = vld [vmem:[%s2528 + $0x20] sm:$0xff]
                  %2539 = vst [vmem:[%s2529 + $0x40] sm:$0xff] %v2538
                  %v2540 = vld [vmem:[%s2528 + $0x28] sm:$0xff]
                  %2541 = vst [vmem:[%s2529 + $0x50] sm:$0xff] %v2540
                  %v2542 = vld [vmem:[%s2528 + $0x30] sm:$0xff]
                  %2543 = vst [vmem:[%s2529 + $0x60] sm:$0xff] %v2542
                  %v2544 = vld [vmem:[%s2528 + $0x38] sm:$0xff]
                  %2545 = vst [vmem:[%s2529 + $0x70] sm:$0xff] %v2544
                $region146: #{word_attention_forward.1} parent=140 // loop_footer
                  %s2527 = sadd.s32 1, %s2523
                $region147: #{word_attention_forward.1} parent=140 // loop_footer_branch
                  %2522 = sbr.rel target = $region143
                $region148: #{word_attention_forward.1} parent=140 // loop_exit
                  _
              $region141: #{word_attention_forward.1} parent=125 // pred_fallthru
                _
              // Predicated region
              $region149: #{word_attention_forward.1} parent=125 // pred_check
                _
              $region150: #{word_attention_forward.1} parent=125 // pred_check_branch
                %2547 = sbr.rel target = $region152
              $region151: #{word_attention_forward.1} parent=125 // pred_region
                _
              $region152: #{word_attention_forward.1} parent=125 // pred_fallthru
                _
            $region126: #{word_attention_forward.1} parent=121 // pred_fallthru
              _
            // Predicated region
            $region127: #{word_attention_forward.1} parent=121 // pred_check
              _
            $region128: #{word_attention_forward.1} parent=121 // pred_check_branch
              %2493 = sbr.rel target = $region130
            $region129: #{word_attention_forward.1} parent=121 // pred_region
              %s2495 = ssub.s32 256, 1
              loop: start=0, step=1, limit=1
              $region131: #{word_attention_forward.1} parent=129 // loop_pre_header
                _
              $region132: #{word_attention_forward.1} parent=129 // loop_header
                %s2497 = sphi 0, %s2501
                %p2498 = scmp.ge.s32.totalorder %s2497, 1
                %s2502 = sphi %s2479, %s2479
                %s2503 = sphi %s2487, %s2487
              $region133: #{word_attention_forward.1} parent=129 // loop_header_branch
                %2500 = sbr.rel (%p2498) target = $region137
              $region134: #{word_attention_forward.1} parent=129 // loop_body
                %v2504 = vld [vmem:[%s2502] sm:%s2495]
                %2505 = vst [vmem:[%s2503] sm:%s2495] %v2504
                %v2506 = vld [vmem:[%s2502 + $0x8] sm:%s2495]
                %2507 = vst [vmem:[%s2503 + $0x10] sm:%s2495] %v2506
                %v2508 = vld [vmem:[%s2502 + $0x10] sm:%s2495]
                %2509 = vst [vmem:[%s2503 + $0x20] sm:%s2495] %v2508
                %v2510 = vld [vmem:[%s2502 + $0x18] sm:%s2495]
                %2511 = vst [vmem:[%s2503 + $0x30] sm:%s2495] %v2510
                %v2512 = vld [vmem:[%s2502 + $0x20] sm:%s2495]
                %2513 = vst [vmem:[%s2503 + $0x40] sm:%s2495] %v2512
                %v2514 = vld [vmem:[%s2502 + $0x28] sm:%s2495]
                %2515 = vst [vmem:[%s2503 + $0x50] sm:%s2495] %v2514
                %v2516 = vld [vmem:[%s2502 + $0x30] sm:%s2495]
                %2517 = vst [vmem:[%s2503 + $0x60] sm:%s2495] %v2516
                %v2518 = vld [vmem:[%s2502 + $0x38] sm:%s2495]
                %2519 = vst [vmem:[%s2503 + $0x70] sm:%s2495] %v2518
              $region135: #{word_attention_forward.1} parent=129 // loop_footer
                %s2501 = sadd.s32 1, %s2497
              $region136: #{word_attention_forward.1} parent=129 // loop_footer_branch
                %2496 = sbr.rel target = $region132
              $region137: #{word_attention_forward.1} parent=129 // loop_exit
                _
            $region130: #{word_attention_forward.1} parent=121 // pred_fallthru
              _
          $region122: #{word_attention_forward.1} parent=117 // pred_fallthru
            _
          %2548 = vnop
        $region118: #{word_attention_forward.1} parent=105 // pred_fallthru
          _
      $region106: #{word_attention_forward.1} parent=5 // pred_fallthru
        _
      %p2549 = scmp.le.s32.totalorder 2, %s21
      // Predicated region
      $region153: #{word_attention_forward.1} parent=5 // pred_check
        %p2550 = pneg %p2549
      $region154: #{word_attention_forward.1} parent=5 // pred_check_branch
        %2552 = sbr.rel (%p2550) target = $region156
      $region155: #{word_attention_forward.1} parent=5 // pred_region
        %s2553 = ssub.s32 %s21, 2
        // Predicated region
        $region157: #{word_attention_forward.1} parent=155 // pred_check
          %p2554 = pneg %p333
        $region158: #{word_attention_forward.1} parent=155 // pred_check_branch
          %2556 = sbr.rel (%p2554) target = $region160
        $region159: #{word_attention_forward.1} parent=155 // pred_region
          %p2557 = scmp.lt.s32.totalorder %s27, 1
          %s2558 = scalar_select %p2557, %s27, 1
          %s2559 = smul.addr %s2558, 8
          %s2560 = scalar_lea.vmem %s13, %s2559
        $region160: #{word_attention_forward.1} parent=155 // pred_fallthru
          _
        // Predicated region
        $region161: #{word_attention_forward.1} parent=155 // pred_check
          %p2561 = pneg %p359
        $region162: #{word_attention_forward.1} parent=155 // pred_check_branch
          %2563 = sbr.rel (%p2561) target = $region164
        $region163: #{word_attention_forward.1} parent=155 // pred_region
          %s2564 = sand.u32 %s344, 1
          %s2565 = sand.u32 %s344, 1
          %s2566 = smul.addr %s2565, 64
          %s2567 = scalar_lea.vmem [#allocation8], %s2566
        $region164: #{word_attention_forward.1} parent=155 // pred_fallthru
          _
      $region156: #{word_attention_forward.1} parent=5 // pred_fallthru
        _
    $region6: #{word_attention_forward.1} parent=1 // loop_footer
      %s25 = sadd.s32 1, %s21
    $region7: #{word_attention_forward.1} parent=1 // loop_footer_branch
      %20 = sbr.rel target = $region3
    $region8: #{word_attention_forward.1} parent=1 // loop_exit
      _

</llo_original>
